<compile_context>
chip_gen: v6e
topology: v6e:2x2x1
jax: 0.10.0
libtpu: 0.0.40
codegen_flags: <defaults>
</compile_context>

<pallas_src>
import functools
import math

import jax
import jax.numpy as jnp
from jax.experimental import pallas as pl
from jax.experimental.pallas import tpu as pltpu

D_MODEL = 32
N_HEAD = 4
D_INNER = 64
LN_EPS = 1e-5  # PyTorch nn.LayerNorm default eps

_VEC_ROWS = 15  # rows used in the packed (16, D) vector stack (padded to 16 sublanes)


def _matmul_nt(a, b):
    # a @ b.T, contracting the last dim of both (PyTorch Linear convention W:(out,in)).
    return jax.lax.dot_general(
        a, b, (((1,), (1,)), ((), ())), preferred_element_type=jnp.float32
    )


def _layer_norm(x, g, b):
    mu = jnp.mean(x, axis=-1, keepdims=True)
    var = jnp.mean((x - mu) ** 2, axis=-1, keepdims=True)
    return (x - mu) * jax.lax.rsqrt(var + LN_EPS) * g + b


def tmd_layer_kernel(q_ref, k_ref, v_ref, w_ref, w2b_ref, vec_ref, out_ref, *,
                     bt, sq, sk, d, n_head, d_inner):
    hd = d // n_head
    scale = 1.0 / math.sqrt(hd)

    # Fold the batch tile into the M dimension for all dense ops.
    q = q_ref[...].reshape(bt * sq, d).astype(jnp.float32)       # (BT*Sq, D)
    kmem = k_ref[...].reshape(bt * sk, d).astype(jnp.float32)    # (BT*Sk, D)
    vmem = v_ref[...].reshape(bt * sk, d).astype(jnp.float32)    # (BT*Sk, D)

    W = w_ref[...]       # (8*d + d_inner, d); all row slices below are multiples of d (8-aligned)
    w2b = w2b_ref[...]   # (d + 1, d_inner): rows [0,d) = w2, row d = b1
    vecs = vec_ref[...]  # (16, d) packed length-D vectors

    sa_wq, sa_wk, sa_wv = W[0:d], W[d:2 * d], W[2 * d:3 * d]
    sa_ow = W[3 * d:4 * d]
    ca_wq, ca_wk, ca_wv = W[4 * d:5 * d], W[5 * d:6 * d], W[6 * d:7 * d]
    ca_ow = W[7 * d:8 * d]
    w1 = W[8 * d:8 * d + d_inner]
    w2 = w2b[0:d]
    b1 = w2b[d:d + 1]

    def vrow(i):
        return vecs[i:i + 1, :]  # (1, d), broadcasts against (M, d)

    (ln0_g, ln0_b, ln1_g, ln1_b, ln2_g, ln2_b,
     sa_bq, sa_bk, sa_bv, sa_ob,
     ca_bq, ca_bk, ca_bv, ca_ob,
     b2) = [vrow(i) for i in range(_VEC_ROWS)]

    def mha(query, key, value, wq, wk, wv, bq, bk, bv, ow, ob, s_q, s_k):
        # query: (bt*s_q, d); key/value: (bt*s_k, d).  Projections run on the full slab.
        qp = _matmul_nt(query, wq) + bq
        kp = _matmul_nt(key, wk) + bk
        vp = _matmul_nt(value, wv) + bv
        heads = []
        for h in range(n_head):  # per-head results stay in registers (no scratch round trip)
            lo = h * hd
            qh = (qp[:, lo:lo + hd] * scale).reshape(bt, s_q, hd)
            kh = kp[:, lo:lo + hd].reshape(bt, s_k, hd)
            vh = vp[:, lo:lo + hd].reshape(bt, s_k, hd)
            s = jnp.einsum("bqd,bkd->bqk", qh, kh,
                           preferred_element_type=jnp.float32)      # (bt, s_q, s_k)
            s = s - jnp.max(s, axis=-1, keepdims=True)
            p = jnp.exp(s)
            p = p * pl.reciprocal(jnp.sum(p, axis=-1, keepdims=True), approx=True)
            oh = jnp.einsum("bqk,bkd->bqd", p, vh,
                            preferred_element_type=jnp.float32)     # (bt, s_q, hd)
            heads.append(oh.reshape(bt * s_q, hd))
        ctx = jnp.concatenate(heads, axis=-1)                        # (bt*s_q, d)
        return _matmul_nt(ctx, ow) + ob

    # Pre-norm block with residuals.
    xn = _layer_norm(q, ln0_g, ln0_b)
    x = q + mha(xn, xn, xn, sa_wq, sa_wk, sa_wv, sa_bq, sa_bk, sa_bv,
                sa_ow, sa_ob, sq, sq)

    yn = _layer_norm(x, ln1_g, ln1_b)
    y = x + mha(yn, kmem, vmem, ca_wq, ca_wk, ca_wv, ca_bq, ca_bk, ca_bv,
                ca_ow, ca_ob, sq, sk)

    zn = _layer_norm(y, ln2_g, ln2_b)
    hidden = jnp.maximum(_matmul_nt(zn, w1) + b1, 0.0)   # FFN hidden (ReLU)
    out = y + _matmul_nt(hidden, w2) + b2

    out_ref[...] = out.reshape(bt, sq, d).astype(out_ref.dtype)


def _pack_params(params, d, d_inner):
    """Pack the 18 parameter tensors into 3 contiguous arrays (fewer DMAs, aligned slices)."""
    def flat(name):
        return jnp.asarray(params[name], jnp.float32).reshape(-1)

    w_stack = jnp.concatenate([
        jnp.asarray(params["sa_w"], jnp.float32),    # (3d, d) q/k/v in-proj
        jnp.asarray(params["sa_ow"], jnp.float32),   # (d, d)
        jnp.asarray(params["ca_w"], jnp.float32),    # (3d, d)
        jnp.asarray(params["ca_ow"], jnp.float32),   # (d, d)
        jnp.asarray(params["w1"], jnp.float32),      # (d_inner, d)
    ], axis=0)                                       # (8d + d_inner, d)

    w2b = jnp.concatenate([
        jnp.asarray(params["w2"], jnp.float32),                      # (d, d_inner)
        jnp.asarray(params["b1"], jnp.float32).reshape(1, d_inner),  # (1, d_inner)
    ], axis=0)                                                        # (d + 1, d_inner)

    sa_b = flat("sa_b")
    ca_b = flat("ca_b")
    vec_rows = [
        flat("ln0_g"), flat("ln0_b"),
        flat("ln1_g"), flat("ln1_b"),
        flat("ln2_g"), flat("ln2_b"),
        sa_b[0:d], sa_b[d:2 * d], sa_b[2 * d:3 * d], flat("sa_ob"),
        ca_b[0:d], ca_b[d:2 * d], ca_b[2 * d:3 * d], flat("ca_ob"),
        flat("b2"),
    ]
    vecs = jnp.stack(vec_rows, axis=0)               # (15, d)
    pad = (-vecs.shape[0]) % 8
    if pad:
        vecs = jnp.concatenate([vecs, jnp.zeros((pad, d), jnp.float32)], axis=0)
    return w_stack, w2b, vecs


def tmd_layer_pallas(q, k, v, params, *, n_head=N_HEAD):
    B, Sq, D = q.shape
    _, Sk, _ = k.shape
    d_inner = params["w1"].shape[0]

    w_stack, w2b, vecs = _pack_params(params, D, d_inner)

    # Collapse the batch grid to <=2 steps: 2 parallel steps when the batch splits evenly
    # (so v7x's two TensorCores each take half), otherwise one step over the whole batch.
    nt = 2 if (B >= 2 and B % 2 == 0) else 1
    bt = B // nt

    kernel = functools.partial(
        tmd_layer_kernel, bt=bt, sq=Sq, sk=Sk, d=D, n_head=n_head, d_inner=d_inner)

    return pl.pallas_call(
        kernel,
        out_shape=jax.ShapeDtypeStruct((B, Sq, D), q.dtype),
        grid_spec=pltpu.PrefetchScalarGridSpec(
            num_scalar_prefetch=0,
            grid=(nt,),
            in_specs=[
                pl.BlockSpec((bt, Sq, D), lambda t: (t, 0, 0)),
                pl.BlockSpec((bt, Sk, D), lambda t: (t, 0, 0)),
                pl.BlockSpec((bt, Sk, D), lambda t: (t, 0, 0)),
                pl.BlockSpec(w_stack.shape, lambda t: (0, 0)),
                pl.BlockSpec(w2b.shape, lambda t: (0, 0)),
                pl.BlockSpec(vecs.shape, lambda t: (0, 0)),
            ],
            out_specs=pl.BlockSpec((bt, Sq, D), lambda t: (t, 0, 0)),
        ),
        compiler_params=pltpu.CompilerParams(dimension_semantics=("parallel",)),
    )(q, k, v, w_stack, w2b, vecs)


# ---------------------- pure-JAX reference (for verification) ----------------------

def _ref_single(q, k, v, p):
    def ln(x, g, b):
        mu = x.mean(-1, keepdims=True)
        var = ((x - mu) ** 2).mean(-1, keepdims=True)
        return (x - mu) / jnp.sqrt(var + LN_EPS) * g + b

    def mha(query, key, value, w, bias, ow, ob):
        d = query.shape[-1]
        hd = d // N_HEAD
        qp = query @ w[:d].T + bias[0, :d]
        kp = key @ w[d:2 * d].T + bias[0, d:2 * d]
        vp = value @ w[2 * d:].T + bias[0, 2 * d:]
        qh = qp.reshape(-1, N_HEAD, hd).transpose(1, 0, 2) / math.sqrt(hd)
        kh = kp.reshape(-1, N_HEAD, hd).transpose(1, 0, 2)
        vh = vp.reshape(-1, N_HEAD, hd).transpose(1, 0, 2)
        s = jnp.einsum("hqd,hkd->hqk", qh, kh)
        a = jax.nn.softmax(s, axis=-1)
        o = jnp.einsum("hqk,hkd->hqd", a, vh).transpose(1, 0, 2).reshape(-1, d)
        return o @ ow.T + ob[0]

    identity = q
    x = ln(q, p["ln0_g"][0], p["ln0_b"][0])
    x = identity + mha(x, x, x, p["sa_w"], p["sa_b"], p["sa_ow"], p["sa_ob"])
    identity = x
    y = ln(x, p["ln1_g"][0], p["ln1_b"][0])
    y = identity + mha(y, k, v, p["ca_w"], p["ca_b"], p["ca_ow"], p["ca_ob"])
    identity = y
    z = ln(y, p["ln2_g"][0], p["ln2_b"][0])
    h = jax.nn.relu(z @ p["w1"].T + p["b1"][0])
    return identity + (h @ p["w2"].T + p["b2"][0])


# ---------------------------------- parameter init ----------------------------------

def init_params(key, d_model, n_head, d_inner):
    del n_head
    ks = jax.random.split(key, 16)

    def nrm(k, shape, scale=0.1):
        return (scale * jax.random.normal(k, shape)).astype(jnp.float32)

    return {
        "ln0_g": (1.0 + nrm(ks[0], (1, d_model))), "ln0_b": nrm(ks[1], (1, d_model)),
        "ln1_g": (1.0 + nrm(ks[2], (1, d_model))), "ln1_b": nrm(ks[3], (1, d_model)),
        "ln2_g": (1.0 + nrm(ks[4], (1, d_model))), "ln2_b": nrm(ks[5], (1, d_model)),
        # self-attention: fused in_proj (3D, D) + bias, out_proj (D, D) + bias
        "sa_w": nrm(ks[6], (3 * d_model, d_model)), "sa_b": nrm(ks[7], (1, 3 * d_model)),
        "sa_ow": nrm(ks[8], (d_model, d_model)), "sa_ob": nrm(ks[9], (1, d_model)),
        # cross-attention
        "ca_w": nrm(ks[10], (3 * d_model, d_model)), "ca_b": nrm(ks[11], (1, 3 * d_model)),
        "ca_ow": nrm(ks[12], (d_model, d_model)), "ca_ob": nrm(ks[13], (1, d_model)),
        # FFN: Linear(D, d_inner) -> ReLU -> Linear(d_inner, D)
        "w1": nrm(ks[14], (d_inner, d_model)), "b1": jnp.zeros((1, d_inner), jnp.float32),
        "w2": nrm(ks[15], (d_model, d_inner)), "b2": jnp.zeros((1, d_model), jnp.float32),
    }


if __name__ == "__main__":
    B, SQ, SK = 2, 8, 16
    root = jax.random.PRNGKey(0)
    kq, kk, kv, kp = jax.random.split(root, 4)

    query = jax.random.normal(kq, (B, SQ, D_MODEL), dtype=jnp.float32)
    key = jax.random.normal(kk, (B, SK, D_MODEL), dtype=jnp.float32)
    value = jax.random.normal(kv, (B, SK, D_MODEL), dtype=jnp.float32)
    params = init_params(kp, D_MODEL, N_HEAD, D_INNER)

    out = tmd_layer_pallas(query, key, value, params)
    out = jax.block_until_ready(out)

    ref = jax.vmap(lambda q, k, v: _ref_single(q, k, v, params))(query, key, value)
    max_err = float(jnp.max(jnp.abs(out - ref)))
    # Tolerance accounts for the approximate (EUP) reciprocal used in the softmax.
    assert max_err < 3e-2, f"mismatch vs reference: {max_err}"

    print("KERNEL_OK")
</pallas_src>

<mosaic_0001>
module attributes {stable_mosaic.version = 11 : i64} {
  func.func @tmd_layer_kernel(%arg0: i32, %arg1: memref<1x8x32xf32, #tpu.memory_space<vmem>>, %arg2: memref<1x16x32xf32, #tpu.memory_space<vmem>>, %arg3: memref<1x16x32xf32, #tpu.memory_space<vmem>>, %arg4: memref<320x32xf32, #tpu.memory_space<vmem>>, %arg5: memref<33x64xf32, #tpu.memory_space<vmem>>, %arg6: memref<16x32xf32, #tpu.memory_space<vmem>>, %arg7: memref<1x8x32xf32, #tpu.memory_space<vmem>>) attributes {dimension_semantics = [#tpu.dimension_semantics<parallel>], iteration_bounds = array<i64: 2>, scalar_prefetch = 0 : i64, scratch_operands = 0 : i64, tpu.core_type = #tpu.core_type<tc>, window_params = [{transform_indices = @transform_0, window_bounds = array<i64: 1, 8, 32>}, {transform_indices = @transform_1, window_bounds = array<i64: 1, 16, 32>}, {transform_indices = @transform_2, window_bounds = array<i64: 1, 16, 32>}, {pipeline_mode = #tpu.pipeline_mode<synchronous>, transform_indices = @transform_3, window_bounds = array<i64: 320, 32>}, {pipeline_mode = #tpu.pipeline_mode<synchronous>, transform_indices = @transform_4, window_bounds = array<i64: 33, 64>}, {pipeline_mode = #tpu.pipeline_mode<synchronous>, transform_indices = @transform_5, window_bounds = array<i64: 16, 32>}, {transform_indices = @transform_6, window_bounds = array<i64: 1, 8, 32>}]} {
    %c0 = arith.constant 0 : index
    %c0_0 = arith.constant 0 : index
    %c0_1 = arith.constant 0 : index
    %0 = vector.load %arg1[%c0, %c0_0, %c0_1] : memref<1x8x32xf32, #tpu.memory_space<vmem>>, vector<1x8x32xf32>
    %1 = vector.shape_cast %0 : vector<1x8x32xf32> to vector<8x32xf32>
    %c0_2 = arith.constant 0 : index
    %c0_3 = arith.constant 0 : index
    %c0_4 = arith.constant 0 : index
    %2 = vector.load %arg2[%c0_2, %c0_3, %c0_4] : memref<1x16x32xf32, #tpu.memory_space<vmem>>, vector<1x16x32xf32>
    %3 = vector.shape_cast %2 : vector<1x16x32xf32> to vector<16x32xf32>
    %c0_5 = arith.constant 0 : index
    %c0_6 = arith.constant 0 : index
    %c0_7 = arith.constant 0 : index
    %4 = vector.load %arg3[%c0_5, %c0_6, %c0_7] : memref<1x16x32xf32, #tpu.memory_space<vmem>>, vector<1x16x32xf32>
    %5 = vector.shape_cast %4 : vector<1x16x32xf32> to vector<16x32xf32>
    %c0_8 = arith.constant 0 : index
    %c0_9 = arith.constant 0 : index
    %6 = vector.load %arg4[%c0_8, %c0_9] : memref<320x32xf32, #tpu.memory_space<vmem>>, vector<320x32xf32>
    %c0_10 = arith.constant 0 : index
    %c0_11 = arith.constant 0 : index
    %7 = vector.load %arg5[%c0_10, %c0_11] : memref<33x64xf32, #tpu.memory_space<vmem>>, vector<33x64xf32>
    %c0_12 = arith.constant 0 : index
    %c0_13 = arith.constant 0 : index
    %8 = vector.load %arg6[%c0_12, %c0_13] : memref<16x32xf32, #tpu.memory_space<vmem>>, vector<16x32xf32>
    %9 = vector.extract_strided_slice %6 {offsets = [0, 0], sizes = [32, 32], strides = [1, 1]} : vector<320x32xf32> to vector<32x32xf32>
    %10 = vector.extract_strided_slice %6 {offsets = [32, 0], sizes = [32, 32], strides = [1, 1]} : vector<320x32xf32> to vector<32x32xf32>
    %11 = vector.extract_strided_slice %6 {offsets = [64, 0], sizes = [32, 32], strides = [1, 1]} : vector<320x32xf32> to vector<32x32xf32>
    %12 = vector.extract_strided_slice %6 {offsets = [96, 0], sizes = [32, 32], strides = [1, 1]} : vector<320x32xf32> to vector<32x32xf32>
    %13 = vector.extract_strided_slice %6 {offsets = [128, 0], sizes = [32, 32], strides = [1, 1]} : vector<320x32xf32> to vector<32x32xf32>
    %14 = vector.extract_strided_slice %6 {offsets = [160, 0], sizes = [32, 32], strides = [1, 1]} : vector<320x32xf32> to vector<32x32xf32>
    %15 = vector.extract_strided_slice %6 {offsets = [192, 0], sizes = [32, 32], strides = [1, 1]} : vector<320x32xf32> to vector<32x32xf32>
    %16 = vector.extract_strided_slice %6 {offsets = [224, 0], sizes = [32, 32], strides = [1, 1]} : vector<320x32xf32> to vector<32x32xf32>
    %17 = vector.extract_strided_slice %6 {offsets = [256, 0], sizes = [64, 32], strides = [1, 1]} : vector<320x32xf32> to vector<64x32xf32>
    %18 = vector.extract_strided_slice %7 {offsets = [0, 0], sizes = [32, 64], strides = [1, 1]} : vector<33x64xf32> to vector<32x64xf32>
    %19 = vector.extract_strided_slice %7 {offsets = [32, 0], sizes = [1, 64], strides = [1, 1]} : vector<33x64xf32> to vector<1x64xf32>
    %20 = vector.extract_strided_slice %8 {offsets = [0, 0], sizes = [1, 32], strides = [1, 1]} : vector<16x32xf32> to vector<1x32xf32>
    %21 = vector.extract_strided_slice %8 {offsets = [1, 0], sizes = [1, 32], strides = [1, 1]} : vector<16x32xf32> to vector<1x32xf32>
    %22 = vector.extract_strided_slice %8 {offsets = [2, 0], sizes = [1, 32], strides = [1, 1]} : vector<16x32xf32> to vector<1x32xf32>
    %23 = vector.extract_strided_slice %8 {offsets = [3, 0], sizes = [1, 32], strides = [1, 1]} : vector<16x32xf32> to vector<1x32xf32>
    %24 = vector.extract_strided_slice %8 {offsets = [4, 0], sizes = [1, 32], strides = [1, 1]} : vector<16x32xf32> to vector<1x32xf32>
    %25 = vector.extract_strided_slice %8 {offsets = [5, 0], sizes = [1, 32], strides = [1, 1]} : vector<16x32xf32> to vector<1x32xf32>
    %26 = vector.extract_strided_slice %8 {offsets = [6, 0], sizes = [1, 32], strides = [1, 1]} : vector<16x32xf32> to vector<1x32xf32>
    %27 = vector.extract_strided_slice %8 {offsets = [7, 0], sizes = [1, 32], strides = [1, 1]} : vector<16x32xf32> to vector<1x32xf32>
    %28 = vector.extract_strided_slice %8 {offsets = [8, 0], sizes = [1, 32], strides = [1, 1]} : vector<16x32xf32> to vector<1x32xf32>
    %29 = vector.extract_strided_slice %8 {offsets = [9, 0], sizes = [1, 32], strides = [1, 1]} : vector<16x32xf32> to vector<1x32xf32>
    %30 = vector.extract_strided_slice %8 {offsets = [10, 0], sizes = [1, 32], strides = [1, 1]} : vector<16x32xf32> to vector<1x32xf32>
    %31 = vector.extract_strided_slice %8 {offsets = [11, 0], sizes = [1, 32], strides = [1, 1]} : vector<16x32xf32> to vector<1x32xf32>
    %32 = vector.extract_strided_slice %8 {offsets = [12, 0], sizes = [1, 32], strides = [1, 1]} : vector<16x32xf32> to vector<1x32xf32>
    %33 = vector.extract_strided_slice %8 {offsets = [13, 0], sizes = [1, 32], strides = [1, 1]} : vector<16x32xf32> to vector<1x32xf32>
    %34 = vector.extract_strided_slice %8 {offsets = [14, 0], sizes = [1, 32], strides = [1, 1]} : vector<16x32xf32> to vector<1x32xf32>
    %cst = arith.constant dense<0.000000e+00> : vector<8xf32>
    %35 = vector.multi_reduction <add>, %1, %cst [1] : vector<8x32xf32> to vector<8xf32>
    %36 = vector.shape_cast %35 : vector<8xf32> to vector<8x1xf32>
    %cst_14 = arith.constant 3.200000e+01 : f32
    %37 = vector.broadcast %cst_14 : f32 to vector<8x1xf32>
    %38 = arith.divf %36, %37 : vector<8x1xf32>
    %39 = vector.broadcast %38 : vector<8x1xf32> to vector<8x32xf32>
    %40 = arith.subf %1, %39 : vector<8x32xf32>
    %41 = arith.mulf %40, %40 : vector<8x32xf32>
    %cst_15 = arith.constant dense<0.000000e+00> : vector<8xf32>
    %42 = vector.multi_reduction <add>, %41, %cst_15 [1] : vector<8x32xf32> to vector<8xf32>
    %43 = vector.shape_cast %42 : vector<8xf32> to vector<8x1xf32>
    %cst_16 = arith.constant 3.200000e+01 : f32
    %44 = vector.broadcast %cst_16 : f32 to vector<8x1xf32>
    %45 = arith.divf %43, %44 : vector<8x1xf32>
    %46 = vector.broadcast %38 : vector<8x1xf32> to vector<8x32xf32>
    %47 = arith.subf %1, %46 : vector<8x32xf32>
    %cst_17 = arith.constant 9.99999974E-6 : f32
    %48 = vector.broadcast %cst_17 : f32 to vector<8x1xf32>
    %49 = arith.addf %45, %48 : vector<8x1xf32>
    %50 = math.rsqrt %49 : vector<8x1xf32>
    %51 = vector.broadcast %50 : vector<8x1xf32> to vector<8x32xf32>
    %52 = arith.mulf %47, %51 : vector<8x32xf32>
    %53 = vector.broadcast %20 : vector<1x32xf32> to vector<8x32xf32>
    %54 = arith.mulf %52, %53 : vector<8x32xf32>
    %55 = vector.broadcast %21 : vector<1x32xf32> to vector<8x32xf32>
    %56 = arith.addf %54, %55 : vector<8x32xf32>
    %cst_18 = arith.constant dense<0.000000e+00> : vector<8x32xf32>
    %57 = tpu.matmul %56, %9, %cst_18 {dimension_numbers = #tpu.dot_dimension_numbers<[1], [1], [0], [0], [0, 0, 1, 0], [], []>} : vector<8x32xf32>, vector<32x32xf32>, vector<8x32xf32> -> vector<8x32xf32>
    %58 = vector.broadcast %26 : vector<1x32xf32> to vector<8x32xf32>
    %59 = arith.addf %57, %58 : vector<8x32xf32>
    %cst_19 = arith.constant dense<0.000000e+00> : vector<8x32xf32>
    %60 = tpu.matmul %56, %10, %cst_19 {dimension_numbers = #tpu.dot_dimension_numbers<[1], [1], [0], [0], [0, 0, 1, 0], [], []>} : vector<8x32xf32>, vector<32x32xf32>, vector<8x32xf32> -> vector<8x32xf32>
    %61 = vector.broadcast %27 : vector<1x32xf32> to vector<8x32xf32>
    %62 = arith.addf %60, %61 : vector<8x32xf32>
    %cst_20 = arith.constant dense<0.000000e+00> : vector<8x32xf32>
    %63 = tpu.matmul %56, %11, %cst_20 {dimension_numbers = #tpu.dot_dimension_numbers<[1], [1], [0], [0], [0, 0, 1, 0], [], []>} : vector<8x32xf32>, vector<32x32xf32>, vector<8x32xf32> -> vector<8x32xf32>
    %64 = vector.broadcast %28 : vector<1x32xf32> to vector<8x32xf32>
    %65 = arith.addf %63, %64 : vector<8x32xf32>
    %66 = vector.extract_strided_slice %59 {offsets = [0, 0], sizes = [8, 8], strides = [1, 1]} : vector<8x32xf32> to vector<8x8xf32>
    %cst_21 = arith.constant 0.353553385 : f32
    %67 = vector.broadcast %cst_21 : f32 to vector<8x8xf32>
    %68 = arith.mulf %66, %67 : vector<8x8xf32>
    %69 = vector.shape_cast %68 : vector<8x8xf32> to vector<1x8x8xf32>
    %70 = vector.extract_strided_slice %62 {offsets = [0, 0], sizes = [8, 8], strides = [1, 1]} : vector<8x32xf32> to vector<8x8xf32>
    %71 = vector.shape_cast %70 : vector<8x8xf32> to vector<1x8x8xf32>
    %72 = vector.extract_strided_slice %65 {offsets = [0, 0], sizes = [8, 8], strides = [1, 1]} : vector<8x32xf32> to vector<8x8xf32>
    %73 = vector.shape_cast %72 : vector<8x8xf32> to vector<1x8x8xf32>
    "tpu.trace_start"() <{level = 10 : i32, message = "bqd,bkd->bqk"}> : () -> ()
    %cst_22 = arith.constant dense<0.000000e+00> : vector<1x8x8xf32>
    %74 = tpu.matmul %69, %71, %cst_22 {dimension_numbers = #tpu.dot_dimension_numbers<[2], [2], [1], [1], [0, 0, 0, 1, 1, 1], [0], [0]>} : vector<1x8x8xf32>, vector<1x8x8xf32>, vector<1x8x8xf32> -> vector<1x8x8xf32>
    "tpu.trace_stop"() : () -> ()
    %cst_23 = arith.constant dense<0xFF800000> : vector<1x8xf32>
    %75 = vector.multi_reduction <maximumf>, %74, %cst_23 [2] : vector<1x8x8xf32> to vector<1x8xf32>
    %76 = vector.shape_cast %75 : vector<1x8xf32> to vector<1x8x1xf32>
    %77 = vector.broadcast %76 : vector<1x8x1xf32> to vector<1x8x8xf32>
    %78 = arith.subf %74, %77 : vector<1x8x8xf32>
    %79 = math.exp %78 : vector<1x8x8xf32>
    %cst_24 = arith.constant dense<0.000000e+00> : vector<1x8xf32>
    %80 = vector.multi_reduction <add>, %79, %cst_24 [2] : vector<1x8x8xf32> to vector<1x8xf32>
    %81 = vector.shape_cast %80 : vector<1x8xf32> to vector<1x8x1xf32>
    %82 = tpu.reciprocal %81 {approx = true} : vector<1x8x1xf32> -> vector<1x8x1xf32>
    %83 = vector.broadcast %82 : vector<1x8x1xf32> to vector<1x8x8xf32>
    %84 = arith.mulf %79, %83 : vector<1x8x8xf32>
    "tpu.trace_start"() <{level = 10 : i32, message = "bqk,bkd->bqd"}> : () -> ()
    %cst_25 = arith.constant dense<0.000000e+00> : vector<1x8x8xf32>
    %85 = tpu.matmul %84, %73, %cst_25 {dimension_numbers = #tpu.dot_dimension_numbers<[2], [1], [1], [2], [0, 0, 0, 1, 1, 2], [0], [0]>} : vector<1x8x8xf32>, vector<1x8x8xf32>, vector<1x8x8xf32> -> vector<1x8x8xf32>
    "tpu.trace_stop"() : () -> ()
    %86 = vector.shape_cast %85 : vector<1x8x8xf32> to vector<8x8xf32>
    %87 = vector.extract_strided_slice %59 {offsets = [0, 8], sizes = [8, 8], strides = [1, 1]} : vector<8x32xf32> to vector<8x8xf32>
    %cst_26 = arith.constant 0.353553385 : f32
    %88 = vector.broadcast %cst_26 : f32 to vector<8x8xf32>
    %89 = arith.mulf %87, %88 : vector<8x8xf32>
    %90 = vector.shape_cast %89 : vector<8x8xf32> to vector<1x8x8xf32>
    %91 = vector.extract_strided_slice %62 {offsets = [0, 8], sizes = [8, 8], strides = [1, 1]} : vector<8x32xf32> to vector<8x8xf32>
    %92 = vector.shape_cast %91 : vector<8x8xf32> to vector<1x8x8xf32>
    %93 = vector.extract_strided_slice %65 {offsets = [0, 8], sizes = [8, 8], strides = [1, 1]} : vector<8x32xf32> to vector<8x8xf32>
    %94 = vector.shape_cast %93 : vector<8x8xf32> to vector<1x8x8xf32>
    "tpu.trace_start"() <{level = 10 : i32, message = "bqd,bkd->bqk"}> : () -> ()
    %cst_27 = arith.constant dense<0.000000e+00> : vector<1x8x8xf32>
    %95 = tpu.matmul %90, %92, %cst_27 {dimension_numbers = #tpu.dot_dimension_numbers<[2], [2], [1], [1], [0, 0, 0, 1, 1, 1], [0], [0]>} : vector<1x8x8xf32>, vector<1x8x8xf32>, vector<1x8x8xf32> -> vector<1x8x8xf32>
    "tpu.trace_stop"() : () -> ()
    %cst_28 = arith.constant dense<0xFF800000> : vector<1x8xf32>
    %96 = vector.multi_reduction <maximumf>, %95, %cst_28 [2] : vector<1x8x8xf32> to vector<1x8xf32>
    %97 = vector.shape_cast %96 : vector<1x8xf32> to vector<1x8x1xf32>
    %98 = vector.broadcast %97 : vector<1x8x1xf32> to vector<1x8x8xf32>
    %99 = arith.subf %95, %98 : vector<1x8x8xf32>
    %100 = math.exp %99 : vector<1x8x8xf32>
    %cst_29 = arith.constant dense<0.000000e+00> : vector<1x8xf32>
    %101 = vector.multi_reduction <add>, %100, %cst_29 [2] : vector<1x8x8xf32> to vector<1x8xf32>
    %102 = vector.shape_cast %101 : vector<1x8xf32> to vector<1x8x1xf32>
    %103 = tpu.reciprocal %102 {approx = true} : vector<1x8x1xf32> -> vector<1x8x1xf32>
    %104 = vector.broadcast %103 : vector<1x8x1xf32> to vector<1x8x8xf32>
    %105 = arith.mulf %100, %104 : vector<1x8x8xf32>
    "tpu.trace_start"() <{level = 10 : i32, message = "bqk,bkd->bqd"}> : () -> ()
    %cst_30 = arith.constant dense<0.000000e+00> : vector<1x8x8xf32>
    %106 = tpu.matmul %105, %94, %cst_30 {dimension_numbers = #tpu.dot_dimension_numbers<[2], [1], [1], [2], [0, 0, 0, 1, 1, 2], [0], [0]>} : vector<1x8x8xf32>, vector<1x8x8xf32>, vector<1x8x8xf32> -> vector<1x8x8xf32>
    "tpu.trace_stop"() : () -> ()
    %107 = vector.shape_cast %106 : vector<1x8x8xf32> to vector<8x8xf32>
    %108 = vector.extract_strided_slice %59 {offsets = [0, 16], sizes = [8, 8], strides = [1, 1]} : vector<8x32xf32> to vector<8x8xf32>
    %cst_31 = arith.constant 0.353553385 : f32
    %109 = vector.broadcast %cst_31 : f32 to vector<8x8xf32>
    %110 = arith.mulf %108, %109 : vector<8x8xf32>
    %111 = vector.shape_cast %110 : vector<8x8xf32> to vector<1x8x8xf32>
    %112 = vector.extract_strided_slice %62 {offsets = [0, 16], sizes = [8, 8], strides = [1, 1]} : vector<8x32xf32> to vector<8x8xf32>
    %113 = vector.shape_cast %112 : vector<8x8xf32> to vector<1x8x8xf32>
    %114 = vector.extract_strided_slice %65 {offsets = [0, 16], sizes = [8, 8], strides = [1, 1]} : vector<8x32xf32> to vector<8x8xf32>
    %115 = vector.shape_cast %114 : vector<8x8xf32> to vector<1x8x8xf32>
    "tpu.trace_start"() <{level = 10 : i32, message = "bqd,bkd->bqk"}> : () -> ()
    %cst_32 = arith.constant dense<0.000000e+00> : vector<1x8x8xf32>
    %116 = tpu.matmul %111, %113, %cst_32 {dimension_numbers = #tpu.dot_dimension_numbers<[2], [2], [1], [1], [0, 0, 0, 1, 1, 1], [0], [0]>} : vector<1x8x8xf32>, vector<1x8x8xf32>, vector<1x8x8xf32> -> vector<1x8x8xf32>
    "tpu.trace_stop"() : () -> ()
    %cst_33 = arith.constant dense<0xFF800000> : vector<1x8xf32>
    %117 = vector.multi_reduction <maximumf>, %116, %cst_33 [2] : vector<1x8x8xf32> to vector<1x8xf32>
    %118 = vector.shape_cast %117 : vector<1x8xf32> to vector<1x8x1xf32>
    %119 = vector.broadcast %118 : vector<1x8x1xf32> to vector<1x8x8xf32>
    %120 = arith.subf %116, %119 : vector<1x8x8xf32>
    %121 = math.exp %120 : vector<1x8x8xf32>
    %cst_34 = arith.constant dense<0.000000e+00> : vector<1x8xf32>
    %122 = vector.multi_reduction <add>, %121, %cst_34 [2] : vector<1x8x8xf32> to vector<1x8xf32>
    %123 = vector.shape_cast %122 : vector<1x8xf32> to vector<1x8x1xf32>
    %124 = tpu.reciprocal %123 {approx = true} : vector<1x8x1xf32> -> vector<1x8x1xf32>
    %125 = vector.broadcast %124 : vector<1x8x1xf32> to vector<1x8x8xf32>
    %126 = arith.mulf %121, %125 : vector<1x8x8xf32>
    "tpu.trace_start"() <{level = 10 : i32, message = "bqk,bkd->bqd"}> : () -> ()
    %cst_35 = arith.constant dense<0.000000e+00> : vector<1x8x8xf32>
    %127 = tpu.matmul %126, %115, %cst_35 {dimension_numbers = #tpu.dot_dimension_numbers<[2], [1], [1], [2], [0, 0, 0, 1, 1, 2], [0], [0]>} : vector<1x8x8xf32>, vector<1x8x8xf32>, vector<1x8x8xf32> -> vector<1x8x8xf32>
    "tpu.trace_stop"() : () -> ()
    %128 = vector.shape_cast %127 : vector<1x8x8xf32> to vector<8x8xf32>
    %129 = vector.extract_strided_slice %59 {offsets = [0, 24], sizes = [8, 8], strides = [1, 1]} : vector<8x32xf32> to vector<8x8xf32>
    %cst_36 = arith.constant 0.353553385 : f32
    %130 = vector.broadcast %cst_36 : f32 to vector<8x8xf32>
    %131 = arith.mulf %129, %130 : vector<8x8xf32>
    %132 = vector.shape_cast %131 : vector<8x8xf32> to vector<1x8x8xf32>
    %133 = vector.extract_strided_slice %62 {offsets = [0, 24], sizes = [8, 8], strides = [1, 1]} : vector<8x32xf32> to vector<8x8xf32>
    %134 = vector.shape_cast %133 : vector<8x8xf32> to vector<1x8x8xf32>
    %135 = vector.extract_strided_slice %65 {offsets = [0, 24], sizes = [8, 8], strides = [1, 1]} : vector<8x32xf32> to vector<8x8xf32>
    %136 = vector.shape_cast %135 : vector<8x8xf32> to vector<1x8x8xf32>
    "tpu.trace_start"() <{level = 10 : i32, message = "bqd,bkd->bqk"}> : () -> ()
    %cst_37 = arith.constant dense<0.000000e+00> : vector<1x8x8xf32>
    %137 = tpu.matmul %132, %134, %cst_37 {dimension_numbers = #tpu.dot_dimension_numbers<[2], [2], [1], [1], [0, 0, 0, 1, 1, 1], [0], [0]>} : vector<1x8x8xf32>, vector<1x8x8xf32>, vector<1x8x8xf32> -> vector<1x8x8xf32>
    "tpu.trace_stop"() : () -> ()
    %cst_38 = arith.constant dense<0xFF800000> : vector<1x8xf32>
    %138 = vector.multi_reduction <maximumf>, %137, %cst_38 [2] : vector<1x8x8xf32> to vector<1x8xf32>
    %139 = vector.shape_cast %138 : vector<1x8xf32> to vector<1x8x1xf32>
    %140 = vector.broadcast %139 : vector<1x8x1xf32> to vector<1x8x8xf32>
    %141 = arith.subf %137, %140 : vector<1x8x8xf32>
    %142 = math.exp %141 : vector<1x8x8xf32>
    %cst_39 = arith.constant dense<0.000000e+00> : vector<1x8xf32>
    %143 = vector.multi_reduction <add>, %142, %cst_39 [2] : vector<1x8x8xf32> to vector<1x8xf32>
    %144 = vector.shape_cast %143 : vector<1x8xf32> to vector<1x8x1xf32>
    %145 = tpu.reciprocal %144 {approx = true} : vector<1x8x1xf32> -> vector<1x8x1xf32>
    %146 = vector.broadcast %145 : vector<1x8x1xf32> to vector<1x8x8xf32>
    %147 = arith.mulf %142, %146 : vector<1x8x8xf32>
    "tpu.trace_start"() <{level = 10 : i32, message = "bqk,bkd->bqd"}> : () -> ()
    %cst_40 = arith.constant dense<0.000000e+00> : vector<1x8x8xf32>
    %148 = tpu.matmul %147, %136, %cst_40 {dimension_numbers = #tpu.dot_dimension_numbers<[2], [1], [1], [2], [0, 0, 0, 1, 1, 2], [0], [0]>} : vector<1x8x8xf32>, vector<1x8x8xf32>, vector<1x8x8xf32> -> vector<1x8x8xf32>
    "tpu.trace_stop"() : () -> ()
    %149 = vector.shape_cast %148 : vector<1x8x8xf32> to vector<8x8xf32>
    %150 = tpu.concatenate %86, %107, %128, %149 in 1 : vector<8x8xf32>, vector<8x8xf32>, vector<8x8xf32>, vector<8x8xf32> -> vector<8x32xf32>
    %cst_41 = arith.constant dense<0.000000e+00> : vector<8x32xf32>
    %151 = tpu.matmul %150, %12, %cst_41 {dimension_numbers = #tpu.dot_dimension_numbers<[1], [1], [0], [0], [0, 0, 1, 0], [], []>} : vector<8x32xf32>, vector<32x32xf32>, vector<8x32xf32> -> vector<8x32xf32>
    %152 = vector.broadcast %29 : vector<1x32xf32> to vector<8x32xf32>
    %153 = arith.addf %151, %152 : vector<8x32xf32>
    %154 = arith.addf %1, %153 : vector<8x32xf32>
    %cst_42 = arith.constant dense<0.000000e+00> : vector<8xf32>
    %155 = vector.multi_reduction <add>, %154, %cst_42 [1] : vector<8x32xf32> to vector<8xf32>
    %156 = vector.shape_cast %155 : vector<8xf32> to vector<8x1xf32>
    %cst_43 = arith.constant 3.200000e+01 : f32
    %157 = vector.broadcast %cst_43 : f32 to vector<8x1xf32>
    %158 = arith.divf %156, %157 : vector<8x1xf32>
    %159 = vector.broadcast %158 : vector<8x1xf32> to vector<8x32xf32>
    %160 = arith.subf %154, %159 : vector<8x32xf32>
    %161 = arith.mulf %160, %160 : vector<8x32xf32>
    %cst_44 = arith.constant dense<0.000000e+00> : vector<8xf32>
    %162 = vector.multi_reduction <add>, %161, %cst_44 [1] : vector<8x32xf32> to vector<8xf32>
    %163 = vector.shape_cast %162 : vector<8xf32> to vector<8x1xf32>
    %cst_45 = arith.constant 3.200000e+01 : f32
    %164 = vector.broadcast %cst_45 : f32 to vector<8x1xf32>
    %165 = arith.divf %163, %164 : vector<8x1xf32>
    %166 = vector.broadcast %158 : vector<8x1xf32> to vector<8x32xf32>
    %167 = arith.subf %154, %166 : vector<8x32xf32>
    %cst_46 = arith.constant 9.99999974E-6 : f32
    %168 = vector.broadcast %cst_46 : f32 to vector<8x1xf32>
    %169 = arith.addf %165, %168 : vector<8x1xf32>
    %170 = math.rsqrt %169 : vector<8x1xf32>
    %171 = vector.broadcast %170 : vector<8x1xf32> to vector<8x32xf32>
    %172 = arith.mulf %167, %171 : vector<8x32xf32>
    %173 = vector.broadcast %22 : vector<1x32xf32> to vector<8x32xf32>
    %174 = arith.mulf %172, %173 : vector<8x32xf32>
    %175 = vector.broadcast %23 : vector<1x32xf32> to vector<8x32xf32>
    %176 = arith.addf %174, %175 : vector<8x32xf32>
    %cst_47 = arith.constant dense<0.000000e+00> : vector<8x32xf32>
    %177 = tpu.matmul %176, %13, %cst_47 {dimension_numbers = #tpu.dot_dimension_numbers<[1], [1], [0], [0], [0, 0, 1, 0], [], []>} : vector<8x32xf32>, vector<32x32xf32>, vector<8x32xf32> -> vector<8x32xf32>
    %178 = vector.broadcast %30 : vector<1x32xf32> to vector<8x32xf32>
    %179 = arith.addf %177, %178 : vector<8x32xf32>
    %cst_48 = arith.constant dense<0.000000e+00> : vector<16x32xf32>
    %180 = tpu.matmul %3, %14, %cst_48 {dimension_numbers = #tpu.dot_dimension_numbers<[1], [1], [0], [0], [0, 0, 1, 0], [], []>} : vector<16x32xf32>, vector<32x32xf32>, vector<16x32xf32> -> vector<16x32xf32>
    %181 = vector.broadcast %31 : vector<1x32xf32> to vector<16x32xf32>
    %182 = arith.addf %180, %181 : vector<16x32xf32>
    %cst_49 = arith.constant dense<0.000000e+00> : vector<16x32xf32>
    %183 = tpu.matmul %5, %15, %cst_49 {dimension_numbers = #tpu.dot_dimension_numbers<[1], [1], [0], [0], [0, 0, 1, 0], [], []>} : vector<16x32xf32>, vector<32x32xf32>, vector<16x32xf32> -> vector<16x32xf32>
    %184 = vector.broadcast %32 : vector<1x32xf32> to vector<16x32xf32>
    %185 = arith.addf %183, %184 : vector<16x32xf32>
    %186 = vector.extract_strided_slice %179 {offsets = [0, 0], sizes = [8, 8], strides = [1, 1]} : vector<8x32xf32> to vector<8x8xf32>
    %cst_50 = arith.constant 0.353553385 : f32
    %187 = vector.broadcast %cst_50 : f32 to vector<8x8xf32>
    %188 = arith.mulf %186, %187 : vector<8x8xf32>
    %189 = vector.shape_cast %188 : vector<8x8xf32> to vector<1x8x8xf32>
    %190 = vector.extract_strided_slice %182 {offsets = [0, 0], sizes = [16, 8], strides = [1, 1]} : vector<16x32xf32> to vector<16x8xf32>
    %191 = vector.shape_cast %190 : vector<16x8xf32> to vector<1x16x8xf32>
    %192 = vector.extract_strided_slice %185 {offsets = [0, 0], sizes = [16, 8], strides = [1, 1]} : vector<16x32xf32> to vector<16x8xf32>
    %193 = vector.shape_cast %192 : vector<16x8xf32> to vector<1x16x8xf32>
    "tpu.trace_start"() <{level = 10 : i32, message = "bqd,bkd->bqk"}> : () -> ()
    %cst_51 = arith.constant dense<0.000000e+00> : vector<1x8x16xf32>
    %194 = tpu.matmul %189, %191, %cst_51 {dimension_numbers = #tpu.dot_dimension_numbers<[2], [2], [1], [1], [0, 0, 0, 1, 1, 1], [0], [0]>} : vector<1x8x8xf32>, vector<1x16x8xf32>, vector<1x8x16xf32> -> vector<1x8x16xf32>
    "tpu.trace_stop"() : () -> ()
    %cst_52 = arith.constant dense<0xFF800000> : vector<1x8xf32>
    %195 = vector.multi_reduction <maximumf>, %194, %cst_52 [2] : vector<1x8x16xf32> to vector<1x8xf32>
    %196 = vector.shape_cast %195 : vector<1x8xf32> to vector<1x8x1xf32>
    %197 = vector.broadcast %196 : vector<1x8x1xf32> to vector<1x8x16xf32>
    %198 = arith.subf %194, %197 : vector<1x8x16xf32>
    %199 = math.exp %198 : vector<1x8x16xf32>
    %cst_53 = arith.constant dense<0.000000e+00> : vector<1x8xf32>
    %200 = vector.multi_reduction <add>, %199, %cst_53 [2] : vector<1x8x16xf32> to vector<1x8xf32>
    %201 = vector.shape_cast %200 : vector<1x8xf32> to vector<1x8x1xf32>
    %202 = tpu.reciprocal %201 {approx = true} : vector<1x8x1xf32> -> vector<1x8x1xf32>
    %203 = vector.broadcast %202 : vector<1x8x1xf32> to vector<1x8x16xf32>
    %204 = arith.mulf %199, %203 : vector<1x8x16xf32>
    "tpu.trace_start"() <{level = 10 : i32, message = "bqk,bkd->bqd"}> : () -> ()
    %cst_54 = arith.constant dense<0.000000e+00> : vector<1x8x8xf32>
    %205 = tpu.matmul %204, %193, %cst_54 {dimension_numbers = #tpu.dot_dimension_numbers<[2], [1], [1], [2], [0, 0, 0, 1, 1, 2], [0], [0]>} : vector<1x8x16xf32>, vector<1x16x8xf32>, vector<1x8x8xf32> -> vector<1x8x8xf32>
    "tpu.trace_stop"() : () -> ()
    %206 = vector.shape_cast %205 : vector<1x8x8xf32> to vector<8x8xf32>
    %207 = vector.extract_strided_slice %179 {offsets = [0, 8], sizes = [8, 8], strides = [1, 1]} : vector<8x32xf32> to vector<8x8xf32>
    %cst_55 = arith.constant 0.353553385 : f32
    %208 = vector.broadcast %cst_55 : f32 to vector<8x8xf32>
    %209 = arith.mulf %207, %208 : vector<8x8xf32>
    %210 = vector.shape_cast %209 : vector<8x8xf32> to vector<1x8x8xf32>
    %211 = vector.extract_strided_slice %182 {offsets = [0, 8], sizes = [16, 8], strides = [1, 1]} : vector<16x32xf32> to vector<16x8xf32>
    %212 = vector.shape_cast %211 : vector<16x8xf32> to vector<1x16x8xf32>
    %213 = vector.extract_strided_slice %185 {offsets = [0, 8], sizes = [16, 8], strides = [1, 1]} : vector<16x32xf32> to vector<16x8xf32>
    %214 = vector.shape_cast %213 : vector<16x8xf32> to vector<1x16x8xf32>
    "tpu.trace_start"() <{level = 10 : i32, message = "bqd,bkd->bqk"}> : () -> ()
    %cst_56 = arith.constant dense<0.000000e+00> : vector<1x8x16xf32>
    %215 = tpu.matmul %210, %212, %cst_56 {dimension_numbers = #tpu.dot_dimension_numbers<[2], [2], [1], [1], [0, 0, 0, 1, 1, 1], [0], [0]>} : vector<1x8x8xf32>, vector<1x16x8xf32>, vector<1x8x16xf32> -> vector<1x8x16xf32>
    "tpu.trace_stop"() : () -> ()
    %cst_57 = arith.constant dense<0xFF800000> : vector<1x8xf32>
    %216 = vector.multi_reduction <maximumf>, %215, %cst_57 [2] : vector<1x8x16xf32> to vector<1x8xf32>
    %217 = vector.shape_cast %216 : vector<1x8xf32> to vector<1x8x1xf32>
    %218 = vector.broadcast %217 : vector<1x8x1xf32> to vector<1x8x16xf32>
    %219 = arith.subf %215, %218 : vector<1x8x16xf32>
    %220 = math.exp %219 : vector<1x8x16xf32>
    %cst_58 = arith.constant dense<0.000000e+00> : vector<1x8xf32>
    %221 = vector.multi_reduction <add>, %220, %cst_58 [2] : vector<1x8x16xf32> to vector<1x8xf32>
    %222 = vector.shape_cast %221 : vector<1x8xf32> to vector<1x8x1xf32>
    %223 = tpu.reciprocal %222 {approx = true} : vector<1x8x1xf32> -> vector<1x8x1xf32>
    %224 = vector.broadcast %223 : vector<1x8x1xf32> to vector<1x8x16xf32>
    %225 = arith.mulf %220, %224 : vector<1x8x16xf32>
    "tpu.trace_start"() <{level = 10 : i32, message = "bqk,bkd->bqd"}> : () -> ()
    %cst_59 = arith.constant dense<0.000000e+00> : vector<1x8x8xf32>
    %226 = tpu.matmul %225, %214, %cst_59 {dimension_numbers = #tpu.dot_dimension_numbers<[2], [1], [1], [2], [0, 0, 0, 1, 1, 2], [0], [0]>} : vector<1x8x16xf32>, vector<1x16x8xf32>, vector<1x8x8xf32> -> vector<1x8x8xf32>
    "tpu.trace_stop"() : () -> ()
    %227 = vector.shape_cast %226 : vector<1x8x8xf32> to vector<8x8xf32>
    %228 = vector.extract_strided_slice %179 {offsets = [0, 16], sizes = [8, 8], strides = [1, 1]} : vector<8x32xf32> to vector<8x8xf32>
    %cst_60 = arith.constant 0.353553385 : f32
    %229 = vector.broadcast %cst_60 : f32 to vector<8x8xf32>
    %230 = arith.mulf %228, %229 : vector<8x8xf32>
    %231 = vector.shape_cast %230 : vector<8x8xf32> to vector<1x8x8xf32>
    %232 = vector.extract_strided_slice %182 {offsets = [0, 16], sizes = [16, 8], strides = [1, 1]} : vector<16x32xf32> to vector<16x8xf32>
    %233 = vector.shape_cast %232 : vector<16x8xf32> to vector<1x16x8xf32>
    %234 = vector.extract_strided_slice %185 {offsets = [0, 16], sizes = [16, 8], strides = [1, 1]} : vector<16x32xf32> to vector<16x8xf32>
    %235 = vector.shape_cast %234 : vector<16x8xf32> to vector<1x16x8xf32>
    "tpu.trace_start"() <{level = 10 : i32, message = "bqd,bkd->bqk"}> : () -> ()
    %cst_61 = arith.constant dense<0.000000e+00> : vector<1x8x16xf32>
    %236 = tpu.matmul %231, %233, %cst_61 {dimension_numbers = #tpu.dot_dimension_numbers<[2], [2], [1], [1], [0, 0, 0, 1, 1, 1], [0], [0]>} : vector<1x8x8xf32>, vector<1x16x8xf32>, vector<1x8x16xf32> -> vector<1x8x16xf32>
    "tpu.trace_stop"() : () -> ()
    %cst_62 = arith.constant dense<0xFF800000> : vector<1x8xf32>
    %237 = vector.multi_reduction <maximumf>, %236, %cst_62 [2] : vector<1x8x16xf32> to vector<1x8xf32>
    %238 = vector.shape_cast %237 : vector<1x8xf32> to vector<1x8x1xf32>
    %239 = vector.broadcast %238 : vector<1x8x1xf32> to vector<1x8x16xf32>
    %240 = arith.subf %236, %239 : vector<1x8x16xf32>
    %241 = math.exp %240 : vector<1x8x16xf32>
    %cst_63 = arith.constant dense<0.000000e+00> : vector<1x8xf32>
    %242 = vector.multi_reduction <add>, %241, %cst_63 [2] : vector<1x8x16xf32> to vector<1x8xf32>
    %243 = vector.shape_cast %242 : vector<1x8xf32> to vector<1x8x1xf32>
    %244 = tpu.reciprocal %243 {approx = true} : vector<1x8x1xf32> -> vector<1x8x1xf32>
    %245 = vector.broadcast %244 : vector<1x8x1xf32> to vector<1x8x16xf32>
    %246 = arith.mulf %241, %245 : vector<1x8x16xf32>
    "tpu.trace_start"() <{level = 10 : i32, message = "bqk,bkd->bqd"}> : () -> ()
    %cst_64 = arith.constant dense<0.000000e+00> : vector<1x8x8xf32>
    %247 = tpu.matmul %246, %235, %cst_64 {dimension_numbers = #tpu.dot_dimension_numbers<[2], [1], [1], [2], [0, 0, 0, 1, 1, 2], [0], [0]>} : vector<1x8x16xf32>, vector<1x16x8xf32>, vector<1x8x8xf32> -> vector<1x8x8xf32>
    "tpu.trace_stop"() : () -> ()
    %248 = vector.shape_cast %247 : vector<1x8x8xf32> to vector<8x8xf32>
    %249 = vector.extract_strided_slice %179 {offsets = [0, 24], sizes = [8, 8], strides = [1, 1]} : vector<8x32xf32> to vector<8x8xf32>
    %cst_65 = arith.constant 0.353553385 : f32
    %250 = vector.broadcast %cst_65 : f32 to vector<8x8xf32>
    %251 = arith.mulf %249, %250 : vector<8x8xf32>
    %252 = vector.shape_cast %251 : vector<8x8xf32> to vector<1x8x8xf32>
    %253 = vector.extract_strided_slice %182 {offsets = [0, 24], sizes = [16, 8], strides = [1, 1]} : vector<16x32xf32> to vector<16x8xf32>
    %254 = vector.shape_cast %253 : vector<16x8xf32> to vector<1x16x8xf32>
    %255 = vector.extract_strided_slice %185 {offsets = [0, 24], sizes = [16, 8], strides = [1, 1]} : vector<16x32xf32> to vector<16x8xf32>
    %256 = vector.shape_cast %255 : vector<16x8xf32> to vector<1x16x8xf32>
    "tpu.trace_start"() <{level = 10 : i32, message = "bqd,bkd->bqk"}> : () -> ()
    %cst_66 = arith.constant dense<0.000000e+00> : vector<1x8x16xf32>
    %257 = tpu.matmul %252, %254, %cst_66 {dimension_numbers = #tpu.dot_dimension_numbers<[2], [2], [1], [1], [0, 0, 0, 1, 1, 1], [0], [0]>} : vector<1x8x8xf32>, vector<1x16x8xf32>, vector<1x8x16xf32> -> vector<1x8x16xf32>
    "tpu.trace_stop"() : () -> ()
    %cst_67 = arith.constant dense<0xFF800000> : vector<1x8xf32>
    %258 = vector.multi_reduction <maximumf>, %257, %cst_67 [2] : vector<1x8x16xf32> to vector<1x8xf32>
    %259 = vector.shape_cast %258 : vector<1x8xf32> to vector<1x8x1xf32>
    %260 = vector.broadcast %259 : vector<1x8x1xf32> to vector<1x8x16xf32>
    %261 = arith.subf %257, %260 : vector<1x8x16xf32>
    %262 = math.exp %261 : vector<1x8x16xf32>
    %cst_68 = arith.constant dense<0.000000e+00> : vector<1x8xf32>
    %263 = vector.multi_reduction <add>, %262, %cst_68 [2] : vector<1x8x16xf32> to vector<1x8xf32>
    %264 = vector.shape_cast %263 : vector<1x8xf32> to vector<1x8x1xf32>
    %265 = tpu.reciprocal %264 {approx = true} : vector<1x8x1xf32> -> vector<1x8x1xf32>
    %266 = vector.broadcast %265 : vector<1x8x1xf32> to vector<1x8x16xf32>
    %267 = arith.mulf %262, %266 : vector<1x8x16xf32>
    "tpu.trace_start"() <{level = 10 : i32, message = "bqk,bkd->bqd"}> : () -> ()
    %cst_69 = arith.constant dense<0.000000e+00> : vector<1x8x8xf32>
    %268 = tpu.matmul %267, %256, %cst_69 {dimension_numbers = #tpu.dot_dimension_numbers<[2], [1], [1], [2], [0, 0, 0, 1, 1, 2], [0], [0]>} : vector<1x8x16xf32>, vector<1x16x8xf32>, vector<1x8x8xf32> -> vector<1x8x8xf32>
    "tpu.trace_stop"() : () -> ()
    %269 = vector.shape_cast %268 : vector<1x8x8xf32> to vector<8x8xf32>
    %270 = tpu.concatenate %206, %227, %248, %269 in 1 : vector<8x8xf32>, vector<8x8xf32>, vector<8x8xf32>, vector<8x8xf32> -> vector<8x32xf32>
    %cst_70 = arith.constant dense<0.000000e+00> : vector<8x32xf32>
    %271 = tpu.matmul %270, %16, %cst_70 {dimension_numbers = #tpu.dot_dimension_numbers<[1], [1], [0], [0], [0, 0, 1, 0], [], []>} : vector<8x32xf32>, vector<32x32xf32>, vector<8x32xf32> -> vector<8x32xf32>
    %272 = vector.broadcast %33 : vector<1x32xf32> to vector<8x32xf32>
    %273 = arith.addf %271, %272 : vector<8x32xf32>
    %274 = arith.addf %154, %273 : vector<8x32xf32>
    %cst_71 = arith.constant dense<0.000000e+00> : vector<8xf32>
    %275 = vector.multi_reduction <add>, %274, %cst_71 [1] : vector<8x32xf32> to vector<8xf32>
    %276 = vector.shape_cast %275 : vector<8xf32> to vector<8x1xf32>
    %cst_72 = arith.constant 3.200000e+01 : f32
    %277 = vector.broadcast %cst_72 : f32 to vector<8x1xf32>
    %278 = arith.divf %276, %277 : vector<8x1xf32>
    %279 = vector.broadcast %278 : vector<8x1xf32> to vector<8x32xf32>
    %280 = arith.subf %274, %279 : vector<8x32xf32>
    %281 = arith.mulf %280, %280 : vector<8x32xf32>
    %cst_73 = arith.constant dense<0.000000e+00> : vector<8xf32>
    %282 = vector.multi_reduction <add>, %281, %cst_73 [1] : vector<8x32xf32> to vector<8xf32>
    %283 = vector.shape_cast %282 : vector<8xf32> to vector<8x1xf32>
    %cst_74 = arith.constant 3.200000e+01 : f32
    %284 = vector.broadcast %cst_74 : f32 to vector<8x1xf32>
    %285 = arith.divf %283, %284 : vector<8x1xf32>
    %286 = vector.broadcast %278 : vector<8x1xf32> to vector<8x32xf32>
    %287 = arith.subf %274, %286 : vector<8x32xf32>
    %cst_75 = arith.constant 9.99999974E-6 : f32
    %288 = vector.broadcast %cst_75 : f32 to vector<8x1xf32>
    %289 = arith.addf %285, %288 : vector<8x1xf32>
    %290 = math.rsqrt %289 : vector<8x1xf32>
    %291 = vector.broadcast %290 : vector<8x1xf32> to vector<8x32xf32>
    %292 = arith.mulf %287, %291 : vector<8x32xf32>
    %293 = vector.broadcast %24 : vector<1x32xf32> to vector<8x32xf32>
    %294 = arith.mulf %292, %293 : vector<8x32xf32>
    %295 = vector.broadcast %25 : vector<1x32xf32> to vector<8x32xf32>
    %296 = arith.addf %294, %295 : vector<8x32xf32>
    %cst_76 = arith.constant dense<0.000000e+00> : vector<8x64xf32>
    %297 = tpu.matmul %296, %17, %cst_76 {dimension_numbers = #tpu.dot_dimension_numbers<[1], [1], [0], [0], [0, 0, 1, 0], [], []>} : vector<8x32xf32>, vector<64x32xf32>, vector<8x64xf32> -> vector<8x64xf32>
    %298 = vector.broadcast %19 : vector<1x64xf32> to vector<8x64xf32>
    %299 = arith.addf %297, %298 : vector<8x64xf32>
    %cst_77 = arith.constant 0.000000e+00 : f32
    %300 = vector.broadcast %cst_77 : f32 to vector<8x64xf32>
    %301 = arith.maximumf %299, %300 : vector<8x64xf32>
    %cst_78 = arith.constant dense<0.000000e+00> : vector<8x32xf32>
    %302 = tpu.matmul %301, %18, %cst_78 {dimension_numbers = #tpu.dot_dimension_numbers<[1], [1], [0], [0], [0, 0, 1, 0], [], []>} : vector<8x64xf32>, vector<32x64xf32>, vector<8x32xf32> -> vector<8x32xf32>
    %303 = arith.addf %274, %302 : vector<8x32xf32>
    %304 = vector.broadcast %34 : vector<1x32xf32> to vector<8x32xf32>
    %305 = arith.addf %303, %304 : vector<8x32xf32>
    %306 = vector.shape_cast %305 : vector<8x32xf32> to vector<1x8x32xf32>
    %c0_79 = arith.constant 0 : index
    %c0_80 = arith.constant 0 : index
    %c0_81 = arith.constant 0 : index
    %307 = vector.load %arg7[%c0_79, %c0_80, %c0_81] : memref<1x8x32xf32, #tpu.memory_space<vmem>>, vector<1x8x32xf32>
    tpu.vector_store %arg7[%c0_79, %c0_80, %c0_81], %306 {strides = array<i32>} : memref<1x8x32xf32, #tpu.memory_space<vmem>>, vector<1x8x32xf32>,
    return
  }
  func.func @transform_0(%arg0: i32) -> (i32, i32, i32) {
    %c0_i32 = arith.constant 0 : i32
    %c0_i32_0 = arith.constant 0 : i32
    %c0_i32_1 = arith.constant 0 : i32
    return %arg0, %c0_i32, %c0_i32_0 : i32, i32, i32
  }
  func.func @transform_1(%arg0: i32) -> (i32, i32, i32) {
    %c0_i32 = arith.constant 0 : i32
    %c0_i32_0 = arith.constant 0 : i32
    %c0_i32_1 = arith.constant 0 : i32
    return %arg0, %c0_i32, %c0_i32_0 : i32, i32, i32
  }
  func.func @transform_2(%arg0: i32) -> (i32, i32, i32) {
    %c0_i32 = arith.constant 0 : i32
    %c0_i32_0 = arith.constant 0 : i32
    %c0_i32_1 = arith.constant 0 : i32
    return %arg0, %c0_i32, %c0_i32_0 : i32, i32, i32
  }
  func.func @transform_3(%arg0: i32) -> (i32, i32) {
    %c0_i32 = arith.constant 0 : i32
    %c0_i32_0 = arith.constant 0 : i32
    %c0_i32_1 = arith.constant 0 : i32
    return %c0_i32, %c0_i32_0 : i32, i32
  }
  func.func @transform_4(%arg0: i32) -> (i32, i32) {
    %c0_i32 = arith.constant 0 : i32
    %c0_i32_0 = arith.constant 0 : i32
    %c0_i32_1 = arith.constant 0 : i32
    return %c0_i32, %c0_i32_0 : i32, i32
  }
  func.func @transform_5(%arg0: i32) -> (i32, i32) {
    %c0_i32 = arith.constant 0 : i32
    %c0_i32_0 = arith.constant 0 : i32
    %c0_i32_1 = arith.constant 0 : i32
    return %c0_i32, %c0_i32_0 : i32, i32
  }
  func.func @transform_6(%arg0: i32) -> (i32, i32, i32) {
    %c0_i32 = arith.constant 0 : i32
    %c0_i32_0 = arith.constant 0 : i32
    %c0_i32_1 = arith.constant 0 : i32
    return %arg0, %c0_i32, %c0_i32_0 : i32, i32, i32
  }
}

</mosaic_0001>

<llo_original>
// kernel: tpu_custom_call.1
$region0: #{tpu_custom_call.1}
  #allocation0 [shape = 'u32[]', space=smem, size = 0x4, offset = 0x4, fixed_abs, tag = 'smem constant byte address 0x4 - core index']
  #allocation1 [shape = 'u32[144,128]{1,0:T(1,128)}', space=vmem, size = 0x12000, scoped, tag = 'internal scratch']
  %s0 = inlined_call_operand.vmem [shape: f32[2,8,32], index: 0, kind: input, shape index: {}]
  %s1 = inlined_call_operand.vmem [shape: f32[2,16,32], index: 1, kind: input, shape index: {}]
  %s2 = inlined_call_operand.vmem [shape: f32[2,16,32], index: 2, kind: input, shape index: {}]
  %s3 = inlined_call_operand.vmem [shape: f32[320,32], index: 3, kind: input, shape index: {}]
  %s4 = inlined_call_operand.vmem [shape: f32[33,64], index: 4, kind: input, shape index: {}]
  %s5 = inlined_call_operand.vmem [shape: f32[16,32], index: 5, kind: input, shape index: {}]
  %s6 = inlined_call_operand.hbm [shape: f32[2,8,32], index: 6, kind: output, shape index: {}]
  %s7 = sld [smem:[#allocation0]]
  $region57: #{tpu_custom_call.1} parent=0
    _
  %s9 = ssub.s32 1, %s7
  %s10 = scalar_select 0, %s9, %s7
  $region1: #{tpu_custom_call.1} parent=0
    #allocation2 [shape = 'u8[8192]{0}', space=vmem, size = 0x2000, scoped, tag = 'output window, operand 0']
    #allocation3 [shape = 's32[2]{0}', space=sflag, size = 0x8, scoped, tag = 'scoped memory for tpu_custom_call.1']
    %11 = vsyncpa [#allocation3], 0
    %s12 = scalar_lea.sflag [#allocation3], 1
    %13 = vsyncpa %s12, 0
    loop: start=0, step=1, limit=4
    $region2: #{tpu_custom_call.1} parent=1 // loop_pre_header
      _
    $region3: #{tpu_custom_call.1} parent=1 // loop_header
      %s15 = sphi 0, %s19
      %p16 = scmp.ge.s32.totalorder %s15, 4
      %s25 = sphi 0, %s27
      %s28 = sphi 0, %s25
      %s29 = sphi 0, %s28
      %s45 = sphi 0, %s29
      %s51 = sphi 0, %s53
      %s54 = sphi 0, %s51
      %s55 = sphi 0, %s54
      %s71 = sphi 0, %s55
      %s77 = sphi 0, %s79
      %s80 = sphi 0, %s77
      %s81 = sphi 0, %s80
      %s97 = sphi 0, %s81
      %s101 = sphi 0, %s101
      %s103 = sphi 0, %s101
      %s104 = sphi 0, %s103
      %s118 = sphi 0, %s104
      %s122 = sphi 0, %s122
      %s124 = sphi 0, %s122
      %s125 = sphi 0, %s124
      %s139 = sphi 0, %s125
      %s143 = sphi 0, %s143
      %s145 = sphi 0, %s143
      %s146 = sphi 0, %s145
      %s160 = sphi 0, %s146
      %s166 = sphi 0, %s168
      %s169 = sphi 0, %s166
      %s170 = sphi 0, %s169
      %s186 = sphi 0, %s170
    $region4: #{tpu_custom_call.1} parent=1 // loop_header_branch
      %18 = sbr.rel (%p16) target = $region8
    $region5: #{tpu_custom_call.1} parent=1 // loop_body
      %s20 = ssub.s32 %s15, 1
      %s21 = ssub.s32 %s15, 2
      %s22 = sadd.s32 %s15, 1
      %s23 = ssub.s32 %s15, %s22
      %p24 = scmp.eq.s32.totalorder %s23, 0
      %s26 = sadd.s32 %s25, 1
      %s27 = scalar_select %p24, %s25, %s26
      %p30 = pneg %p24
      %p31 = scmp.eq.s32.totalorder %s15, 1
      %p32 = por %p30, %p31
      %p33 = scmp.ne.s32.totalorder %s25, %s28
      %p34 = scmp.eq.s32.totalorder %s15, 0
      %p35 = por %p33, %p34
      %p36 = scmp.ne.s32.totalorder %s25, %s28
      %p37 = scmp.eq.s32.totalorder %s20, 1
      %p38 = por %p36, %p37
      %p39 = scmp.ne.s32.totalorder %s28, %s29
      %p40 = scmp.eq.s32.totalorder %s20, 0
      %p41 = por %p39, %p40
      %p42 = scmp.ne.s32.totalorder %s28, %s29
      %p43 = scmp.eq.s32.totalorder %s21, 1
      %p44 = por %p42, %p43
      %p46 = scmp.ne.s32.totalorder %s29, %s45
      %p47 = scmp.eq.s32.totalorder %s21, 0
      %p48 = por %p46, %p47
      %s49 = ssub.s32 %s15, %s22
      %p50 = scmp.eq.s32.totalorder %s49, 0
      %s52 = sadd.s32 %s51, 1
      %s53 = scalar_select %p50, %s51, %s52
      %p56 = pneg %p50
      %p57 = scmp.eq.s32.totalorder %s15, 1
      %p58 = por %p56, %p57
      %p59 = scmp.ne.s32.totalorder %s51, %s54
      %p60 = scmp.eq.s32.totalorder %s15, 0
      %p61 = por %p59, %p60
      %p62 = scmp.ne.s32.totalorder %s51, %s54
      %p63 = scmp.eq.s32.totalorder %s20, 1
      %p64 = por %p62, %p63
      %p65 = scmp.ne.s32.totalorder %s54, %s55
      %p66 = scmp.eq.s32.totalorder %s20, 0
      %p67 = por %p65, %p66
      %p68 = scmp.ne.s32.totalorder %s54, %s55
      %p69 = scmp.eq.s32.totalorder %s21, 1
      %p70 = por %p68, %p69
      %p72 = scmp.ne.s32.totalorder %s55, %s71
      %p73 = scmp.eq.s32.totalorder %s21, 0
      %p74 = por %p72, %p73
      %s75 = ssub.s32 %s15, %s22
      %p76 = scmp.eq.s32.totalorder %s75, 0
      %s78 = sadd.s32 %s77, 1
      %s79 = scalar_select %p76, %s77, %s78
      %p82 = pneg %p76
      %p83 = scmp.eq.s32.totalorder %s15, 1
      %p84 = por %p82, %p83
      %p85 = scmp.ne.s32.totalorder %s77, %s80
      %p86 = scmp.eq.s32.totalorder %s15, 0
      %p87 = por %p85, %p86
      %p88 = scmp.ne.s32.totalorder %s77, %s80
      %p89 = scmp.eq.s32.totalorder %s20, 1
      %p90 = por %p88, %p89
      %p91 = scmp.ne.s32.totalorder %s80, %s81
      %p92 = scmp.eq.s32.totalorder %s20, 0
      %p93 = por %p91, %p92
      %p94 = scmp.ne.s32.totalorder %s80, %s81
      %p95 = scmp.eq.s32.totalorder %s21, 1
      %p96 = por %p94, %p95
      %p98 = scmp.ne.s32.totalorder %s81, %s97
      %p99 = scmp.eq.s32.totalorder %s21, 0
      %p100 = por %p98, %p99
      %s102 = sadd.s32 %s101, 1
      %p105 = scmp.eq.s32.totalorder %s15, 1
      %p106 = scmp.ne.s32.totalorder %s101, %s103
      %p107 = scmp.eq.s32.totalorder %s15, 0
      %p108 = por %p106, %p107
      %p109 = scmp.ne.s32.totalorder %s101, %s103
      %p110 = scmp.eq.s32.totalorder %s20, 1
      %p111 = por %p109, %p110
      %p112 = scmp.ne.s32.totalorder %s103, %s104
      %p113 = scmp.eq.s32.totalorder %s20, 0
      %p114 = por %p112, %p113
      %p115 = scmp.ne.s32.totalorder %s103, %s104
      %p116 = scmp.eq.s32.totalorder %s21, 1
      %p117 = por %p115, %p116
      %p119 = scmp.ne.s32.totalorder %s104, %s118
      %p120 = scmp.eq.s32.totalorder %s21, 0
      %p121 = por %p119, %p120
      %s123 = sadd.s32 %s122, 1
      %p126 = scmp.eq.s32.totalorder %s15, 1
      %p127 = scmp.ne.s32.totalorder %s122, %s124
      %p128 = scmp.eq.s32.totalorder %s15, 0
      %p129 = por %p127, %p128
      %p130 = scmp.ne.s32.totalorder %s122, %s124
      %p131 = scmp.eq.s32.totalorder %s20, 1
      %p132 = por %p130, %p131
      %p133 = scmp.ne.s32.totalorder %s124, %s125
      %p134 = scmp.eq.s32.totalorder %s20, 0
      %p135 = por %p133, %p134
      %p136 = scmp.ne.s32.totalorder %s124, %s125
      %p137 = scmp.eq.s32.totalorder %s21, 1
      %p138 = por %p136, %p137
      %p140 = scmp.ne.s32.totalorder %s125, %s139
      %p141 = scmp.eq.s32.totalorder %s21, 0
      %p142 = por %p140, %p141
      %s144 = sadd.s32 %s143, 1
      %p147 = scmp.eq.s32.totalorder %s15, 1
      %p148 = scmp.ne.s32.totalorder %s143, %s145
      %p149 = scmp.eq.s32.totalorder %s15, 0
      %p150 = por %p148, %p149
      %p151 = scmp.ne.s32.totalorder %s143, %s145
      %p152 = scmp.eq.s32.totalorder %s20, 1
      %p153 = por %p151, %p152
      %p154 = scmp.ne.s32.totalorder %s145, %s146
      %p155 = scmp.eq.s32.totalorder %s20, 0
      %p156 = por %p154, %p155
      %p157 = scmp.ne.s32.totalorder %s145, %s146
      %p158 = scmp.eq.s32.totalorder %s21, 1
      %p159 = por %p157, %p158
      %p161 = scmp.ne.s32.totalorder %s146, %s160
      %p162 = scmp.eq.s32.totalorder %s21, 0
      %p163 = por %p161, %p162
      %s164 = ssub.s32 %s15, %s22
      %p165 = scmp.eq.s32.totalorder %s164, 0
      %s167 = sadd.s32 %s166, 1
      %s168 = scalar_select %p165, %s166, %s167
      %p171 = pneg %p165
      %p172 = scmp.eq.s32.totalorder %s15, 1
      %p173 = por %p171, %p172
      %p174 = scmp.ne.s32.totalorder %s166, %s169
      %p175 = scmp.eq.s32.totalorder %s15, 0
      %p176 = por %p174, %p175
      %p177 = scmp.ne.s32.totalorder %s166, %s169
      %p178 = scmp.eq.s32.totalorder %s20, 1
      %p179 = por %p177, %p178
      %p180 = scmp.ne.s32.totalorder %s169, %s170
      %p181 = scmp.eq.s32.totalorder %s20, 0
      %p182 = por %p180, %p181
      %p183 = scmp.ne.s32.totalorder %s169, %s170
      %p184 = scmp.eq.s32.totalorder %s21, 1
      %p185 = por %p183, %p184
      %p187 = scmp.ne.s32.totalorder %s170, %s186
      %p188 = scmp.eq.s32.totalorder %s21, 0
      %p189 = por %p187, %p188
      %p190 = scmp.le.s32.totalorder 1, %s15
      %p191 = scmp.lt.s32.totalorder %s15, 3
      %p192 = pnand %p190, %p191
      %p193 = pneg %p192
      // Predicated region
      $region9: #{tpu_custom_call.1} parent=5 // pred_check
        _
      $region10: #{tpu_custom_call.1} parent=5 // pred_check_branch
        %195 = sbr.rel (%p192) target = $region12
      $region11: #{tpu_custom_call.1} parent=5 // pred_region
        %s196 = ssub.s32 %s15, 1
        // Predicated region
        $region13: #{tpu_custom_call.1} parent=11 // pred_check
          %p197 = pneg %p114
        $region14: #{tpu_custom_call.1} parent=11 // pred_check_branch
          %199 = sbr.rel (%p197) target = $region16
        $region15: #{tpu_custom_call.1} parent=11 // pred_region
          _
        $region16: #{tpu_custom_call.1} parent=11 // pred_fallthru
          _
        // Predicated region
        $region17: #{tpu_custom_call.1} parent=11 // pred_check
          %p200 = pneg %p135
        $region18: #{tpu_custom_call.1} parent=11 // pred_check_branch
          %202 = sbr.rel (%p200) target = $region20
        $region19: #{tpu_custom_call.1} parent=11 // pred_region
          _
        $region20: #{tpu_custom_call.1} parent=11 // pred_fallthru
          _
        // Predicated region
        $region21: #{tpu_custom_call.1} parent=11 // pred_check
          %p203 = pneg %p156
        $region22: #{tpu_custom_call.1} parent=11 // pred_check_branch
          %205 = sbr.rel (%p203) target = $region24
        $region23: #{tpu_custom_call.1} parent=11 // pred_region
          _
        $region24: #{tpu_custom_call.1} parent=11 // pred_fallthru
          _
      $region12: #{tpu_custom_call.1} parent=5 // pred_fallthru
        _
      %p206 = scmp.lt.s32.totalorder %s15, 2
      // Predicated region
      $region25: #{tpu_custom_call.1} parent=5 // pred_check
        %p207 = pneg %p206
      $region26: #{tpu_custom_call.1} parent=5 // pred_check_branch
        %209 = sbr.rel (%p207) target = $region28
      $region27: #{tpu_custom_call.1} parent=5 // pred_region
        // Predicated region
        $region29: #{tpu_custom_call.1} parent=27 // pred_check
          %p210 = pneg %p35
        $region30: #{tpu_custom_call.1} parent=27 // pred_check_branch
          %212 = sbr.rel (%p210) target = $region32
        $region31: #{tpu_custom_call.1} parent=27 // pred_region
          %p213 = scmp.lt.s32.totalorder %s15, 1
          %s214 = scalar_select %p213, %s15, 1
          %s215 = smul.addr %s214, 8
          %s216 = scalar_lea.vmem %s0, %s215
        $region32: #{tpu_custom_call.1} parent=27 // pred_fallthru
          _
        // Predicated region
        $region33: #{tpu_custom_call.1} parent=27 // pred_check
          %p217 = pneg %p61
        $region34: #{tpu_custom_call.1} parent=27 // pred_check_branch
          %219 = sbr.rel (%p217) target = $region36
        $region35: #{tpu_custom_call.1} parent=27 // pred_region
          %p220 = scmp.lt.s32.totalorder %s15, 1
          %s221 = scalar_select %p220, %s15, 1
          %s222 = smul.addr %s221, 2
          %s223 = smul.addr %s222, 8
          %s224 = scalar_lea.vmem %s1, %s223
        $region36: #{tpu_custom_call.1} parent=27 // pred_fallthru
          _
        // Predicated region
        $region37: #{tpu_custom_call.1} parent=27 // pred_check
          %p225 = pneg %p87
        $region38: #{tpu_custom_call.1} parent=27 // pred_check_branch
          %227 = sbr.rel (%p225) target = $region40
        $region39: #{tpu_custom_call.1} parent=27 // pred_region
          %p228 = scmp.lt.s32.totalorder %s15, 1
          %s229 = scalar_select %p228, %s15, 1
          %s230 = smul.addr %s229, 2
          %s231 = smul.addr %s230, 8
          %s232 = scalar_lea.vmem %s2, %s231
        $region40: #{tpu_custom_call.1} parent=27 // pred_fallthru
          _
      $region28: #{tpu_custom_call.1} parent=5 // pred_fallthru
        _
      %p233 = scmp.le.s32.totalorder 1, %s15
      %p234 = scmp.lt.s32.totalorder %s15, 3
      %p235 = pnand %p233, %p234
      %p236 = pneg %p235
      // Predicated region
      $region41: #{tpu_custom_call.1} parent=5 // pred_check
        _
      $region42: #{tpu_custom_call.1} parent=5 // pred_check_branch
        %238 = sbr.rel (%p235) target = $region44
      $region43: #{tpu_custom_call.1} parent=5 // pred_region
        %s239 = ssub.s32 %s15, 1
        %p240 = scmp.lt.s32.totalorder %s20, 1
        %s241 = scalar_select %p240, %s20, 1
        %s242 = smul.addr %s241, 8
        %s243 = scalar_lea.vmem %s0, %s242
        %p244 = pneg %p41
        %p245 = pneg %p38
        %p246 = scmp.lt.s32.totalorder %s20, 1
        %s247 = scalar_select %p246, %s20, 1
        %s248 = smul.addr %s247, 2
        %s249 = smul.addr %s248, 8
        %s250 = scalar_lea.vmem %s1, %s249
        %p251 = pneg %p67
        %p252 = pneg %p64
        %p253 = scmp.lt.s32.totalorder %s20, 1
        %s254 = scalar_select %p253, %s20, 1
        %s255 = smul.addr %s254, 2
        %s256 = smul.addr %s255, 8
        %s257 = scalar_lea.vmem %s2, %s256
        %p258 = pneg %p93
        %p259 = pneg %p90
        %p260 = pneg %p114
        %p261 = pneg %p111
        %p262 = pneg %p135
        %p263 = pneg %p132
        %p264 = pneg %p156
        %p265 = pneg %p153
        %p266 = pneg %p182
        %p267 = pneg %p179
        %s268 = sand.u32 %s169, 1
        %s269 = scalar_lea.sflag [#allocation3], %s268
        %s270 = sand.u32 %s169, 1
        %s271 = smul.addr %s270, 8
        %s272 = scalar_lea.vmem [#allocation2], %s271
        %p273 = scmp.lt.s32.totalorder %s20, 1
        %s274 = scalar_select %p273, %s20, 1
        %s275 = smul.addr %s274, 8
        %s276 = scalar_lea.vmem %s0, %s275
        %p277 = scmp.lt.s32.totalorder %s20, 1
        %s278 = scalar_select %p277, %s20, 1
        %s279 = smul.addr %s278, 2
        %s280 = smul.addr %s279, 8
        %s281 = scalar_lea.vmem %s1, %s280
        %p282 = scmp.lt.s32.totalorder %s20, 1
        %s283 = scalar_select %p282, %s20, 1
        %s284 = smul.addr %s283, 2
        %s285 = smul.addr %s284, 8
        %s286 = scalar_lea.vmem %s2, %s285
        %v287 = vld [vmem:[%s276] sm:$0xff]
        %v288 = vld [vmem:[%s281] sm:$0xff]
        %v289 = vld [vmem:[%s281 + $0x8] sm:$0xff]
        %v290 = vld [vmem:[%s286] sm:$0xff]
        %v291 = vld [vmem:[%s286 + $0x8] sm:$0xff]
        %v292 = vld [vmem:[%s3] sm:$0xff]
        %v293 = vld [vmem:[%s3 + $0x8] sm:$0xff]
        %v294 = vld [vmem:[%s3 + $0x10] sm:$0xff]
        %v295 = vld [vmem:[%s3 + $0x18] sm:$0xff]
        %v296 = vld [vmem:[%s3 + $0x20] sm:$0xff]
        %v297 = vld [vmem:[%s3 + $0x28] sm:$0xff]
        %v298 = vld [vmem:[%s3 + $0x30] sm:$0xff]
        %v299 = vld [vmem:[%s3 + $0x38] sm:$0xff]
        %v300 = vld [vmem:[%s3 + $0x40] sm:$0xff]
        %v301 = vld [vmem:[%s3 + $0x48] sm:$0xff]
        %v302 = vld [vmem:[%s3 + $0x50] sm:$0xff]
        %v303 = vld [vmem:[%s3 + $0x58] sm:$0xff]
        %v304 = vld [vmem:[%s3 + $0x60] sm:$0xff]
        %v305 = vld [vmem:[%s3 + $0x68] sm:$0xff]
        %v306 = vld [vmem:[%s3 + $0x70] sm:$0xff]
        %v307 = vld [vmem:[%s3 + $0x78] sm:$0xff]
        %v308 = vld [vmem:[%s3 + $0x80] sm:$0xff]
        %v309 = vld [vmem:[%s3 + $0x88] sm:$0xff]
        %v310 = vld [vmem:[%s3 + $0x90] sm:$0xff]
        %v311 = vld [vmem:[%s3 + $0x98] sm:$0xff]
        %v312 = vld [vmem:[%s3 + $0xa0] sm:$0xff]
        %v313 = vld [vmem:[%s3 + $0xa8] sm:$0xff]
        %v314 = vld [vmem:[%s3 + $0xb0] sm:$0xff]
        %v315 = vld [vmem:[%s3 + $0xb8] sm:$0xff]
        %v316 = vld [vmem:[%s3 + $0xc0] sm:$0xff]
        %v317 = vld [vmem:[%s3 + $0xc8] sm:$0xff]
        %v318 = vld [vmem:[%s3 + $0xd0] sm:$0xff]
        %v319 = vld [vmem:[%s3 + $0xd8] sm:$0xff]
        %v320 = vld [vmem:[%s3 + $0xe0] sm:$0xff]
        %v321 = vld [vmem:[%s3 + $0xe8] sm:$0xff]
        %v322 = vld [vmem:[%s3 + $0xf0] sm:$0xff]
        %v323 = vld [vmem:[%s3 + $0xf8] sm:$0xff]
        %v324 = vld [vmem:[%s3 + $0x100] sm:$0xff]
        %v325 = vld [vmem:[%s3 + $0x108] sm:$0xff]
        %v326 = vld [vmem:[%s3 + $0x110] sm:$0xff]
        %v327 = vld [vmem:[%s3 + $0x118] sm:$0xff]
        %v328 = vld [vmem:[%s3 + $0x120] sm:$0xff]
        %v329 = vld [vmem:[%s3 + $0x128] sm:$0xff]
        %v330 = vld [vmem:[%s3 + $0x130] sm:$0xff]
        %v331 = vld [vmem:[%s3 + $0x138] sm:$0xff]
        %v332 = vld [vmem:[%s4] sm:$0xff]
        %v333 = vld [vmem:[%s4 + $0x8] sm:$0xff]
        %v334 = vld [vmem:[%s4 + $0x10] sm:$0xff]
        %v335 = vld [vmem:[%s4 + $0x18] sm:$0xff]
        %v336 = vld [vmem:[%s4 + $0x20] sm:$0x1]
        %v337 = vld [vmem:[%s5] sm:$0xff]
        %v338 = vld [vmem:[%s5 + $0x8] sm:$0xff]
        %vm339 = vcmask 261120
        %v340 = vsel %vm339, %v287, 0.0
        %341 = vadd.xlane.f32.xlu0 %v340
        %v342 = vpop.xlane.xlu0 %341
        %v343 = vrcp.pop 32.0
        %v344 = vmul.f32 %v342, %v343
        %v345 = vsub.f32 %v287, %v344
        %v346 = vmul.f32 %v345, %v345
        %v347 = vsel %vm339, %v346, 0.0
        %348 = vadd.xlane.f32.xlu0 %v347
        %v349 = vpop.xlane.xlu0 %348
        %v350 = vmul.f32 %v349, %v343
        %v351 = vadd.f32 %v350, 1e-05
        %v352 = vrsqrt.pop %v351
        %v353 = vmul.f32 %v345, %v352
        %v354 = vlaneseq
        %v355 = vshrl.u32 %v354, 7
        %v356 = vsub.s32 0, %v355
        %v357 = vrot.slane %v337, %v356
        %v358 = vmul.f32 %v353, %v357
        %v359 = vlaneseq
        %v360 = vshrl.u32 %v359, 7
        %v361 = vsub.s32 1, %v360
        %v362 = vrot.slane %v337, %v361
        %v363 = vadd.f32 %v358, %v362
        %v364 = vlaneseq
        %v365 = vshrl.u32 %v364, 7
        %v366 = vsub.s32 6, %v365
        %v367 = vrot.slane %v337, %v366
        %v369 = vsel %vm339, %v363, 0
        %v372 = vsel %vm339, %v292, 0
        %v375 = vsel %vm339, %v293, 0
        %v378 = vsel %vm339, %v294, 0
        %v381 = vsel %vm339, %v295, 0
        %383 = vmatprep.subr.mxu0 0.0
        %384 = vmatpush1.xpose.msra.mxu0 0.0
        %385 = vmatprep.subr.mxu0 0.0
        %386 = vmatpush1.xpose.msra.mxu0 0.0
        %387 = vmatprep.subr.mxu0 0.0
        %388 = vmatpush1.xpose.msra.mxu0 0.0
        %389 = vmatprep.subr.mxu0 0.0
        %390 = vmatpush1.xpose.msra.mxu0 0.0
        %391 = vmatprep.subr.mxu0 0.0
        %392 = vmatpush1.xpose.msra.mxu0 0.0
        %393 = vmatprep.subr.mxu0 0.0
        %394 = vmatpush1.xpose.msra.mxu0 0.0
        %395 = vmatprep.subr.mxu0 0.0
        %396 = vmatpush1.xpose.msra.mxu0 0.0
        %397 = vmatprep.subr.mxu0 0.0
        %398 = vmatpush1.xpose.msra.mxu0 0.0
        %399 = vmatprep.subr.mxu0 0.0
        %400 = vmatpush1.xpose.msra.mxu0 0.0
        %401 = vmatprep.subr.mxu0 0.0
        %402 = vmatpush1.xpose.msra.mxu0 0.0
        %403 = vmatprep.subr.mxu0 0.0
        %404 = vmatpush1.xpose.msra.mxu0 0.0
        %405 = vmatprep.subr.mxu0 0.0
        %406 = vmatpush1.xpose.msra.mxu0 0.0
        %407 = vmatprep.subr.mxu0 0.0
        %408 = vmatpush1.xpose.msra.mxu0 %v381
        %409 = vmatprep.subr.mxu0 0.0
        %410 = vmatpush1.xpose.msra.mxu0 %v378
        %411 = vmatprep.subr.mxu0 0.0
        %412 = vmatpush1.xpose.msra.mxu0 %v375
        %413 = vmatprep.subr.mxu0 0.0
        %414 = vmatpush1.xpose.msra.mxu0 %v372
        %415 = vmatprep.subr.mxu0 0.0
        %416 = vmatpush2.xpose.msra.mxu0 0.0
        %417 = vmatprep.subr.mxu0 0.0
        %418 = vmatpush2.xpose.msra.mxu0 0.0
        %419 = vmatprep.subr.mxu0 0.0
        %420 = vmatpush2.xpose.msra.mxu0 0.0
        %421 = vmatprep.subr.mxu0 0.0
        %422 = vmatpush2.xpose.msra.mxu0 0.0
        %423 = vmatprep.subr.mxu0 0.0
        %424 = vmatpush2.xpose.msra.mxu0 0.0
        %425 = vmatprep.subr.mxu0 0.0
        %426 = vmatpush2.xpose.msra.mxu0 0.0
        %427 = vmatprep.subr.mxu0 0.0
        %428 = vmatpush2.xpose.msra.mxu0 0.0
        %429 = vmatprep.subr.mxu0 0.0
        %430 = vmatpush2.xpose.msra.mxu0 0.0
        %431 = vmatprep.subr.mxu0 0.0
        %432 = vmatpush2.xpose.msra.mxu0 0.0
        %433 = vmatprep.subr.mxu0 0.0
        %434 = vmatpush2.xpose.msra.mxu0 0.0
        %435 = vmatprep.subr.mxu0 0.0
        %436 = vmatpush2.xpose.msra.mxu0 0.0
        %437 = vmatprep.subr.mxu0 0.0
        %438 = vmatpush2.xpose.msra.mxu0 0.0
        %439 = vmatprep.subr.mxu0 0.0
        %440 = vmatpush2.xpose.msra.mxu0 0.0
        %441 = vmatprep.subr.mxu0 0.0
        %442 = vmatpush2.xpose.msra.mxu0 0.0
        %443 = vmatprep.subr.mxu0 0.0
        %444 = vmatpush2.xpose.msra.mxu0 0.0
        %445 = vmatprep.subr.mxu0 0.0
        %446 = vmatpush2.xpose.msra.mxu0 0.0
        %447 = vmatprep.mubr.f32.mxu0 0.0
        %448 = vmatmul.mubr.f32.gmra.mxu0 %v369
        %v449 = vpop.f32.mrf.mxu0
        %v450 = vadd.f32 %v367, %v449
        %v451 = vpop.f32.mrf.mxu0
        %452 = vdwg.mxu0
        %v453 = vlaneseq
        %v454 = vshrl.u32 %v453, 7
        %v455 = vsub.s32 7, %v454
        %v456 = vrot.slane %v337, %v455
        %v458 = vsel %vm339, %v296, 0
        %v461 = vsel %vm339, %v297, 0
        %v464 = vsel %vm339, %v298, 0
        %v467 = vsel %vm339, %v299, 0
        %469 = vmatprep.subr.mxu0 0.0
        %470 = vmatpush1.xpose.msra.mxu0 0.0
        %471 = vmatprep.subr.mxu0 0.0
        %472 = vmatpush1.xpose.msra.mxu0 0.0
        %473 = vmatprep.subr.mxu0 0.0
        %474 = vmatpush1.xpose.msra.mxu0 0.0
        %475 = vmatprep.subr.mxu0 0.0
        %476 = vmatpush1.xpose.msra.mxu0 0.0
        %477 = vmatprep.subr.mxu0 0.0
        %478 = vmatpush1.xpose.msra.mxu0 0.0
        %479 = vmatprep.subr.mxu0 0.0
        %480 = vmatpush1.xpose.msra.mxu0 0.0
        %481 = vmatprep.subr.mxu0 0.0
        %482 = vmatpush1.xpose.msra.mxu0 0.0
        %483 = vmatprep.subr.mxu0 0.0
        %484 = vmatpush1.xpose.msra.mxu0 0.0
        %485 = vmatprep.subr.mxu0 0.0
        %486 = vmatpush1.xpose.msra.mxu0 0.0
        %487 = vmatprep.subr.mxu0 0.0
        %488 = vmatpush1.xpose.msra.mxu0 0.0
        %489 = vmatprep.subr.mxu0 0.0
        %490 = vmatpush1.xpose.msra.mxu0 0.0
        %491 = vmatprep.subr.mxu0 0.0
        %492 = vmatpush1.xpose.msra.mxu0 0.0
        %493 = vmatprep.subr.mxu0 0.0
        %494 = vmatpush1.xpose.msra.mxu0 %v467
        %495 = vmatprep.subr.mxu0 0.0
        %496 = vmatpush1.xpose.msra.mxu0 %v464
        %497 = vmatprep.subr.mxu0 0.0
        %498 = vmatpush1.xpose.msra.mxu0 %v461
        %499 = vmatprep.subr.mxu0 0.0
        %500 = vmatpush1.xpose.msra.mxu0 %v458
        %501 = vmatprep.subr.mxu0 0.0
        %502 = vmatpush2.xpose.msra.mxu0 0.0
        %503 = vmatprep.subr.mxu0 0.0
        %504 = vmatpush2.xpose.msra.mxu0 0.0
        %505 = vmatprep.subr.mxu0 0.0
        %506 = vmatpush2.xpose.msra.mxu0 0.0
        %507 = vmatprep.subr.mxu0 0.0
        %508 = vmatpush2.xpose.msra.mxu0 0.0
        %509 = vmatprep.subr.mxu0 0.0
        %510 = vmatpush2.xpose.msra.mxu0 0.0
        %511 = vmatprep.subr.mxu0 0.0
        %512 = vmatpush2.xpose.msra.mxu0 0.0
        %513 = vmatprep.subr.mxu0 0.0
        %514 = vmatpush2.xpose.msra.mxu0 0.0
        %515 = vmatprep.subr.mxu0 0.0
        %516 = vmatpush2.xpose.msra.mxu0 0.0
        %517 = vmatprep.subr.mxu0 0.0
        %518 = vmatpush2.xpose.msra.mxu0 0.0
        %519 = vmatprep.subr.mxu0 0.0
        %520 = vmatpush2.xpose.msra.mxu0 0.0
        %521 = vmatprep.subr.mxu0 0.0
        %522 = vmatpush2.xpose.msra.mxu0 0.0
        %523 = vmatprep.subr.mxu0 0.0
        %524 = vmatpush2.xpose.msra.mxu0 0.0
        %525 = vmatprep.subr.mxu0 0.0
        %526 = vmatpush2.xpose.msra.mxu0 0.0
        %527 = vmatprep.subr.mxu0 0.0
        %528 = vmatpush2.xpose.msra.mxu0 0.0
        %529 = vmatprep.subr.mxu0 0.0
        %530 = vmatpush2.xpose.msra.mxu0 0.0
        %531 = vmatprep.subr.mxu0 0.0
        %532 = vmatpush2.xpose.msra.mxu0 0.0
        %533 = vmatprep.mubr.f32.mxu0 0.0
        %534 = vmatmul.mubr.f32.gmra.mxu0 %v369
        %v535 = vpop.f32.mrf.mxu0
        %v536 = vadd.f32 %v456, %v535
        %v537 = vpop.f32.mrf.mxu0
        %538 = vdwg.mxu0
        %v539 = vlaneseq
        %v540 = vshrl.u32 %v539, 7
        %v541 = vsub.s32 0, %v540
        %v542 = vrot.slane %v338, %v541
        %v544 = vsel %vm339, %v300, 0
        %v547 = vsel %vm339, %v301, 0
        %v550 = vsel %vm339, %v302, 0
        %v553 = vsel %vm339, %v303, 0
        %555 = vmatprep.subr.mxu0 0.0
        %556 = vmatpush1.xpose.msra.mxu0 0.0
        %557 = vmatprep.subr.mxu0 0.0
        %558 = vmatpush1.xpose.msra.mxu0 0.0
        %559 = vmatprep.subr.mxu0 0.0
        %560 = vmatpush1.xpose.msra.mxu0 0.0
        %561 = vmatprep.subr.mxu0 0.0
        %562 = vmatpush1.xpose.msra.mxu0 0.0
        %563 = vmatprep.subr.mxu0 0.0
        %564 = vmatpush1.xpose.msra.mxu0 0.0
        %565 = vmatprep.subr.mxu0 0.0
        %566 = vmatpush1.xpose.msra.mxu0 0.0
        %567 = vmatprep.subr.mxu0 0.0
        %568 = vmatpush1.xpose.msra.mxu0 0.0
        %569 = vmatprep.subr.mxu0 0.0
        %570 = vmatpush1.xpose.msra.mxu0 0.0
        %571 = vmatprep.subr.mxu0 0.0
        %572 = vmatpush1.xpose.msra.mxu0 0.0
        %573 = vmatprep.subr.mxu0 0.0
        %574 = vmatpush1.xpose.msra.mxu0 0.0
        %575 = vmatprep.subr.mxu0 0.0
        %576 = vmatpush1.xpose.msra.mxu0 0.0
        %577 = vmatprep.subr.mxu0 0.0
        %578 = vmatpush1.xpose.msra.mxu0 0.0
        %579 = vmatprep.subr.mxu0 0.0
        %580 = vmatpush1.xpose.msra.mxu0 %v553
        %581 = vmatprep.subr.mxu0 0.0
        %582 = vmatpush1.xpose.msra.mxu0 %v550
        %583 = vmatprep.subr.mxu0 0.0
        %584 = vmatpush1.xpose.msra.mxu0 %v547
        %585 = vmatprep.subr.mxu0 0.0
        %586 = vmatpush1.xpose.msra.mxu0 %v544
        %587 = vmatprep.subr.mxu0 0.0
        %588 = vmatpush2.xpose.msra.mxu0 0.0
        %589 = vmatprep.subr.mxu0 0.0
        %590 = vmatpush2.xpose.msra.mxu0 0.0
        %591 = vmatprep.subr.mxu0 0.0
        %592 = vmatpush2.xpose.msra.mxu0 0.0
        %593 = vmatprep.subr.mxu0 0.0
        %594 = vmatpush2.xpose.msra.mxu0 0.0
        %595 = vmatprep.subr.mxu0 0.0
        %596 = vmatpush2.xpose.msra.mxu0 0.0
        %597 = vmatprep.subr.mxu0 0.0
        %598 = vmatpush2.xpose.msra.mxu0 0.0
        %599 = vmatprep.subr.mxu0 0.0
        %600 = vmatpush2.xpose.msra.mxu0 0.0
        %601 = vmatprep.subr.mxu0 0.0
        %602 = vmatpush2.xpose.msra.mxu0 0.0
        %603 = vmatprep.subr.mxu0 0.0
        %604 = vmatpush2.xpose.msra.mxu0 0.0
        %605 = vmatprep.subr.mxu0 0.0
        %606 = vmatpush2.xpose.msra.mxu0 0.0
        %607 = vmatprep.subr.mxu0 0.0
        %608 = vmatpush2.xpose.msra.mxu0 0.0
        %609 = vmatprep.subr.mxu0 0.0
        %610 = vmatpush2.xpose.msra.mxu0 0.0
        %611 = vmatprep.subr.mxu0 0.0
        %612 = vmatpush2.xpose.msra.mxu0 0.0
        %613 = vmatprep.subr.mxu0 0.0
        %614 = vmatpush2.xpose.msra.mxu0 0.0
        %615 = vmatprep.subr.mxu0 0.0
        %616 = vmatpush2.xpose.msra.mxu0 0.0
        %617 = vmatprep.subr.mxu0 0.0
        %618 = vmatpush2.xpose.msra.mxu0 0.0
        %619 = vmatprep.mubr.f32.mxu0 0.0
        %620 = vmatmul.mubr.f32.gmra.mxu0 %v369
        %v621 = vpop.f32.mrf.mxu0
        %v622 = vadd.f32 %v542, %v621
        %v623 = vpop.f32.mrf.mxu0
        %624 = vdwg.mxu0
        %v625 = vmul.f32 %v450, 0.35355338
        %vm626 = vcmask 64512
        %v628 = vsel %vm626, %v625, 0
        %v631 = vsel %vm626, %v536, 0
        %633 = vmatprep.subr.mxu0 0.0
        %634 = vmatpush1.xpose.msra.mxu0 0.0
        %635 = vmatprep.subr.mxu0 0.0
        %636 = vmatpush1.xpose.msra.mxu0 0.0
        %637 = vmatprep.subr.mxu0 0.0
        %638 = vmatpush1.xpose.msra.mxu0 0.0
        %639 = vmatprep.subr.mxu0 0.0
        %640 = vmatpush1.xpose.msra.mxu0 0.0
        %641 = vmatprep.subr.mxu0 0.0
        %642 = vmatpush1.xpose.msra.mxu0 0.0
        %643 = vmatprep.subr.mxu0 0.0
        %644 = vmatpush1.xpose.msra.mxu0 0.0
        %645 = vmatprep.subr.mxu0 0.0
        %646 = vmatpush1.xpose.msra.mxu0 0.0
        %647 = vmatprep.subr.mxu0 0.0
        %648 = vmatpush1.xpose.msra.mxu0 0.0
        %649 = vmatprep.subr.mxu0 0.0
        %650 = vmatpush1.xpose.msra.mxu0 0.0
        %651 = vmatprep.subr.mxu0 0.0
        %652 = vmatpush1.xpose.msra.mxu0 0.0
        %653 = vmatprep.subr.mxu0 0.0
        %654 = vmatpush1.xpose.msra.mxu0 0.0
        %655 = vmatprep.subr.mxu0 0.0
        %656 = vmatpush1.xpose.msra.mxu0 0.0
        %657 = vmatprep.subr.mxu0 0.0
        %658 = vmatpush1.xpose.msra.mxu0 0.0
        %659 = vmatprep.subr.mxu0 0.0
        %660 = vmatpush1.xpose.msra.mxu0 0.0
        %661 = vmatprep.subr.mxu0 0.0
        %662 = vmatpush1.xpose.msra.mxu0 0.0
        %663 = vmatprep.subr.mxu0 0.0
        %664 = vmatpush1.xpose.msra.mxu0 %v631
        %665 = vmatprep.subr.mxu0 0.0
        %666 = vmatpush2.xpose.msra.mxu0 0.0
        %667 = vmatprep.subr.mxu0 0.0
        %668 = vmatpush2.xpose.msra.mxu0 0.0
        %669 = vmatprep.subr.mxu0 0.0
        %670 = vmatpush2.xpose.msra.mxu0 0.0
        %671 = vmatprep.subr.mxu0 0.0
        %672 = vmatpush2.xpose.msra.mxu0 0.0
        %673 = vmatprep.subr.mxu0 0.0
        %674 = vmatpush2.xpose.msra.mxu0 0.0
        %675 = vmatprep.subr.mxu0 0.0
        %676 = vmatpush2.xpose.msra.mxu0 0.0
        %677 = vmatprep.subr.mxu0 0.0
        %678 = vmatpush2.xpose.msra.mxu0 0.0
        %679 = vmatprep.subr.mxu0 0.0
        %680 = vmatpush2.xpose.msra.mxu0 0.0
        %681 = vmatprep.subr.mxu0 0.0
        %682 = vmatpush2.xpose.msra.mxu0 0.0
        %683 = vmatprep.subr.mxu0 0.0
        %684 = vmatpush2.xpose.msra.mxu0 0.0
        %685 = vmatprep.subr.mxu0 0.0
        %686 = vmatpush2.xpose.msra.mxu0 0.0
        %687 = vmatprep.subr.mxu0 0.0
        %688 = vmatpush2.xpose.msra.mxu0 0.0
        %689 = vmatprep.subr.mxu0 0.0
        %690 = vmatpush2.xpose.msra.mxu0 0.0
        %691 = vmatprep.subr.mxu0 0.0
        %692 = vmatpush2.xpose.msra.mxu0 0.0
        %693 = vmatprep.subr.mxu0 0.0
        %694 = vmatpush2.xpose.msra.mxu0 0.0
        %695 = vmatprep.subr.mxu0 0.0
        %696 = vmatpush2.xpose.msra.mxu0 0.0
        %697 = vmatprep.mubr.f32.mxu0 0.0
        %698 = vmatmul.mubr.f32.gmra.mxu0 %v628
        %v699 = vpop.f32.mrf.mxu0
        %v700 = vadd.f32 0.0, %v699
        %v701 = vpop.f32.mrf.mxu0
        %702 = vdwg.mxu0
        %v703 = vsel %vm626, %v700, -inf
        %704 = vmax.xlane.f32.xlu0 %v703
        %v705 = vpop.xlane.xlu0 %704
        %v706 = vsub.f32 %v700, %v705
        %v707 = vmul.f32 %v706, 1.442695
        %v708 = vpow.pop %v707
        %v709 = vsel %vm626, %v708, 0.0
        %710 = vadd.xlane.f32.xlu0 %v709
        %v711 = vpop.xlane.xlu0 %710
        %v712 = vrcp.pop %v711
        %v713 = vmul.f32 %v708, %v712
        %v715 = vsel %vm626, %v713, 0
        %717 = vmatprep.subr.mxu0 0.0
        %718 = vmatpush1.msra.mxu0 0.0
        %719 = vmatprep.subr.mxu0 0.0
        %720 = vmatpush1.msra.mxu0 0.0
        %721 = vmatprep.subr.mxu0 0.0
        %722 = vmatpush1.msra.mxu0 0.0
        %723 = vmatprep.subr.mxu0 0.0
        %724 = vmatpush1.msra.mxu0 0.0
        %725 = vmatprep.subr.mxu0 0.0
        %726 = vmatpush1.msra.mxu0 0.0
        %727 = vmatprep.subr.mxu0 0.0
        %728 = vmatpush1.msra.mxu0 0.0
        %729 = vmatprep.subr.mxu0 0.0
        %730 = vmatpush1.msra.mxu0 0.0
        %731 = vmatprep.subr.mxu0 0.0
        %732 = vmatpush1.msra.mxu0 0.0
        %733 = vmatprep.subr.mxu0 0.0
        %734 = vmatpush1.msra.mxu0 0.0
        %735 = vmatprep.subr.mxu0 0.0
        %736 = vmatpush1.msra.mxu0 0.0
        %737 = vmatprep.subr.mxu0 0.0
        %738 = vmatpush1.msra.mxu0 0.0
        %739 = vmatprep.subr.mxu0 0.0
        %740 = vmatpush1.msra.mxu0 0.0
        %741 = vmatprep.subr.mxu0 0.0
        %742 = vmatpush1.msra.mxu0 0.0
        %743 = vmatprep.subr.mxu0 0.0
        %744 = vmatpush1.msra.mxu0 0.0
        %745 = vmatprep.subr.mxu0 0.0
        %746 = vmatpush1.msra.mxu0 0.0
        %747 = vmatprep.subr.mxu0 0.0
        %748 = vmatpush1.msra.mxu0 %v622
        %749 = vmatprep.subr.mxu0 0.0
        %750 = vmatpush2.msra.mxu0 0.0
        %751 = vmatprep.subr.mxu0 0.0
        %752 = vmatpush2.msra.mxu0 0.0
        %753 = vmatprep.subr.mxu0 0.0
        %754 = vmatpush2.msra.mxu0 0.0
        %755 = vmatprep.subr.mxu0 0.0
        %756 = vmatpush2.msra.mxu0 0.0
        %757 = vmatprep.subr.mxu0 0.0
        %758 = vmatpush2.msra.mxu0 0.0
        %759 = vmatprep.subr.mxu0 0.0
        %760 = vmatpush2.msra.mxu0 0.0
        %761 = vmatprep.subr.mxu0 0.0
        %762 = vmatpush2.msra.mxu0 0.0
        %763 = vmatprep.subr.mxu0 0.0
        %764 = vmatpush2.msra.mxu0 0.0
        %765 = vmatprep.subr.mxu0 0.0
        %766 = vmatpush2.msra.mxu0 0.0
        %767 = vmatprep.subr.mxu0 0.0
        %768 = vmatpush2.msra.mxu0 0.0
        %769 = vmatprep.subr.mxu0 0.0
        %770 = vmatpush2.msra.mxu0 0.0
        %771 = vmatprep.subr.mxu0 0.0
        %772 = vmatpush2.msra.mxu0 0.0
        %773 = vmatprep.subr.mxu0 0.0
        %774 = vmatpush2.msra.mxu0 0.0
        %775 = vmatprep.subr.mxu0 0.0
        %776 = vmatpush2.msra.mxu0 0.0
        %777 = vmatprep.subr.mxu0 0.0
        %778 = vmatpush2.msra.mxu0 0.0
        %779 = vmatprep.subr.mxu0 0.0
        %780 = vmatpush2.msra.mxu0 0.0
        %781 = vmatprep.mubr.f32.mxu0 0.0
        %782 = vmatmul.mubr.f32.gmra.mxu0 %v715
        %v783 = vpop.f32.mrf.mxu0
        %v784 = vadd.f32 0.0, %v783
        %v785 = vpop.f32.mrf.mxu0
        %786 = vdwg.mxu0
        %787 = vrot.lane.b32.xlu0 %v625, 120
        %v788 = vpop.permute.xlu0 %787
        %789 = vrot.lane.b32.xlu0 %v536, 120
        %v790 = vpop.permute.xlu0 %789
        %v791 = vsel %vm626, %v788, 0
        %v793 = vsel %vm626, %v790, 0
        %795 = vmatprep.subr.mxu0 0.0
        %796 = vmatpush1.xpose.msra.mxu0 0.0
        %797 = vmatprep.subr.mxu0 0.0
        %798 = vmatpush1.xpose.msra.mxu0 0.0
        %799 = vmatprep.subr.mxu0 0.0
        %800 = vmatpush1.xpose.msra.mxu0 0.0
        %801 = vmatprep.subr.mxu0 0.0
        %802 = vmatpush1.xpose.msra.mxu0 0.0
        %803 = vmatprep.subr.mxu0 0.0
        %804 = vmatpush1.xpose.msra.mxu0 0.0
        %805 = vmatprep.subr.mxu0 0.0
        %806 = vmatpush1.xpose.msra.mxu0 0.0
        %807 = vmatprep.subr.mxu0 0.0
        %808 = vmatpush1.xpose.msra.mxu0 0.0
        %809 = vmatprep.subr.mxu0 0.0
        %810 = vmatpush1.xpose.msra.mxu0 0.0
        %811 = vmatprep.subr.mxu0 0.0
        %812 = vmatpush1.xpose.msra.mxu0 0.0
        %813 = vmatprep.subr.mxu0 0.0
        %814 = vmatpush1.xpose.msra.mxu0 0.0
        %815 = vmatprep.subr.mxu0 0.0
        %816 = vmatpush1.xpose.msra.mxu0 0.0
        %817 = vmatprep.subr.mxu0 0.0
        %818 = vmatpush1.xpose.msra.mxu0 0.0
        %819 = vmatprep.subr.mxu0 0.0
        %820 = vmatpush1.xpose.msra.mxu0 0.0
        %821 = vmatprep.subr.mxu0 0.0
        %822 = vmatpush1.xpose.msra.mxu0 0.0
        %823 = vmatprep.subr.mxu0 0.0
        %824 = vmatpush1.xpose.msra.mxu0 0.0
        %825 = vmatprep.subr.mxu0 0.0
        %826 = vmatpush1.xpose.msra.mxu0 %v793
        %827 = vmatprep.subr.mxu0 0.0
        %828 = vmatpush2.xpose.msra.mxu0 0.0
        %829 = vmatprep.subr.mxu0 0.0
        %830 = vmatpush2.xpose.msra.mxu0 0.0
        %831 = vmatprep.subr.mxu0 0.0
        %832 = vmatpush2.xpose.msra.mxu0 0.0
        %833 = vmatprep.subr.mxu0 0.0
        %834 = vmatpush2.xpose.msra.mxu0 0.0
        %835 = vmatprep.subr.mxu0 0.0
        %836 = vmatpush2.xpose.msra.mxu0 0.0
        %837 = vmatprep.subr.mxu0 0.0
        %838 = vmatpush2.xpose.msra.mxu0 0.0
        %839 = vmatprep.subr.mxu0 0.0
        %840 = vmatpush2.xpose.msra.mxu0 0.0
        %841 = vmatprep.subr.mxu0 0.0
        %842 = vmatpush2.xpose.msra.mxu0 0.0
        %843 = vmatprep.subr.mxu0 0.0
        %844 = vmatpush2.xpose.msra.mxu0 0.0
        %845 = vmatprep.subr.mxu0 0.0
        %846 = vmatpush2.xpose.msra.mxu0 0.0
        %847 = vmatprep.subr.mxu0 0.0
        %848 = vmatpush2.xpose.msra.mxu0 0.0
        %849 = vmatprep.subr.mxu0 0.0
        %850 = vmatpush2.xpose.msra.mxu0 0.0
        %851 = vmatprep.subr.mxu0 0.0
        %852 = vmatpush2.xpose.msra.mxu0 0.0
        %853 = vmatprep.subr.mxu0 0.0
        %854 = vmatpush2.xpose.msra.mxu0 0.0
        %855 = vmatprep.subr.mxu0 0.0
        %856 = vmatpush2.xpose.msra.mxu0 0.0
        %857 = vmatprep.subr.mxu0 0.0
        %858 = vmatpush2.xpose.msra.mxu0 0.0
        %859 = vmatprep.mubr.f32.mxu0 0.0
        %860 = vmatmul.mubr.f32.gmra.mxu0 %v791
        %v861 = vpop.f32.mrf.mxu0
        %v862 = vadd.f32 0.0, %v861
        %v863 = vpop.f32.mrf.mxu0
        %864 = vdwg.mxu0
        %v865 = vsel %vm626, %v862, -inf
        %866 = vmax.xlane.f32.xlu0 %v865
        %v867 = vpop.xlane.xlu0 %866
        %v868 = vsub.f32 %v862, %v867
        %v869 = vmul.f32 %v868, 1.442695
        %v870 = vpow.pop %v869
        %v871 = vsel %vm626, %v870, 0.0
        %872 = vadd.xlane.f32.xlu0 %v871
        %v873 = vpop.xlane.xlu0 %872
        %v874 = vrcp.pop %v873
        %v875 = vmul.f32 %v870, %v874
        %877 = vrot.lane.b32.xlu0 %v622, 120
        %v878 = vpop.permute.xlu0 %877
        %v881 = vsel %vm626, %v875, 0
        %883 = vmatprep.subr.mxu0 0.0
        %884 = vmatpush1.msra.mxu0 0.0
        %885 = vmatprep.subr.mxu0 0.0
        %886 = vmatpush1.msra.mxu0 0.0
        %887 = vmatprep.subr.mxu0 0.0
        %888 = vmatpush1.msra.mxu0 0.0
        %889 = vmatprep.subr.mxu0 0.0
        %890 = vmatpush1.msra.mxu0 0.0
        %891 = vmatprep.subr.mxu0 0.0
        %892 = vmatpush1.msra.mxu0 0.0
        %893 = vmatprep.subr.mxu0 0.0
        %894 = vmatpush1.msra.mxu0 0.0
        %895 = vmatprep.subr.mxu0 0.0
        %896 = vmatpush1.msra.mxu0 0.0
        %897 = vmatprep.subr.mxu0 0.0
        %898 = vmatpush1.msra.mxu0 0.0
        %899 = vmatprep.subr.mxu0 0.0
        %900 = vmatpush1.msra.mxu0 0.0
        %901 = vmatprep.subr.mxu0 0.0
        %902 = vmatpush1.msra.mxu0 0.0
        %903 = vmatprep.subr.mxu0 0.0
        %904 = vmatpush1.msra.mxu0 0.0
        %905 = vmatprep.subr.mxu0 0.0
        %906 = vmatpush1.msra.mxu0 0.0
        %907 = vmatprep.subr.mxu0 0.0
        %908 = vmatpush1.msra.mxu0 0.0
        %909 = vmatprep.subr.mxu0 0.0
        %910 = vmatpush1.msra.mxu0 0.0
        %911 = vmatprep.subr.mxu0 0.0
        %912 = vmatpush1.msra.mxu0 0.0
        %913 = vmatprep.subr.mxu0 0.0
        %914 = vmatpush1.msra.mxu0 %v878
        %915 = vmatprep.subr.mxu0 0.0
        %916 = vmatpush2.msra.mxu0 0.0
        %917 = vmatprep.subr.mxu0 0.0
        %918 = vmatpush2.msra.mxu0 0.0
        %919 = vmatprep.subr.mxu0 0.0
        %920 = vmatpush2.msra.mxu0 0.0
        %921 = vmatprep.subr.mxu0 0.0
        %922 = vmatpush2.msra.mxu0 0.0
        %923 = vmatprep.subr.mxu0 0.0
        %924 = vmatpush2.msra.mxu0 0.0
        %925 = vmatprep.subr.mxu0 0.0
        %926 = vmatpush2.msra.mxu0 0.0
        %927 = vmatprep.subr.mxu0 0.0
        %928 = vmatpush2.msra.mxu0 0.0
        %929 = vmatprep.subr.mxu0 0.0
        %930 = vmatpush2.msra.mxu0 0.0
        %931 = vmatprep.subr.mxu0 0.0
        %932 = vmatpush2.msra.mxu0 0.0
        %933 = vmatprep.subr.mxu0 0.0
        %934 = vmatpush2.msra.mxu0 0.0
        %935 = vmatprep.subr.mxu0 0.0
        %936 = vmatpush2.msra.mxu0 0.0
        %937 = vmatprep.subr.mxu0 0.0
        %938 = vmatpush2.msra.mxu0 0.0
        %939 = vmatprep.subr.mxu0 0.0
        %940 = vmatpush2.msra.mxu0 0.0
        %941 = vmatprep.subr.mxu0 0.0
        %942 = vmatpush2.msra.mxu0 0.0
        %943 = vmatprep.subr.mxu0 0.0
        %944 = vmatpush2.msra.mxu0 0.0
        %945 = vmatprep.subr.mxu0 0.0
        %946 = vmatpush2.msra.mxu0 0.0
        %947 = vmatprep.mubr.f32.mxu0 0.0
        %948 = vmatmul.mubr.f32.gmra.mxu0 %v881
        %v949 = vpop.f32.mrf.mxu0
        %v950 = vadd.f32 0.0, %v949
        %v951 = vpop.f32.mrf.mxu0
        %952 = vdwg.mxu0
        %953 = vrot.lane.b32.xlu0 %v625, 112
        %v954 = vpop.permute.xlu0 %953
        %955 = vrot.lane.b32.xlu0 %v536, 112
        %v956 = vpop.permute.xlu0 %955
        %v957 = vsel %vm626, %v954, 0
        %v959 = vsel %vm626, %v956, 0
        %961 = vmatprep.subr.mxu0 0.0
        %962 = vmatpush1.xpose.msra.mxu0 0.0
        %963 = vmatprep.subr.mxu0 0.0
        %964 = vmatpush1.xpose.msra.mxu0 0.0
        %965 = vmatprep.subr.mxu0 0.0
        %966 = vmatpush1.xpose.msra.mxu0 0.0
        %967 = vmatprep.subr.mxu0 0.0
        %968 = vmatpush1.xpose.msra.mxu0 0.0
        %969 = vmatprep.subr.mxu0 0.0
        %970 = vmatpush1.xpose.msra.mxu0 0.0
        %971 = vmatprep.subr.mxu0 0.0
        %972 = vmatpush1.xpose.msra.mxu0 0.0
        %973 = vmatprep.subr.mxu0 0.0
        %974 = vmatpush1.xpose.msra.mxu0 0.0
        %975 = vmatprep.subr.mxu0 0.0
        %976 = vmatpush1.xpose.msra.mxu0 0.0
        %977 = vmatprep.subr.mxu0 0.0
        %978 = vmatpush1.xpose.msra.mxu0 0.0
        %979 = vmatprep.subr.mxu0 0.0
        %980 = vmatpush1.xpose.msra.mxu0 0.0
        %981 = vmatprep.subr.mxu0 0.0
        %982 = vmatpush1.xpose.msra.mxu0 0.0
        %983 = vmatprep.subr.mxu0 0.0
        %984 = vmatpush1.xpose.msra.mxu0 0.0
        %985 = vmatprep.subr.mxu0 0.0
        %986 = vmatpush1.xpose.msra.mxu0 0.0
        %987 = vmatprep.subr.mxu0 0.0
        %988 = vmatpush1.xpose.msra.mxu0 0.0
        %989 = vmatprep.subr.mxu0 0.0
        %990 = vmatpush1.xpose.msra.mxu0 0.0
        %991 = vmatprep.subr.mxu0 0.0
        %992 = vmatpush1.xpose.msra.mxu0 %v959
        %993 = vmatprep.subr.mxu0 0.0
        %994 = vmatpush2.xpose.msra.mxu0 0.0
        %995 = vmatprep.subr.mxu0 0.0
        %996 = vmatpush2.xpose.msra.mxu0 0.0
        %997 = vmatprep.subr.mxu0 0.0
        %998 = vmatpush2.xpose.msra.mxu0 0.0
        %999 = vmatprep.subr.mxu0 0.0
        %1000 = vmatpush2.xpose.msra.mxu0 0.0
        %1001 = vmatprep.subr.mxu0 0.0
        %1002 = vmatpush2.xpose.msra.mxu0 0.0
        %1003 = vmatprep.subr.mxu0 0.0
        %1004 = vmatpush2.xpose.msra.mxu0 0.0
        %1005 = vmatprep.subr.mxu0 0.0
        %1006 = vmatpush2.xpose.msra.mxu0 0.0
        %1007 = vmatprep.subr.mxu0 0.0
        %1008 = vmatpush2.xpose.msra.mxu0 0.0
        %1009 = vmatprep.subr.mxu0 0.0
        %1010 = vmatpush2.xpose.msra.mxu0 0.0
        %1011 = vmatprep.subr.mxu0 0.0
        %1012 = vmatpush2.xpose.msra.mxu0 0.0
        %1013 = vmatprep.subr.mxu0 0.0
        %1014 = vmatpush2.xpose.msra.mxu0 0.0
        %1015 = vmatprep.subr.mxu0 0.0
        %1016 = vmatpush2.xpose.msra.mxu0 0.0
        %1017 = vmatprep.subr.mxu0 0.0
        %1018 = vmatpush2.xpose.msra.mxu0 0.0
        %1019 = vmatprep.subr.mxu0 0.0
        %1020 = vmatpush2.xpose.msra.mxu0 0.0
        %1021 = vmatprep.subr.mxu0 0.0
        %1022 = vmatpush2.xpose.msra.mxu0 0.0
        %1023 = vmatprep.subr.mxu0 0.0
        %1024 = vmatpush2.xpose.msra.mxu0 0.0
        %1025 = vmatprep.mubr.f32.mxu0 0.0
        %1026 = vmatmul.mubr.f32.gmra.mxu0 %v957
        %v1027 = vpop.f32.mrf.mxu0
        %v1028 = vadd.f32 0.0, %v1027
        %v1029 = vpop.f32.mrf.mxu0
        %1030 = vdwg.mxu0
        %v1031 = vsel %vm626, %v1028, -inf
        %1032 = vmax.xlane.f32.xlu0 %v1031
        %v1033 = vpop.xlane.xlu0 %1032
        %v1034 = vsub.f32 %v1028, %v1033
        %v1035 = vmul.f32 %v1034, 1.442695
        %v1036 = vpow.pop %v1035
        %v1037 = vsel %vm626, %v1036, 0.0
        %1038 = vadd.xlane.f32.xlu0 %v1037
        %v1039 = vpop.xlane.xlu0 %1038
        %v1040 = vrcp.pop %v1039
        %v1041 = vmul.f32 %v1036, %v1040
        %1042 = vrot.lane.b32.xlu0 %v622, 112
        %v1043 = vpop.permute.xlu0 %1042
        %v1046 = vsel %vm626, %v1041, 0
        %1048 = vmatprep.subr.mxu0 0.0
        %1049 = vmatpush1.msra.mxu0 0.0
        %1050 = vmatprep.subr.mxu0 0.0
        %1051 = vmatpush1.msra.mxu0 0.0
        %1052 = vmatprep.subr.mxu0 0.0
        %1053 = vmatpush1.msra.mxu0 0.0
        %1054 = vmatprep.subr.mxu0 0.0
        %1055 = vmatpush1.msra.mxu0 0.0
        %1056 = vmatprep.subr.mxu0 0.0
        %1057 = vmatpush1.msra.mxu0 0.0
        %1058 = vmatprep.subr.mxu0 0.0
        %1059 = vmatpush1.msra.mxu0 0.0
        %1060 = vmatprep.subr.mxu0 0.0
        %1061 = vmatpush1.msra.mxu0 0.0
        %1062 = vmatprep.subr.mxu0 0.0
        %1063 = vmatpush1.msra.mxu0 0.0
        %1064 = vmatprep.subr.mxu0 0.0
        %1065 = vmatpush1.msra.mxu0 0.0
        %1066 = vmatprep.subr.mxu0 0.0
        %1067 = vmatpush1.msra.mxu0 0.0
        %1068 = vmatprep.subr.mxu0 0.0
        %1069 = vmatpush1.msra.mxu0 0.0
        %1070 = vmatprep.subr.mxu0 0.0
        %1071 = vmatpush1.msra.mxu0 0.0
        %1072 = vmatprep.subr.mxu0 0.0
        %1073 = vmatpush1.msra.mxu0 0.0
        %1074 = vmatprep.subr.mxu0 0.0
        %1075 = vmatpush1.msra.mxu0 0.0
        %1076 = vmatprep.subr.mxu0 0.0
        %1077 = vmatpush1.msra.mxu0 0.0
        %1078 = vmatprep.subr.mxu0 0.0
        %1079 = vmatpush1.msra.mxu0 %v1043
        %1080 = vmatprep.subr.mxu0 0.0
        %1081 = vmatpush2.msra.mxu0 0.0
        %1082 = vmatprep.subr.mxu0 0.0
        %1083 = vmatpush2.msra.mxu0 0.0
        %1084 = vmatprep.subr.mxu0 0.0
        %1085 = vmatpush2.msra.mxu0 0.0
        %1086 = vmatprep.subr.mxu0 0.0
        %1087 = vmatpush2.msra.mxu0 0.0
        %1088 = vmatprep.subr.mxu0 0.0
        %1089 = vmatpush2.msra.mxu0 0.0
        %1090 = vmatprep.subr.mxu0 0.0
        %1091 = vmatpush2.msra.mxu0 0.0
        %1092 = vmatprep.subr.mxu0 0.0
        %1093 = vmatpush2.msra.mxu0 0.0
        %1094 = vmatprep.subr.mxu0 0.0
        %1095 = vmatpush2.msra.mxu0 0.0
        %1096 = vmatprep.subr.mxu0 0.0
        %1097 = vmatpush2.msra.mxu0 0.0
        %1098 = vmatprep.subr.mxu0 0.0
        %1099 = vmatpush2.msra.mxu0 0.0
        %1100 = vmatprep.subr.mxu0 0.0
        %1101 = vmatpush2.msra.mxu0 0.0
        %1102 = vmatprep.subr.mxu0 0.0
        %1103 = vmatpush2.msra.mxu0 0.0
        %1104 = vmatprep.subr.mxu0 0.0
        %1105 = vmatpush2.msra.mxu0 0.0
        %1106 = vmatprep.subr.mxu0 0.0
        %1107 = vmatpush2.msra.mxu0 0.0
        %1108 = vmatprep.subr.mxu0 0.0
        %1109 = vmatpush2.msra.mxu0 0.0
        %1110 = vmatprep.subr.mxu0 0.0
        %1111 = vmatpush2.msra.mxu0 0.0
        %1112 = vmatprep.mubr.f32.mxu0 0.0
        %1113 = vmatmul.mubr.f32.gmra.mxu0 %v1046
        %v1114 = vpop.f32.mrf.mxu0
        %v1115 = vadd.f32 0.0, %v1114
        %v1116 = vpop.f32.mrf.mxu0
        %1117 = vdwg.mxu0
        %1118 = vrot.lane.b32.xlu0 %v625, 104
        %v1119 = vpop.permute.xlu0 %1118
        %1120 = vrot.lane.b32.xlu0 %v536, 104
        %v1121 = vpop.permute.xlu0 %1120
        %v1122 = vsel %vm626, %v1119, 0
        %v1124 = vsel %vm626, %v1121, 0
        %1126 = vmatprep.subr.mxu0 0.0
        %1127 = vmatpush1.xpose.msra.mxu0 0.0
        %1128 = vmatprep.subr.mxu0 0.0
        %1129 = vmatpush1.xpose.msra.mxu0 0.0
        %1130 = vmatprep.subr.mxu0 0.0
        %1131 = vmatpush1.xpose.msra.mxu0 0.0
        %1132 = vmatprep.subr.mxu0 0.0
        %1133 = vmatpush1.xpose.msra.mxu0 0.0
        %1134 = vmatprep.subr.mxu0 0.0
        %1135 = vmatpush1.xpose.msra.mxu0 0.0
        %1136 = vmatprep.subr.mxu0 0.0
        %1137 = vmatpush1.xpose.msra.mxu0 0.0
        %1138 = vmatprep.subr.mxu0 0.0
        %1139 = vmatpush1.xpose.msra.mxu0 0.0
        %1140 = vmatprep.subr.mxu0 0.0
        %1141 = vmatpush1.xpose.msra.mxu0 0.0
        %1142 = vmatprep.subr.mxu0 0.0
        %1143 = vmatpush1.xpose.msra.mxu0 0.0
        %1144 = vmatprep.subr.mxu0 0.0
        %1145 = vmatpush1.xpose.msra.mxu0 0.0
        %1146 = vmatprep.subr.mxu0 0.0
        %1147 = vmatpush1.xpose.msra.mxu0 0.0
        %1148 = vmatprep.subr.mxu0 0.0
        %1149 = vmatpush1.xpose.msra.mxu0 0.0
        %1150 = vmatprep.subr.mxu0 0.0
        %1151 = vmatpush1.xpose.msra.mxu0 0.0
        %1152 = vmatprep.subr.mxu0 0.0
        %1153 = vmatpush1.xpose.msra.mxu0 0.0
        %1154 = vmatprep.subr.mxu0 0.0
        %1155 = vmatpush1.xpose.msra.mxu0 0.0
        %1156 = vmatprep.subr.mxu0 0.0
        %1157 = vmatpush1.xpose.msra.mxu0 %v1124
        %1158 = vmatprep.subr.mxu0 0.0
        %1159 = vmatpush2.xpose.msra.mxu0 0.0
        %1160 = vmatprep.subr.mxu0 0.0
        %1161 = vmatpush2.xpose.msra.mxu0 0.0
        %1162 = vmatprep.subr.mxu0 0.0
        %1163 = vmatpush2.xpose.msra.mxu0 0.0
        %1164 = vmatprep.subr.mxu0 0.0
        %1165 = vmatpush2.xpose.msra.mxu0 0.0
        %1166 = vmatprep.subr.mxu0 0.0
        %1167 = vmatpush2.xpose.msra.mxu0 0.0
        %1168 = vmatprep.subr.mxu0 0.0
        %1169 = vmatpush2.xpose.msra.mxu0 0.0
        %1170 = vmatprep.subr.mxu0 0.0
        %1171 = vmatpush2.xpose.msra.mxu0 0.0
        %1172 = vmatprep.subr.mxu0 0.0
        %1173 = vmatpush2.xpose.msra.mxu0 0.0
        %1174 = vmatprep.subr.mxu0 0.0
        %1175 = vmatpush2.xpose.msra.mxu0 0.0
        %1176 = vmatprep.subr.mxu0 0.0
        %1177 = vmatpush2.xpose.msra.mxu0 0.0
        %1178 = vmatprep.subr.mxu0 0.0
        %1179 = vmatpush2.xpose.msra.mxu0 0.0
        %1180 = vmatprep.subr.mxu0 0.0
        %1181 = vmatpush2.xpose.msra.mxu0 0.0
        %1182 = vmatprep.subr.mxu0 0.0
        %1183 = vmatpush2.xpose.msra.mxu0 0.0
        %1184 = vmatprep.subr.mxu0 0.0
        %1185 = vmatpush2.xpose.msra.mxu0 0.0
        %1186 = vmatprep.subr.mxu0 0.0
        %1187 = vmatpush2.xpose.msra.mxu0 0.0
        %1188 = vmatprep.subr.mxu0 0.0
        %1189 = vmatpush2.xpose.msra.mxu0 0.0
        %1190 = vmatprep.mubr.f32.mxu0 0.0
        %1191 = vmatmul.mubr.f32.gmra.mxu0 %v1122
        %v1192 = vpop.f32.mrf.mxu0
        %v1193 = vadd.f32 0.0, %v1192
        %v1194 = vpop.f32.mrf.mxu0
        %1195 = vdwg.mxu0
        %v1196 = vsel %vm626, %v1193, -inf
        %1197 = vmax.xlane.f32.xlu0 %v1196
        %v1198 = vpop.xlane.xlu0 %1197
        %v1199 = vsub.f32 %v1193, %v1198
        %v1200 = vmul.f32 %v1199, 1.442695
        %v1201 = vpow.pop %v1200
        %v1202 = vsel %vm626, %v1201, 0.0
        %1203 = vadd.xlane.f32.xlu0 %v1202
        %v1204 = vpop.xlane.xlu0 %1203
        %v1205 = vrcp.pop %v1204
        %v1206 = vmul.f32 %v1201, %v1205
        %1207 = vrot.lane.b32.xlu0 %v622, 104
        %v1208 = vpop.permute.xlu0 %1207
        %v1211 = vsel %vm626, %v1206, 0
        %1213 = vmatprep.subr.mxu0 0.0
        %1214 = vmatpush1.msra.mxu0 0.0
        %1215 = vmatprep.subr.mxu0 0.0
        %1216 = vmatpush1.msra.mxu0 0.0
        %1217 = vmatprep.subr.mxu0 0.0
        %1218 = vmatpush1.msra.mxu0 0.0
        %1219 = vmatprep.subr.mxu0 0.0
        %1220 = vmatpush1.msra.mxu0 0.0
        %1221 = vmatprep.subr.mxu0 0.0
        %1222 = vmatpush1.msra.mxu0 0.0
        %1223 = vmatprep.subr.mxu0 0.0
        %1224 = vmatpush1.msra.mxu0 0.0
        %1225 = vmatprep.subr.mxu0 0.0
        %1226 = vmatpush1.msra.mxu0 0.0
        %1227 = vmatprep.subr.mxu0 0.0
        %1228 = vmatpush1.msra.mxu0 0.0
        %1229 = vmatprep.subr.mxu0 0.0
        %1230 = vmatpush1.msra.mxu0 0.0
        %1231 = vmatprep.subr.mxu0 0.0
        %1232 = vmatpush1.msra.mxu0 0.0
        %1233 = vmatprep.subr.mxu0 0.0
        %1234 = vmatpush1.msra.mxu0 0.0
        %1235 = vmatprep.subr.mxu0 0.0
        %1236 = vmatpush1.msra.mxu0 0.0
        %1237 = vmatprep.subr.mxu0 0.0
        %1238 = vmatpush1.msra.mxu0 0.0
        %1239 = vmatprep.subr.mxu0 0.0
        %1240 = vmatpush1.msra.mxu0 0.0
        %1241 = vmatprep.subr.mxu0 0.0
        %1242 = vmatpush1.msra.mxu0 0.0
        %1243 = vmatprep.subr.mxu0 0.0
        %1244 = vmatpush1.msra.mxu0 %v1208
        %1245 = vmatprep.subr.mxu0 0.0
        %1246 = vmatpush2.msra.mxu0 0.0
        %1247 = vmatprep.subr.mxu0 0.0
        %1248 = vmatpush2.msra.mxu0 0.0
        %1249 = vmatprep.subr.mxu0 0.0
        %1250 = vmatpush2.msra.mxu0 0.0
        %1251 = vmatprep.subr.mxu0 0.0
        %1252 = vmatpush2.msra.mxu0 0.0
        %1253 = vmatprep.subr.mxu0 0.0
        %1254 = vmatpush2.msra.mxu0 0.0
        %1255 = vmatprep.subr.mxu0 0.0
        %1256 = vmatpush2.msra.mxu0 0.0
        %1257 = vmatprep.subr.mxu0 0.0
        %1258 = vmatpush2.msra.mxu0 0.0
        %1259 = vmatprep.subr.mxu0 0.0
        %1260 = vmatpush2.msra.mxu0 0.0
        %1261 = vmatprep.subr.mxu0 0.0
        %1262 = vmatpush2.msra.mxu0 0.0
        %1263 = vmatprep.subr.mxu0 0.0
        %1264 = vmatpush2.msra.mxu0 0.0
        %1265 = vmatprep.subr.mxu0 0.0
        %1266 = vmatpush2.msra.mxu0 0.0
        %1267 = vmatprep.subr.mxu0 0.0
        %1268 = vmatpush2.msra.mxu0 0.0
        %1269 = vmatprep.subr.mxu0 0.0
        %1270 = vmatpush2.msra.mxu0 0.0
        %1271 = vmatprep.subr.mxu0 0.0
        %1272 = vmatpush2.msra.mxu0 0.0
        %1273 = vmatprep.subr.mxu0 0.0
        %1274 = vmatpush2.msra.mxu0 0.0
        %1275 = vmatprep.subr.mxu0 0.0
        %1276 = vmatpush2.msra.mxu0 0.0
        %1277 = vmatprep.mubr.f32.mxu0 0.0
        %1278 = vmatmul.mubr.f32.gmra.mxu0 %v1211
        %v1279 = vpop.f32.mrf.mxu0
        %v1280 = vadd.f32 0.0, %v1279
        %v1281 = vpop.f32.mrf.mxu0
        %1282 = vdwg.mxu0
        %1284 = vrot.lane.b32.xlu0 %v950, 8
        %v1285 = vpop.permute.xlu0 %1284
        %1288 = vrot.lane.b32.xlu0 %v1115, 16
        %v1289 = vpop.permute.xlu0 %1288
        %1292 = vrot.lane.b32.xlu0 %v1280, 24
        %v1293 = vpop.permute.xlu0 %1292
        %v1295 = vsel %vm626, %v784, %v1285
        %vm1296 = vcmask 130048
        %v1297 = vsel %vm1296, %v1295, %v1289
        %vm1298 = vcmask 195584
        %v1299 = vsel %vm1298, %v1297, %v1293
        %v1300 = vlaneseq
        %v1301 = vshrl.u32 %v1300, 7
        %v1302 = vsub.s32 1, %v1301
        %v1303 = vrot.slane %v338, %v1302
        %v1305 = vsel %vm339, %v1299, 0
        %v1308 = vsel %vm339, %v304, 0
        %v1311 = vsel %vm339, %v305, 0
        %v1314 = vsel %vm339, %v306, 0
        %v1317 = vsel %vm339, %v307, 0
        %1319 = vmatprep.subr.mxu0 0.0
        %1320 = vmatpush1.xpose.msra.mxu0 0.0
        %1321 = vmatprep.subr.mxu0 0.0
        %1322 = vmatpush1.xpose.msra.mxu0 0.0
        %1323 = vmatprep.subr.mxu0 0.0
        %1324 = vmatpush1.xpose.msra.mxu0 0.0
        %1325 = vmatprep.subr.mxu0 0.0
        %1326 = vmatpush1.xpose.msra.mxu0 0.0
        %1327 = vmatprep.subr.mxu0 0.0
        %1328 = vmatpush1.xpose.msra.mxu0 0.0
        %1329 = vmatprep.subr.mxu0 0.0
        %1330 = vmatpush1.xpose.msra.mxu0 0.0
        %1331 = vmatprep.subr.mxu0 0.0
        %1332 = vmatpush1.xpose.msra.mxu0 0.0
        %1333 = vmatprep.subr.mxu0 0.0
        %1334 = vmatpush1.xpose.msra.mxu0 0.0
        %1335 = vmatprep.subr.mxu0 0.0
        %1336 = vmatpush1.xpose.msra.mxu0 0.0
        %1337 = vmatprep.subr.mxu0 0.0
        %1338 = vmatpush1.xpose.msra.mxu0 0.0
        %1339 = vmatprep.subr.mxu0 0.0
        %1340 = vmatpush1.xpose.msra.mxu0 0.0
        %1341 = vmatprep.subr.mxu0 0.0
        %1342 = vmatpush1.xpose.msra.mxu0 0.0
        %1343 = vmatprep.subr.mxu0 0.0
        %1344 = vmatpush1.xpose.msra.mxu0 %v1317
        %1345 = vmatprep.subr.mxu0 0.0
        %1346 = vmatpush1.xpose.msra.mxu0 %v1314
        %1347 = vmatprep.subr.mxu0 0.0
        %1348 = vmatpush1.xpose.msra.mxu0 %v1311
        %1349 = vmatprep.subr.mxu0 0.0
        %1350 = vmatpush1.xpose.msra.mxu0 %v1308
        %1351 = vmatprep.subr.mxu0 0.0
        %1352 = vmatpush2.xpose.msra.mxu0 0.0
        %1353 = vmatprep.subr.mxu0 0.0
        %1354 = vmatpush2.xpose.msra.mxu0 0.0
        %1355 = vmatprep.subr.mxu0 0.0
        %1356 = vmatpush2.xpose.msra.mxu0 0.0
        %1357 = vmatprep.subr.mxu0 0.0
        %1358 = vmatpush2.xpose.msra.mxu0 0.0
        %1359 = vmatprep.subr.mxu0 0.0
        %1360 = vmatpush2.xpose.msra.mxu0 0.0
        %1361 = vmatprep.subr.mxu0 0.0
        %1362 = vmatpush2.xpose.msra.mxu0 0.0
        %1363 = vmatprep.subr.mxu0 0.0
        %1364 = vmatpush2.xpose.msra.mxu0 0.0
        %1365 = vmatprep.subr.mxu0 0.0
        %1366 = vmatpush2.xpose.msra.mxu0 0.0
        %1367 = vmatprep.subr.mxu0 0.0
        %1368 = vmatpush2.xpose.msra.mxu0 0.0
        %1369 = vmatprep.subr.mxu0 0.0
        %1370 = vmatpush2.xpose.msra.mxu0 0.0
        %1371 = vmatprep.subr.mxu0 0.0
        %1372 = vmatpush2.xpose.msra.mxu0 0.0
        %1373 = vmatprep.subr.mxu0 0.0
        %1374 = vmatpush2.xpose.msra.mxu0 0.0
        %1375 = vmatprep.subr.mxu0 0.0
        %1376 = vmatpush2.xpose.msra.mxu0 0.0
        %1377 = vmatprep.subr.mxu0 0.0
        %1378 = vmatpush2.xpose.msra.mxu0 0.0
        %1379 = vmatprep.subr.mxu0 0.0
        %1380 = vmatpush2.xpose.msra.mxu0 0.0
        %1381 = vmatprep.subr.mxu0 0.0
        %1382 = vmatpush2.xpose.msra.mxu0 0.0
        %1383 = vmatprep.mubr.f32.mxu0 0.0
        %1384 = vmatmul.mubr.f32.gmra.mxu0 %v1305
        %v1385 = vpop.f32.mrf.mxu0
        %v1386 = vadd.f32 %v1303, %v1385
        %v1387 = vpop.f32.mrf.mxu0
        %1388 = vdwg.mxu0
        %v1389 = vadd.f32 %v287, %v1386
        %v1390 = vsel %vm339, %v1389, 0.0
        %1391 = vadd.xlane.f32.xlu0 %v1390
        %v1392 = vpop.xlane.xlu0 %1391
        %v1393 = vmul.f32 %v1392, %v343
        %v1394 = vsub.f32 %v1389, %v1393
        %v1395 = vmul.f32 %v1394, %v1394
        %v1396 = vsel %vm339, %v1395, 0.0
        %1397 = vadd.xlane.f32.xlu0 %v1396
        %v1398 = vpop.xlane.xlu0 %1397
        %v1399 = vmul.f32 %v1398, %v343
        %v1400 = vadd.f32 %v1399, 1e-05
        %v1401 = vrsqrt.pop %v1400
        %v1402 = vmul.f32 %v1394, %v1401
        %v1403 = vlaneseq
        %v1404 = vshrl.u32 %v1403, 7
        %v1405 = vsub.s32 2, %v1404
        %v1406 = vrot.slane %v337, %v1405
        %v1407 = vmul.f32 %v1402, %v1406
        %v1408 = vlaneseq
        %v1409 = vshrl.u32 %v1408, 7
        %v1410 = vsub.s32 3, %v1409
        %v1411 = vrot.slane %v337, %v1410
        %v1412 = vadd.f32 %v1407, %v1411
        %v1413 = vlaneseq
        %v1414 = vshrl.u32 %v1413, 7
        %v1415 = vsub.s32 2, %v1414
        %v1416 = vrot.slane %v338, %v1415
        %v1418 = vsel %vm339, %v1412, 0
        %v1421 = vsel %vm339, %v308, 0
        %v1424 = vsel %vm339, %v309, 0
        %v1427 = vsel %vm339, %v310, 0
        %v1430 = vsel %vm339, %v311, 0
        %1432 = vmatprep.subr.mxu0 0.0
        %1433 = vmatpush1.xpose.msra.mxu0 0.0
        %1434 = vmatprep.subr.mxu0 0.0
        %1435 = vmatpush1.xpose.msra.mxu0 0.0
        %1436 = vmatprep.subr.mxu0 0.0
        %1437 = vmatpush1.xpose.msra.mxu0 0.0
        %1438 = vmatprep.subr.mxu0 0.0
        %1439 = vmatpush1.xpose.msra.mxu0 0.0
        %1440 = vmatprep.subr.mxu0 0.0
        %1441 = vmatpush1.xpose.msra.mxu0 0.0
        %1442 = vmatprep.subr.mxu0 0.0
        %1443 = vmatpush1.xpose.msra.mxu0 0.0
        %1444 = vmatprep.subr.mxu0 0.0
        %1445 = vmatpush1.xpose.msra.mxu0 0.0
        %1446 = vmatprep.subr.mxu0 0.0
        %1447 = vmatpush1.xpose.msra.mxu0 0.0
        %1448 = vmatprep.subr.mxu0 0.0
        %1449 = vmatpush1.xpose.msra.mxu0 0.0
        %1450 = vmatprep.subr.mxu0 0.0
        %1451 = vmatpush1.xpose.msra.mxu0 0.0
        %1452 = vmatprep.subr.mxu0 0.0
        %1453 = vmatpush1.xpose.msra.mxu0 0.0
        %1454 = vmatprep.subr.mxu0 0.0
        %1455 = vmatpush1.xpose.msra.mxu0 0.0
        %1456 = vmatprep.subr.mxu0 0.0
        %1457 = vmatpush1.xpose.msra.mxu0 %v1430
        %1458 = vmatprep.subr.mxu0 0.0
        %1459 = vmatpush1.xpose.msra.mxu0 %v1427
        %1460 = vmatprep.subr.mxu0 0.0
        %1461 = vmatpush1.xpose.msra.mxu0 %v1424
        %1462 = vmatprep.subr.mxu0 0.0
        %1463 = vmatpush1.xpose.msra.mxu0 %v1421
        %1464 = vmatprep.subr.mxu0 0.0
        %1465 = vmatpush2.xpose.msra.mxu0 0.0
        %1466 = vmatprep.subr.mxu0 0.0
        %1467 = vmatpush2.xpose.msra.mxu0 0.0
        %1468 = vmatprep.subr.mxu0 0.0
        %1469 = vmatpush2.xpose.msra.mxu0 0.0
        %1470 = vmatprep.subr.mxu0 0.0
        %1471 = vmatpush2.xpose.msra.mxu0 0.0
        %1472 = vmatprep.subr.mxu0 0.0
        %1473 = vmatpush2.xpose.msra.mxu0 0.0
        %1474 = vmatprep.subr.mxu0 0.0
        %1475 = vmatpush2.xpose.msra.mxu0 0.0
        %1476 = vmatprep.subr.mxu0 0.0
        %1477 = vmatpush2.xpose.msra.mxu0 0.0
        %1478 = vmatprep.subr.mxu0 0.0
        %1479 = vmatpush2.xpose.msra.mxu0 0.0
        %1480 = vmatprep.subr.mxu0 0.0
        %1481 = vmatpush2.xpose.msra.mxu0 0.0
        %1482 = vmatprep.subr.mxu0 0.0
        %1483 = vmatpush2.xpose.msra.mxu0 0.0
        %1484 = vmatprep.subr.mxu0 0.0
        %1485 = vmatpush2.xpose.msra.mxu0 0.0
        %1486 = vmatprep.subr.mxu0 0.0
        %1487 = vmatpush2.xpose.msra.mxu0 0.0
        %1488 = vmatprep.subr.mxu0 0.0
        %1489 = vmatpush2.xpose.msra.mxu0 0.0
        %1490 = vmatprep.subr.mxu0 0.0
        %1491 = vmatpush2.xpose.msra.mxu0 0.0
        %1492 = vmatprep.subr.mxu0 0.0
        %1493 = vmatpush2.xpose.msra.mxu0 0.0
        %1494 = vmatprep.subr.mxu0 0.0
        %1495 = vmatpush2.xpose.msra.mxu0 0.0
        %1496 = vmatprep.mubr.f32.mxu0 0.0
        %1497 = vmatmul.mubr.f32.gmra.mxu0 %v1418
        %v1498 = vpop.f32.mrf.mxu0
        %v1499 = vadd.f32 %v1416, %v1498
        %v1500 = vpop.f32.mrf.mxu0
        %1501 = vdwg.mxu0
        %v1502 = vlaneseq
        %v1503 = vshrl.u32 %v1502, 7
        %v1504 = vsub.s32 3, %v1503
        %v1505 = vrot.slane %v338, %v1504
        %v1507 = vsel %vm339, %v288, 0
        %v1510 = vsel %vm339, %v289, 0
        %v1513 = vsel %vm339, %v312, 0
        %v1516 = vsel %vm339, %v313, 0
        %v1519 = vsel %vm339, %v314, 0
        %v1522 = vsel %vm339, %v315, 0
        %1524 = vmatprep.subr.mxu0 0.0
        %1525 = vmatpush1.xpose.msra.mxu0 0.0
        %1526 = vmatprep.subr.mxu0 0.0
        %1527 = vmatpush1.xpose.msra.mxu0 0.0
        %1528 = vmatprep.subr.mxu0 0.0
        %1529 = vmatpush1.xpose.msra.mxu0 0.0
        %1530 = vmatprep.subr.mxu0 0.0
        %1531 = vmatpush1.xpose.msra.mxu0 0.0
        %1532 = vmatprep.subr.mxu0 0.0
        %1533 = vmatpush1.xpose.msra.mxu0 0.0
        %1534 = vmatprep.subr.mxu0 0.0
        %1535 = vmatpush1.xpose.msra.mxu0 0.0
        %1536 = vmatprep.subr.mxu0 0.0
        %1537 = vmatpush1.xpose.msra.mxu0 0.0
        %1538 = vmatprep.subr.mxu0 0.0
        %1539 = vmatpush1.xpose.msra.mxu0 0.0
        %1540 = vmatprep.subr.mxu0 0.0
        %1541 = vmatpush1.xpose.msra.mxu0 0.0
        %1542 = vmatprep.subr.mxu0 0.0
        %1543 = vmatpush1.xpose.msra.mxu0 0.0
        %1544 = vmatprep.subr.mxu0 0.0
        %1545 = vmatpush1.xpose.msra.mxu0 0.0
        %1546 = vmatprep.subr.mxu0 0.0
        %1547 = vmatpush1.xpose.msra.mxu0 0.0
        %1548 = vmatprep.subr.mxu0 0.0
        %1549 = vmatpush1.xpose.msra.mxu0 %v1522
        %1550 = vmatprep.subr.mxu0 0.0
        %1551 = vmatpush1.xpose.msra.mxu0 %v1519
        %1552 = vmatprep.subr.mxu0 0.0
        %1553 = vmatpush1.xpose.msra.mxu0 %v1516
        %1554 = vmatprep.subr.mxu0 0.0
        %1555 = vmatpush1.xpose.msra.mxu0 %v1513
        %1556 = vmatprep.subr.mxu0 0.0
        %1557 = vmatpush2.xpose.msra.mxu0 0.0
        %1558 = vmatprep.subr.mxu0 0.0
        %1559 = vmatpush2.xpose.msra.mxu0 0.0
        %1560 = vmatprep.subr.mxu0 0.0
        %1561 = vmatpush2.xpose.msra.mxu0 0.0
        %1562 = vmatprep.subr.mxu0 0.0
        %1563 = vmatpush2.xpose.msra.mxu0 0.0
        %1564 = vmatprep.subr.mxu0 0.0
        %1565 = vmatpush2.xpose.msra.mxu0 0.0
        %1566 = vmatprep.subr.mxu0 0.0
        %1567 = vmatpush2.xpose.msra.mxu0 0.0
        %1568 = vmatprep.subr.mxu0 0.0
        %1569 = vmatpush2.xpose.msra.mxu0 0.0
        %1570 = vmatprep.subr.mxu0 0.0
        %1571 = vmatpush2.xpose.msra.mxu0 0.0
        %1572 = vmatprep.subr.mxu0 0.0
        %1573 = vmatpush2.xpose.msra.mxu0 0.0
        %1574 = vmatprep.subr.mxu0 0.0
        %1575 = vmatpush2.xpose.msra.mxu0 0.0
        %1576 = vmatprep.subr.mxu0 0.0
        %1577 = vmatpush2.xpose.msra.mxu0 0.0
        %1578 = vmatprep.subr.mxu0 0.0
        %1579 = vmatpush2.xpose.msra.mxu0 0.0
        %1580 = vmatprep.subr.mxu0 0.0
        %1581 = vmatpush2.xpose.msra.mxu0 0.0
        %1582 = vmatprep.subr.mxu0 0.0
        %1583 = vmatpush2.xpose.msra.mxu0 0.0
        %1584 = vmatprep.subr.mxu0 0.0
        %1585 = vmatpush2.xpose.msra.mxu0 0.0
        %1586 = vmatprep.subr.mxu0 0.0
        %1587 = vmatpush2.xpose.msra.mxu0 0.0
        %1588 = vmatprep.mubr.f32.mxu0 0.0
        %1589 = vmatmul.mubr.f32.gmra.mxu0 %v1507
        %v1590 = vpop.f32.mrf.mxu0
        %v1591 = vadd.f32 %v1505, %v1590
        %v1592 = vpop.f32.mrf.mxu0
        %1593 = vmatprep.mubr.f32.mxu0 0.0
        %1594 = vmatmul.mubr.f32.gmra.mxu0 %v1510
        %v1595 = vpop.f32.mrf.mxu0
        %v1596 = vadd.f32 %v1505, %v1595
        %v1597 = vpop.f32.mrf.mxu0
        %1598 = vdwg.mxu0
        %v1599 = vlaneseq
        %v1600 = vshrl.u32 %v1599, 7
        %v1601 = vsub.s32 4, %v1600
        %v1602 = vrot.slane %v338, %v1601
        %v1604 = vsel %vm339, %v290, 0
        %v1607 = vsel %vm339, %v291, 0
        %v1610 = vsel %vm339, %v316, 0
        %v1613 = vsel %vm339, %v317, 0
        %v1616 = vsel %vm339, %v318, 0
        %v1619 = vsel %vm339, %v319, 0
        %1621 = vmatprep.subr.mxu0 0.0
        %1622 = vmatpush1.xpose.msra.mxu0 0.0
        %1623 = vmatprep.subr.mxu0 0.0
        %1624 = vmatpush1.xpose.msra.mxu0 0.0
        %1625 = vmatprep.subr.mxu0 0.0
        %1626 = vmatpush1.xpose.msra.mxu0 0.0
        %1627 = vmatprep.subr.mxu0 0.0
        %1628 = vmatpush1.xpose.msra.mxu0 0.0
        %1629 = vmatprep.subr.mxu0 0.0
        %1630 = vmatpush1.xpose.msra.mxu0 0.0
        %1631 = vmatprep.subr.mxu0 0.0
        %1632 = vmatpush1.xpose.msra.mxu0 0.0
        %1633 = vmatprep.subr.mxu0 0.0
        %1634 = vmatpush1.xpose.msra.mxu0 0.0
        %1635 = vmatprep.subr.mxu0 0.0
        %1636 = vmatpush1.xpose.msra.mxu0 0.0
        %1637 = vmatprep.subr.mxu0 0.0
        %1638 = vmatpush1.xpose.msra.mxu0 0.0
        %1639 = vmatprep.subr.mxu0 0.0
        %1640 = vmatpush1.xpose.msra.mxu0 0.0
        %1641 = vmatprep.subr.mxu0 0.0
        %1642 = vmatpush1.xpose.msra.mxu0 0.0
        %1643 = vmatprep.subr.mxu0 0.0
        %1644 = vmatpush1.xpose.msra.mxu0 0.0
        %1645 = vmatprep.subr.mxu0 0.0
        %1646 = vmatpush1.xpose.msra.mxu0 %v1619
        %1647 = vmatprep.subr.mxu0 0.0
        %1648 = vmatpush1.xpose.msra.mxu0 %v1616
        %1649 = vmatprep.subr.mxu0 0.0
        %1650 = vmatpush1.xpose.msra.mxu0 %v1613
        %1651 = vmatprep.subr.mxu0 0.0
        %1652 = vmatpush1.xpose.msra.mxu0 %v1610
        %1653 = vmatprep.subr.mxu0 0.0
        %1654 = vmatpush2.xpose.msra.mxu0 0.0
        %1655 = vmatprep.subr.mxu0 0.0
        %1656 = vmatpush2.xpose.msra.mxu0 0.0
        %1657 = vmatprep.subr.mxu0 0.0
        %1658 = vmatpush2.xpose.msra.mxu0 0.0
        %1659 = vmatprep.subr.mxu0 0.0
        %1660 = vmatpush2.xpose.msra.mxu0 0.0
        %1661 = vmatprep.subr.mxu0 0.0
        %1662 = vmatpush2.xpose.msra.mxu0 0.0
        %1663 = vmatprep.subr.mxu0 0.0
        %1664 = vmatpush2.xpose.msra.mxu0 0.0
        %1665 = vmatprep.subr.mxu0 0.0
        %1666 = vmatpush2.xpose.msra.mxu0 0.0
        %1667 = vmatprep.subr.mxu0 0.0
        %1668 = vmatpush2.xpose.msra.mxu0 0.0
        %1669 = vmatprep.subr.mxu0 0.0
        %1670 = vmatpush2.xpose.msra.mxu0 0.0
        %1671 = vmatprep.subr.mxu0 0.0
        %1672 = vmatpush2.xpose.msra.mxu0 0.0
        %1673 = vmatprep.subr.mxu0 0.0
        %1674 = vmatpush2.xpose.msra.mxu0 0.0
        %1675 = vmatprep.subr.mxu0 0.0
        %1676 = vmatpush2.xpose.msra.mxu0 0.0
        %1677 = vmatprep.subr.mxu0 0.0
        %1678 = vmatpush2.xpose.msra.mxu0 0.0
        %1679 = vmatprep.subr.mxu0 0.0
        %1680 = vmatpush2.xpose.msra.mxu0 0.0
        %1681 = vmatprep.subr.mxu0 0.0
        %1682 = vmatpush2.xpose.msra.mxu0 0.0
        %1683 = vmatprep.subr.mxu0 0.0
        %1684 = vmatpush2.xpose.msra.mxu0 0.0
        %1685 = vmatprep.mubr.f32.mxu0 0.0
        %1686 = vmatmul.mubr.f32.gmra.mxu0 %v1604
        %v1687 = vpop.f32.mrf.mxu0
        %v1688 = vadd.f32 %v1602, %v1687
        %v1689 = vpop.f32.mrf.mxu0
        %1690 = vmatprep.mubr.f32.mxu0 0.0
        %1691 = vmatmul.mubr.f32.gmra.mxu0 %v1607
        %v1692 = vpop.f32.mrf.mxu0
        %v1693 = vadd.f32 %v1602, %v1692
        %v1694 = vpop.f32.mrf.mxu0
        %1695 = vdwg.mxu0
        %v1696 = vmul.f32 %v1499, 0.35355338
        %v1698 = vsel %vm626, %v1696, 0
        %v1701 = vsel %vm626, %v1591, 0
        %v1704 = vsel %vm626, %v1596, 0
        %1706 = vmatprep.subr.mxu0 0.0
        %1707 = vmatpush1.xpose.msra.mxu0 0.0
        %1708 = vmatprep.subr.mxu0 0.0
        %1709 = vmatpush1.xpose.msra.mxu0 0.0
        %1710 = vmatprep.subr.mxu0 0.0
        %1711 = vmatpush1.xpose.msra.mxu0 0.0
        %1712 = vmatprep.subr.mxu0 0.0
        %1713 = vmatpush1.xpose.msra.mxu0 0.0
        %1714 = vmatprep.subr.mxu0 0.0
        %1715 = vmatpush1.xpose.msra.mxu0 0.0
        %1716 = vmatprep.subr.mxu0 0.0
        %1717 = vmatpush1.xpose.msra.mxu0 0.0
        %1718 = vmatprep.subr.mxu0 0.0
        %1719 = vmatpush1.xpose.msra.mxu0 0.0
        %1720 = vmatprep.subr.mxu0 0.0
        %1721 = vmatpush1.xpose.msra.mxu0 0.0
        %1722 = vmatprep.subr.mxu0 0.0
        %1723 = vmatpush1.xpose.msra.mxu0 0.0
        %1724 = vmatprep.subr.mxu0 0.0
        %1725 = vmatpush1.xpose.msra.mxu0 0.0
        %1726 = vmatprep.subr.mxu0 0.0
        %1727 = vmatpush1.xpose.msra.mxu0 0.0
        %1728 = vmatprep.subr.mxu0 0.0
        %1729 = vmatpush1.xpose.msra.mxu0 0.0
        %1730 = vmatprep.subr.mxu0 0.0
        %1731 = vmatpush1.xpose.msra.mxu0 0.0
        %1732 = vmatprep.subr.mxu0 0.0
        %1733 = vmatpush1.xpose.msra.mxu0 0.0
        %1734 = vmatprep.subr.mxu0 0.0
        %1735 = vmatpush1.xpose.msra.mxu0 %v1704
        %1736 = vmatprep.subr.mxu0 0.0
        %1737 = vmatpush1.xpose.msra.mxu0 %v1701
        %1738 = vmatprep.subr.mxu0 0.0
        %1739 = vmatpush2.xpose.msra.mxu0 0.0
        %1740 = vmatprep.subr.mxu0 0.0
        %1741 = vmatpush2.xpose.msra.mxu0 0.0
        %1742 = vmatprep.subr.mxu0 0.0
        %1743 = vmatpush2.xpose.msra.mxu0 0.0
        %1744 = vmatprep.subr.mxu0 0.0
        %1745 = vmatpush2.xpose.msra.mxu0 0.0
        %1746 = vmatprep.subr.mxu0 0.0
        %1747 = vmatpush2.xpose.msra.mxu0 0.0
        %1748 = vmatprep.subr.mxu0 0.0
        %1749 = vmatpush2.xpose.msra.mxu0 0.0
        %1750 = vmatprep.subr.mxu0 0.0
        %1751 = vmatpush2.xpose.msra.mxu0 0.0
        %1752 = vmatprep.subr.mxu0 0.0
        %1753 = vmatpush2.xpose.msra.mxu0 0.0
        %1754 = vmatprep.subr.mxu0 0.0
        %1755 = vmatpush2.xpose.msra.mxu0 0.0
        %1756 = vmatprep.subr.mxu0 0.0
        %1757 = vmatpush2.xpose.msra.mxu0 0.0
        %1758 = vmatprep.subr.mxu0 0.0
        %1759 = vmatpush2.xpose.msra.mxu0 0.0
        %1760 = vmatprep.subr.mxu0 0.0
        %1761 = vmatpush2.xpose.msra.mxu0 0.0
        %1762 = vmatprep.subr.mxu0 0.0
        %1763 = vmatpush2.xpose.msra.mxu0 0.0
        %1764 = vmatprep.subr.mxu0 0.0
        %1765 = vmatpush2.xpose.msra.mxu0 0.0
        %1766 = vmatprep.subr.mxu0 0.0
        %1767 = vmatpush2.xpose.msra.mxu0 0.0
        %1768 = vmatprep.subr.mxu0 0.0
        %1769 = vmatpush2.xpose.msra.mxu0 0.0
        %1770 = vmatprep.mubr.f32.mxu0 0.0
        %1771 = vmatmul.mubr.f32.gmra.mxu0 %v1698
        %v1772 = vpop.f32.mrf.mxu0
        %v1773 = vadd.f32 0.0, %v1772
        %v1774 = vpop.f32.mrf.mxu0
        %1775 = vdwg.mxu0
        %v1776 = vsel %vm1296, %v1773, -inf
        %1777 = vmax.xlane.f32.xlu0 %v1776
        %v1778 = vpop.xlane.xlu0 %1777
        %v1779 = vsub.f32 %v1773, %v1778
        %v1780 = vmul.f32 %v1779, 1.442695
        %v1781 = vpow.pop %v1780
        %v1782 = vsel %vm1296, %v1781, 0.0
        %1783 = vadd.xlane.f32.xlu0 %v1782
        %v1784 = vpop.xlane.xlu0 %1783
        %v1785 = vrcp.pop %v1784
        %v1786 = vmul.f32 %v1781, %v1785
        %v1788 = vsel %vm1296, %v1786, 0
        %1790 = vmatprep.subr.mxu0 0.0
        %1791 = vmatpush1.msra.mxu0 0.0
        %1792 = vmatprep.subr.mxu0 0.0
        %1793 = vmatpush1.msra.mxu0 0.0
        %1794 = vmatprep.subr.mxu0 0.0
        %1795 = vmatpush1.msra.mxu0 0.0
        %1796 = vmatprep.subr.mxu0 0.0
        %1797 = vmatpush1.msra.mxu0 0.0
        %1798 = vmatprep.subr.mxu0 0.0
        %1799 = vmatpush1.msra.mxu0 0.0
        %1800 = vmatprep.subr.mxu0 0.0
        %1801 = vmatpush1.msra.mxu0 0.0
        %1802 = vmatprep.subr.mxu0 0.0
        %1803 = vmatpush1.msra.mxu0 0.0
        %1804 = vmatprep.subr.mxu0 0.0
        %1805 = vmatpush1.msra.mxu0 0.0
        %1806 = vmatprep.subr.mxu0 0.0
        %1807 = vmatpush1.msra.mxu0 0.0
        %1808 = vmatprep.subr.mxu0 0.0
        %1809 = vmatpush1.msra.mxu0 0.0
        %1810 = vmatprep.subr.mxu0 0.0
        %1811 = vmatpush1.msra.mxu0 0.0
        %1812 = vmatprep.subr.mxu0 0.0
        %1813 = vmatpush1.msra.mxu0 0.0
        %1814 = vmatprep.subr.mxu0 0.0
        %1815 = vmatpush1.msra.mxu0 0.0
        %1816 = vmatprep.subr.mxu0 0.0
        %1817 = vmatpush1.msra.mxu0 0.0
        %1818 = vmatprep.subr.mxu0 0.0
        %1819 = vmatpush1.msra.mxu0 %v1693
        %1820 = vmatprep.subr.mxu0 0.0
        %1821 = vmatpush1.msra.mxu0 %v1688
        %1822 = vmatprep.subr.mxu0 0.0
        %1823 = vmatpush2.msra.mxu0 0.0
        %1824 = vmatprep.subr.mxu0 0.0
        %1825 = vmatpush2.msra.mxu0 0.0
        %1826 = vmatprep.subr.mxu0 0.0
        %1827 = vmatpush2.msra.mxu0 0.0
        %1828 = vmatprep.subr.mxu0 0.0
        %1829 = vmatpush2.msra.mxu0 0.0
        %1830 = vmatprep.subr.mxu0 0.0
        %1831 = vmatpush2.msra.mxu0 0.0
        %1832 = vmatprep.subr.mxu0 0.0
        %1833 = vmatpush2.msra.mxu0 0.0
        %1834 = vmatprep.subr.mxu0 0.0
        %1835 = vmatpush2.msra.mxu0 0.0
        %1836 = vmatprep.subr.mxu0 0.0
        %1837 = vmatpush2.msra.mxu0 0.0
        %1838 = vmatprep.subr.mxu0 0.0
        %1839 = vmatpush2.msra.mxu0 0.0
        %1840 = vmatprep.subr.mxu0 0.0
        %1841 = vmatpush2.msra.mxu0 0.0
        %1842 = vmatprep.subr.mxu0 0.0
        %1843 = vmatpush2.msra.mxu0 0.0
        %1844 = vmatprep.subr.mxu0 0.0
        %1845 = vmatpush2.msra.mxu0 0.0
        %1846 = vmatprep.subr.mxu0 0.0
        %1847 = vmatpush2.msra.mxu0 0.0
        %1848 = vmatprep.subr.mxu0 0.0
        %1849 = vmatpush2.msra.mxu0 0.0
        %1850 = vmatprep.subr.mxu0 0.0
        %1851 = vmatpush2.msra.mxu0 0.0
        %1852 = vmatprep.subr.mxu0 0.0
        %1853 = vmatpush2.msra.mxu0 0.0
        %1854 = vmatprep.mubr.f32.mxu0 0.0
        %1855 = vmatmul.mubr.f32.gmra.mxu0 %v1788
        %v1856 = vpop.f32.mrf.mxu0
        %v1857 = vadd.f32 0.0, %v1856
        %v1858 = vpop.f32.mrf.mxu0
        %1859 = vdwg.mxu0
        %1860 = vrot.lane.b32.xlu0 %v1696, 120
        %v1861 = vpop.permute.xlu0 %1860
        %1862 = vrot.lane.b32.xlu0 %v1591, 120
        %v1863 = vpop.permute.xlu0 %1862
        %1864 = vrot.lane.b32.xlu0 %v1596, 120
        %v1865 = vpop.permute.xlu0 %1864
        %v1866 = vsel %vm626, %v1861, 0
        %v1868 = vsel %vm626, %v1863, 0
        %v1870 = vsel %vm626, %v1865, 0
        %1872 = vmatprep.subr.mxu0 0.0
        %1873 = vmatpush1.xpose.msra.mxu0 0.0
        %1874 = vmatprep.subr.mxu0 0.0
        %1875 = vmatpush1.xpose.msra.mxu0 0.0
        %1876 = vmatprep.subr.mxu0 0.0
        %1877 = vmatpush1.xpose.msra.mxu0 0.0
        %1878 = vmatprep.subr.mxu0 0.0
        %1879 = vmatpush1.xpose.msra.mxu0 0.0
        %1880 = vmatprep.subr.mxu0 0.0
        %1881 = vmatpush1.xpose.msra.mxu0 0.0
        %1882 = vmatprep.subr.mxu0 0.0
        %1883 = vmatpush1.xpose.msra.mxu0 0.0
        %1884 = vmatprep.subr.mxu0 0.0
        %1885 = vmatpush1.xpose.msra.mxu0 0.0
        %1886 = vmatprep.subr.mxu0 0.0
        %1887 = vmatpush1.xpose.msra.mxu0 0.0
        %1888 = vmatprep.subr.mxu0 0.0
        %1889 = vmatpush1.xpose.msra.mxu0 0.0
        %1890 = vmatprep.subr.mxu0 0.0
        %1891 = vmatpush1.xpose.msra.mxu0 0.0
        %1892 = vmatprep.subr.mxu0 0.0
        %1893 = vmatpush1.xpose.msra.mxu0 0.0
        %1894 = vmatprep.subr.mxu0 0.0
        %1895 = vmatpush1.xpose.msra.mxu0 0.0
        %1896 = vmatprep.subr.mxu0 0.0
        %1897 = vmatpush1.xpose.msra.mxu0 0.0
        %1898 = vmatprep.subr.mxu0 0.0
        %1899 = vmatpush1.xpose.msra.mxu0 0.0
        %1900 = vmatprep.subr.mxu0 0.0
        %1901 = vmatpush1.xpose.msra.mxu0 %v1870
        %1902 = vmatprep.subr.mxu0 0.0
        %1903 = vmatpush1.xpose.msra.mxu0 %v1868
        %1904 = vmatprep.subr.mxu0 0.0
        %1905 = vmatpush2.xpose.msra.mxu0 0.0
        %1906 = vmatprep.subr.mxu0 0.0
        %1907 = vmatpush2.xpose.msra.mxu0 0.0
        %1908 = vmatprep.subr.mxu0 0.0
        %1909 = vmatpush2.xpose.msra.mxu0 0.0
        %1910 = vmatprep.subr.mxu0 0.0
        %1911 = vmatpush2.xpose.msra.mxu0 0.0
        %1912 = vmatprep.subr.mxu0 0.0
        %1913 = vmatpush2.xpose.msra.mxu0 0.0
        %1914 = vmatprep.subr.mxu0 0.0
        %1915 = vmatpush2.xpose.msra.mxu0 0.0
        %1916 = vmatprep.subr.mxu0 0.0
        %1917 = vmatpush2.xpose.msra.mxu0 0.0
        %1918 = vmatprep.subr.mxu0 0.0
        %1919 = vmatpush2.xpose.msra.mxu0 0.0
        %1920 = vmatprep.subr.mxu0 0.0
        %1921 = vmatpush2.xpose.msra.mxu0 0.0
        %1922 = vmatprep.subr.mxu0 0.0
        %1923 = vmatpush2.xpose.msra.mxu0 0.0
        %1924 = vmatprep.subr.mxu0 0.0
        %1925 = vmatpush2.xpose.msra.mxu0 0.0
        %1926 = vmatprep.subr.mxu0 0.0
        %1927 = vmatpush2.xpose.msra.mxu0 0.0
        %1928 = vmatprep.subr.mxu0 0.0
        %1929 = vmatpush2.xpose.msra.mxu0 0.0
        %1930 = vmatprep.subr.mxu0 0.0
        %1931 = vmatpush2.xpose.msra.mxu0 0.0
        %1932 = vmatprep.subr.mxu0 0.0
        %1933 = vmatpush2.xpose.msra.mxu0 0.0
        %1934 = vmatprep.subr.mxu0 0.0
        %1935 = vmatpush2.xpose.msra.mxu0 0.0
        %1936 = vmatprep.mubr.f32.mxu0 0.0
        %1937 = vmatmul.mubr.f32.gmra.mxu0 %v1866
        %v1938 = vpop.f32.mrf.mxu0
        %v1939 = vadd.f32 0.0, %v1938
        %v1940 = vpop.f32.mrf.mxu0
        %1941 = vdwg.mxu0
        %v1942 = vsel %vm1296, %v1939, -inf
        %1943 = vmax.xlane.f32.xlu0 %v1942
        %v1944 = vpop.xlane.xlu0 %1943
        %v1945 = vsub.f32 %v1939, %v1944
        %v1946 = vmul.f32 %v1945, 1.442695
        %v1947 = vpow.pop %v1946
        %v1948 = vsel %vm1296, %v1947, 0.0
        %1949 = vadd.xlane.f32.xlu0 %v1948
        %v1950 = vpop.xlane.xlu0 %1949
        %v1951 = vrcp.pop %v1950
        %v1952 = vmul.f32 %v1947, %v1951
        %1955 = vrot.lane.b32.xlu0 %v1688, 120
        %v1956 = vpop.permute.xlu0 %1955
        %1957 = vrot.lane.b32.xlu0 %v1693, 120
        %v1958 = vpop.permute.xlu0 %1957
        %v1962 = vsel %vm1296, %v1952, 0
        %1964 = vmatprep.subr.mxu0 0.0
        %1965 = vmatpush1.msra.mxu0 0.0
        %1966 = vmatprep.subr.mxu0 0.0
        %1967 = vmatpush1.msra.mxu0 0.0
        %1968 = vmatprep.subr.mxu0 0.0
        %1969 = vmatpush1.msra.mxu0 0.0
        %1970 = vmatprep.subr.mxu0 0.0
        %1971 = vmatpush1.msra.mxu0 0.0
        %1972 = vmatprep.subr.mxu0 0.0
        %1973 = vmatpush1.msra.mxu0 0.0
        %1974 = vmatprep.subr.mxu0 0.0
        %1975 = vmatpush1.msra.mxu0 0.0
        %1976 = vmatprep.subr.mxu0 0.0
        %1977 = vmatpush1.msra.mxu0 0.0
        %1978 = vmatprep.subr.mxu0 0.0
        %1979 = vmatpush1.msra.mxu0 0.0
        %1980 = vmatprep.subr.mxu0 0.0
        %1981 = vmatpush1.msra.mxu0 0.0
        %1982 = vmatprep.subr.mxu0 0.0
        %1983 = vmatpush1.msra.mxu0 0.0
        %1984 = vmatprep.subr.mxu0 0.0
        %1985 = vmatpush1.msra.mxu0 0.0
        %1986 = vmatprep.subr.mxu0 0.0
        %1987 = vmatpush1.msra.mxu0 0.0
        %1988 = vmatprep.subr.mxu0 0.0
        %1989 = vmatpush1.msra.mxu0 0.0
        %1990 = vmatprep.subr.mxu0 0.0
        %1991 = vmatpush1.msra.mxu0 0.0
        %1992 = vmatprep.subr.mxu0 0.0
        %1993 = vmatpush1.msra.mxu0 %v1958
        %1994 = vmatprep.subr.mxu0 0.0
        %1995 = vmatpush1.msra.mxu0 %v1956
        %1996 = vmatprep.subr.mxu0 0.0
        %1997 = vmatpush2.msra.mxu0 0.0
        %1998 = vmatprep.subr.mxu0 0.0
        %1999 = vmatpush2.msra.mxu0 0.0
        %2000 = vmatprep.subr.mxu0 0.0
        %2001 = vmatpush2.msra.mxu0 0.0
        %2002 = vmatprep.subr.mxu0 0.0
        %2003 = vmatpush2.msra.mxu0 0.0
        %2004 = vmatprep.subr.mxu0 0.0
        %2005 = vmatpush2.msra.mxu0 0.0
        %2006 = vmatprep.subr.mxu0 0.0
        %2007 = vmatpush2.msra.mxu0 0.0
        %2008 = vmatprep.subr.mxu0 0.0
        %2009 = vmatpush2.msra.mxu0 0.0
        %2010 = vmatprep.subr.mxu0 0.0
        %2011 = vmatpush2.msra.mxu0 0.0
        %2012 = vmatprep.subr.mxu0 0.0
        %2013 = vmatpush2.msra.mxu0 0.0
        %2014 = vmatprep.subr.mxu0 0.0
        %2015 = vmatpush2.msra.mxu0 0.0
        %2016 = vmatprep.subr.mxu0 0.0
        %2017 = vmatpush2.msra.mxu0 0.0
        %2018 = vmatprep.subr.mxu0 0.0
        %2019 = vmatpush2.msra.mxu0 0.0
        %2020 = vmatprep.subr.mxu0 0.0
        %2021 = vmatpush2.msra.mxu0 0.0
        %2022 = vmatprep.subr.mxu0 0.0
        %2023 = vmatpush2.msra.mxu0 0.0
        %2024 = vmatprep.subr.mxu0 0.0
        %2025 = vmatpush2.msra.mxu0 0.0
        %2026 = vmatprep.subr.mxu0 0.0
        %2027 = vmatpush2.msra.mxu0 0.0
        %2028 = vmatprep.mubr.f32.mxu0 0.0
        %2029 = vmatmul.mubr.f32.gmra.mxu0 %v1962
        %v2030 = vpop.f32.mrf.mxu0
        %v2031 = vadd.f32 0.0, %v2030
        %v2032 = vpop.f32.mrf.mxu0
        %2033 = vdwg.mxu0
        %2034 = vrot.lane.b32.xlu0 %v1696, 112
        %v2035 = vpop.permute.xlu0 %2034
        %2036 = vrot.lane.b32.xlu0 %v1591, 112
        %v2037 = vpop.permute.xlu0 %2036
        %2038 = vrot.lane.b32.xlu0 %v1596, 112
        %v2039 = vpop.permute.xlu0 %2038
        %v2040 = vsel %vm626, %v2035, 0
        %v2042 = vsel %vm626, %v2037, 0
        %v2044 = vsel %vm626, %v2039, 0
        %2046 = vmatprep.subr.mxu0 0.0
        %2047 = vmatpush1.xpose.msra.mxu0 0.0
        %2048 = vmatprep.subr.mxu0 0.0
        %2049 = vmatpush1.xpose.msra.mxu0 0.0
        %2050 = vmatprep.subr.mxu0 0.0
        %2051 = vmatpush1.xpose.msra.mxu0 0.0
        %2052 = vmatprep.subr.mxu0 0.0
        %2053 = vmatpush1.xpose.msra.mxu0 0.0
        %2054 = vmatprep.subr.mxu0 0.0
        %2055 = vmatpush1.xpose.msra.mxu0 0.0
        %2056 = vmatprep.subr.mxu0 0.0
        %2057 = vmatpush1.xpose.msra.mxu0 0.0
        %2058 = vmatprep.subr.mxu0 0.0
        %2059 = vmatpush1.xpose.msra.mxu0 0.0
        %2060 = vmatprep.subr.mxu0 0.0
        %2061 = vmatpush1.xpose.msra.mxu0 0.0
        %2062 = vmatprep.subr.mxu0 0.0
        %2063 = vmatpush1.xpose.msra.mxu0 0.0
        %2064 = vmatprep.subr.mxu0 0.0
        %2065 = vmatpush1.xpose.msra.mxu0 0.0
        %2066 = vmatprep.subr.mxu0 0.0
        %2067 = vmatpush1.xpose.msra.mxu0 0.0
        %2068 = vmatprep.subr.mxu0 0.0
        %2069 = vmatpush1.xpose.msra.mxu0 0.0
        %2070 = vmatprep.subr.mxu0 0.0
        %2071 = vmatpush1.xpose.msra.mxu0 0.0
        %2072 = vmatprep.subr.mxu0 0.0
        %2073 = vmatpush1.xpose.msra.mxu0 0.0
        %2074 = vmatprep.subr.mxu0 0.0
        %2075 = vmatpush1.xpose.msra.mxu0 %v2044
        %2076 = vmatprep.subr.mxu0 0.0
        %2077 = vmatpush1.xpose.msra.mxu0 %v2042
        %2078 = vmatprep.subr.mxu0 0.0
        %2079 = vmatpush2.xpose.msra.mxu0 0.0
        %2080 = vmatprep.subr.mxu0 0.0
        %2081 = vmatpush2.xpose.msra.mxu0 0.0
        %2082 = vmatprep.subr.mxu0 0.0
        %2083 = vmatpush2.xpose.msra.mxu0 0.0
        %2084 = vmatprep.subr.mxu0 0.0
        %2085 = vmatpush2.xpose.msra.mxu0 0.0
        %2086 = vmatprep.subr.mxu0 0.0
        %2087 = vmatpush2.xpose.msra.mxu0 0.0
        %2088 = vmatprep.subr.mxu0 0.0
        %2089 = vmatpush2.xpose.msra.mxu0 0.0
        %2090 = vmatprep.subr.mxu0 0.0
        %2091 = vmatpush2.xpose.msra.mxu0 0.0
        %2092 = vmatprep.subr.mxu0 0.0
        %2093 = vmatpush2.xpose.msra.mxu0 0.0
        %2094 = vmatprep.subr.mxu0 0.0
        %2095 = vmatpush2.xpose.msra.mxu0 0.0
        %2096 = vmatprep.subr.mxu0 0.0
        %2097 = vmatpush2.xpose.msra.mxu0 0.0
        %2098 = vmatprep.subr.mxu0 0.0
        %2099 = vmatpush2.xpose.msra.mxu0 0.0
        %2100 = vmatprep.subr.mxu0 0.0
        %2101 = vmatpush2.xpose.msra.mxu0 0.0
        %2102 = vmatprep.subr.mxu0 0.0
        %2103 = vmatpush2.xpose.msra.mxu0 0.0
        %2104 = vmatprep.subr.mxu0 0.0
        %2105 = vmatpush2.xpose.msra.mxu0 0.0
        %2106 = vmatprep.subr.mxu0 0.0
        %2107 = vmatpush2.xpose.msra.mxu0 0.0
        %2108 = vmatprep.subr.mxu0 0.0
        %2109 = vmatpush2.xpose.msra.mxu0 0.0
        %2110 = vmatprep.mubr.f32.mxu0 0.0
        %2111 = vmatmul.mubr.f32.gmra.mxu0 %v2040
        %v2112 = vpop.f32.mrf.mxu0
        %v2113 = vadd.f32 0.0, %v2112
        %v2114 = vpop.f32.mrf.mxu0
        %2115 = vdwg.mxu0
        %v2116 = vsel %vm1296, %v2113, -inf
        %2117 = vmax.xlane.f32.xlu0 %v2116
        %v2118 = vpop.xlane.xlu0 %2117
        %v2119 = vsub.f32 %v2113, %v2118
        %v2120 = vmul.f32 %v2119, 1.442695
        %v2121 = vpow.pop %v2120
        %v2122 = vsel %vm1296, %v2121, 0.0
        %2123 = vadd.xlane.f32.xlu0 %v2122
        %v2124 = vpop.xlane.xlu0 %2123
        %v2125 = vrcp.pop %v2124
        %v2126 = vmul.f32 %v2121, %v2125
        %2127 = vrot.lane.b32.xlu0 %v1688, 112
        %v2128 = vpop.permute.xlu0 %2127
        %2129 = vrot.lane.b32.xlu0 %v1693, 112
        %v2130 = vpop.permute.xlu0 %2129
        %v2134 = vsel %vm1296, %v2126, 0
        %2136 = vmatprep.subr.mxu0 0.0
        %2137 = vmatpush1.msra.mxu0 0.0
        %2138 = vmatprep.subr.mxu0 0.0
        %2139 = vmatpush1.msra.mxu0 0.0
        %2140 = vmatprep.subr.mxu0 0.0
        %2141 = vmatpush1.msra.mxu0 0.0
        %2142 = vmatprep.subr.mxu0 0.0
        %2143 = vmatpush1.msra.mxu0 0.0
        %2144 = vmatprep.subr.mxu0 0.0
        %2145 = vmatpush1.msra.mxu0 0.0
        %2146 = vmatprep.subr.mxu0 0.0
        %2147 = vmatpush1.msra.mxu0 0.0
        %2148 = vmatprep.subr.mxu0 0.0
        %2149 = vmatpush1.msra.mxu0 0.0
        %2150 = vmatprep.subr.mxu0 0.0
        %2151 = vmatpush1.msra.mxu0 0.0
        %2152 = vmatprep.subr.mxu0 0.0
        %2153 = vmatpush1.msra.mxu0 0.0
        %2154 = vmatprep.subr.mxu0 0.0
        %2155 = vmatpush1.msra.mxu0 0.0
        %2156 = vmatprep.subr.mxu0 0.0
        %2157 = vmatpush1.msra.mxu0 0.0
        %2158 = vmatprep.subr.mxu0 0.0
        %2159 = vmatpush1.msra.mxu0 0.0
        %2160 = vmatprep.subr.mxu0 0.0
        %2161 = vmatpush1.msra.mxu0 0.0
        %2162 = vmatprep.subr.mxu0 0.0
        %2163 = vmatpush1.msra.mxu0 0.0
        %2164 = vmatprep.subr.mxu0 0.0
        %2165 = vmatpush1.msra.mxu0 %v2130
        %2166 = vmatprep.subr.mxu0 0.0
        %2167 = vmatpush1.msra.mxu0 %v2128
        %2168 = vmatprep.subr.mxu0 0.0
        %2169 = vmatpush2.msra.mxu0 0.0
        %2170 = vmatprep.subr.mxu0 0.0
        %2171 = vmatpush2.msra.mxu0 0.0
        %2172 = vmatprep.subr.mxu0 0.0
        %2173 = vmatpush2.msra.mxu0 0.0
        %2174 = vmatprep.subr.mxu0 0.0
        %2175 = vmatpush2.msra.mxu0 0.0
        %2176 = vmatprep.subr.mxu0 0.0
        %2177 = vmatpush2.msra.mxu0 0.0
        %2178 = vmatprep.subr.mxu0 0.0
        %2179 = vmatpush2.msra.mxu0 0.0
        %2180 = vmatprep.subr.mxu0 0.0
        %2181 = vmatpush2.msra.mxu0 0.0
        %2182 = vmatprep.subr.mxu0 0.0
        %2183 = vmatpush2.msra.mxu0 0.0
        %2184 = vmatprep.subr.mxu0 0.0
        %2185 = vmatpush2.msra.mxu0 0.0
        %2186 = vmatprep.subr.mxu0 0.0
        %2187 = vmatpush2.msra.mxu0 0.0
        %2188 = vmatprep.subr.mxu0 0.0
        %2189 = vmatpush2.msra.mxu0 0.0
        %2190 = vmatprep.subr.mxu0 0.0
        %2191 = vmatpush2.msra.mxu0 0.0
        %2192 = vmatprep.subr.mxu0 0.0
        %2193 = vmatpush2.msra.mxu0 0.0
        %2194 = vmatprep.subr.mxu0 0.0
        %2195 = vmatpush2.msra.mxu0 0.0
        %2196 = vmatprep.subr.mxu0 0.0
        %2197 = vmatpush2.msra.mxu0 0.0
        %2198 = vmatprep.subr.mxu0 0.0
        %2199 = vmatpush2.msra.mxu0 0.0
        %2200 = vmatprep.mubr.f32.mxu0 0.0
        %2201 = vmatmul.mubr.f32.gmra.mxu0 %v2134
        %v2202 = vpop.f32.mrf.mxu0
        %v2203 = vadd.f32 0.0, %v2202
        %v2204 = vpop.f32.mrf.mxu0
        %2205 = vdwg.mxu0
        %2206 = vrot.lane.b32.xlu0 %v1696, 104
        %v2207 = vpop.permute.xlu0 %2206
        %2208 = vrot.lane.b32.xlu0 %v1591, 104
        %v2209 = vpop.permute.xlu0 %2208
        %2210 = vrot.lane.b32.xlu0 %v1596, 104
        %v2211 = vpop.permute.xlu0 %2210
        %v2212 = vsel %vm626, %v2207, 0
        %v2214 = vsel %vm626, %v2209, 0
        %v2216 = vsel %vm626, %v2211, 0
        %2218 = vmatprep.subr.mxu0 0.0
        %2219 = vmatpush1.xpose.msra.mxu0 0.0
        %2220 = vmatprep.subr.mxu0 0.0
        %2221 = vmatpush1.xpose.msra.mxu0 0.0
        %2222 = vmatprep.subr.mxu0 0.0
        %2223 = vmatpush1.xpose.msra.mxu0 0.0
        %2224 = vmatprep.subr.mxu0 0.0
        %2225 = vmatpush1.xpose.msra.mxu0 0.0
        %2226 = vmatprep.subr.mxu0 0.0
        %2227 = vmatpush1.xpose.msra.mxu0 0.0
        %2228 = vmatprep.subr.mxu0 0.0
        %2229 = vmatpush1.xpose.msra.mxu0 0.0
        %2230 = vmatprep.subr.mxu0 0.0
        %2231 = vmatpush1.xpose.msra.mxu0 0.0
        %2232 = vmatprep.subr.mxu0 0.0
        %2233 = vmatpush1.xpose.msra.mxu0 0.0
        %2234 = vmatprep.subr.mxu0 0.0
        %2235 = vmatpush1.xpose.msra.mxu0 0.0
        %2236 = vmatprep.subr.mxu0 0.0
        %2237 = vmatpush1.xpose.msra.mxu0 0.0
        %2238 = vmatprep.subr.mxu0 0.0
        %2239 = vmatpush1.xpose.msra.mxu0 0.0
        %2240 = vmatprep.subr.mxu0 0.0
        %2241 = vmatpush1.xpose.msra.mxu0 0.0
        %2242 = vmatprep.subr.mxu0 0.0
        %2243 = vmatpush1.xpose.msra.mxu0 0.0
        %2244 = vmatprep.subr.mxu0 0.0
        %2245 = vmatpush1.xpose.msra.mxu0 0.0
        %2246 = vmatprep.subr.mxu0 0.0
        %2247 = vmatpush1.xpose.msra.mxu0 %v2216
        %2248 = vmatprep.subr.mxu0 0.0
        %2249 = vmatpush1.xpose.msra.mxu0 %v2214
        %2250 = vmatprep.subr.mxu0 0.0
        %2251 = vmatpush2.xpose.msra.mxu0 0.0
        %2252 = vmatprep.subr.mxu0 0.0
        %2253 = vmatpush2.xpose.msra.mxu0 0.0
        %2254 = vmatprep.subr.mxu0 0.0
        %2255 = vmatpush2.xpose.msra.mxu0 0.0
        %2256 = vmatprep.subr.mxu0 0.0
        %2257 = vmatpush2.xpose.msra.mxu0 0.0
        %2258 = vmatprep.subr.mxu0 0.0
        %2259 = vmatpush2.xpose.msra.mxu0 0.0
        %2260 = vmatprep.subr.mxu0 0.0
        %2261 = vmatpush2.xpose.msra.mxu0 0.0
        %2262 = vmatprep.subr.mxu0 0.0
        %2263 = vmatpush2.xpose.msra.mxu0 0.0
        %2264 = vmatprep.subr.mxu0 0.0
        %2265 = vmatpush2.xpose.msra.mxu0 0.0
        %2266 = vmatprep.subr.mxu0 0.0
        %2267 = vmatpush2.xpose.msra.mxu0 0.0
        %2268 = vmatprep.subr.mxu0 0.0
        %2269 = vmatpush2.xpose.msra.mxu0 0.0
        %2270 = vmatprep.subr.mxu0 0.0
        %2271 = vmatpush2.xpose.msra.mxu0 0.0
        %2272 = vmatprep.subr.mxu0 0.0
        %2273 = vmatpush2.xpose.msra.mxu0 0.0
        %2274 = vmatprep.subr.mxu0 0.0
        %2275 = vmatpush2.xpose.msra.mxu0 0.0
        %2276 = vmatprep.subr.mxu0 0.0
        %2277 = vmatpush2.xpose.msra.mxu0 0.0
        %2278 = vmatprep.subr.mxu0 0.0
        %2279 = vmatpush2.xpose.msra.mxu0 0.0
        %2280 = vmatprep.subr.mxu0 0.0
        %2281 = vmatpush2.xpose.msra.mxu0 0.0
        %2282 = vmatprep.mubr.f32.mxu0 0.0
        %2283 = vmatmul.mubr.f32.gmra.mxu0 %v2212
        %v2284 = vpop.f32.mrf.mxu0
        %v2285 = vadd.f32 0.0, %v2284
        %v2286 = vpop.f32.mrf.mxu0
        %2287 = vdwg.mxu0
        %v2288 = vsel %vm1296, %v2285, -inf
        %2289 = vmax.xlane.f32.xlu0 %v2288
        %v2290 = vpop.xlane.xlu0 %2289
        %v2291 = vsub.f32 %v2285, %v2290
        %v2292 = vmul.f32 %v2291, 1.442695
        %v2293 = vpow.pop %v2292
        %v2294 = vsel %vm1296, %v2293, 0.0
        %2295 = vadd.xlane.f32.xlu0 %v2294
        %v2296 = vpop.xlane.xlu0 %2295
        %v2297 = vrcp.pop %v2296
        %v2298 = vmul.f32 %v2293, %v2297
        %2299 = vrot.lane.b32.xlu0 %v1688, 104
        %v2300 = vpop.permute.xlu0 %2299
        %2301 = vrot.lane.b32.xlu0 %v1693, 104
        %v2302 = vpop.permute.xlu0 %2301
        %v2306 = vsel %vm1296, %v2298, 0
        %2308 = vmatprep.subr.mxu0 0.0
        %2309 = vmatpush1.msra.mxu0 0.0
        %2310 = vmatprep.subr.mxu0 0.0
        %2311 = vmatpush1.msra.mxu0 0.0
        %2312 = vmatprep.subr.mxu0 0.0
        %2313 = vmatpush1.msra.mxu0 0.0
        %2314 = vmatprep.subr.mxu0 0.0
        %2315 = vmatpush1.msra.mxu0 0.0
        %2316 = vmatprep.subr.mxu0 0.0
        %2317 = vmatpush1.msra.mxu0 0.0
        %2318 = vmatprep.subr.mxu0 0.0
        %2319 = vmatpush1.msra.mxu0 0.0
        %2320 = vmatprep.subr.mxu0 0.0
        %2321 = vmatpush1.msra.mxu0 0.0
        %2322 = vmatprep.subr.mxu0 0.0
        %2323 = vmatpush1.msra.mxu0 0.0
        %2324 = vmatprep.subr.mxu0 0.0
        %2325 = vmatpush1.msra.mxu0 0.0
        %2326 = vmatprep.subr.mxu0 0.0
        %2327 = vmatpush1.msra.mxu0 0.0
        %2328 = vmatprep.subr.mxu0 0.0
        %2329 = vmatpush1.msra.mxu0 0.0
        %2330 = vmatprep.subr.mxu0 0.0
        %2331 = vmatpush1.msra.mxu0 0.0
        %2332 = vmatprep.subr.mxu0 0.0
        %2333 = vmatpush1.msra.mxu0 0.0
        %2334 = vmatprep.subr.mxu0 0.0
        %2335 = vmatpush1.msra.mxu0 0.0
        %2336 = vmatprep.subr.mxu0 0.0
        %2337 = vmatpush1.msra.mxu0 %v2302
        %2338 = vmatprep.subr.mxu0 0.0
        %2339 = vmatpush1.msra.mxu0 %v2300
        %2340 = vmatprep.subr.mxu0 0.0
        %2341 = vmatpush2.msra.mxu0 0.0
        %2342 = vmatprep.subr.mxu0 0.0
        %2343 = vmatpush2.msra.mxu0 0.0
        %2344 = vmatprep.subr.mxu0 0.0
        %2345 = vmatpush2.msra.mxu0 0.0
        %2346 = vmatprep.subr.mxu0 0.0
        %2347 = vmatpush2.msra.mxu0 0.0
        %2348 = vmatprep.subr.mxu0 0.0
        %2349 = vmatpush2.msra.mxu0 0.0
        %2350 = vmatprep.subr.mxu0 0.0
        %2351 = vmatpush2.msra.mxu0 0.0
        %2352 = vmatprep.subr.mxu0 0.0
        %2353 = vmatpush2.msra.mxu0 0.0
        %2354 = vmatprep.subr.mxu0 0.0
        %2355 = vmatpush2.msra.mxu0 0.0
        %2356 = vmatprep.subr.mxu0 0.0
        %2357 = vmatpush2.msra.mxu0 0.0
        %2358 = vmatprep.subr.mxu0 0.0
        %2359 = vmatpush2.msra.mxu0 0.0
        %2360 = vmatprep.subr.mxu0 0.0
        %2361 = vmatpush2.msra.mxu0 0.0
        %2362 = vmatprep.subr.mxu0 0.0
        %2363 = vmatpush2.msra.mxu0 0.0
        %2364 = vmatprep.subr.mxu0 0.0
        %2365 = vmatpush2.msra.mxu0 0.0
        %2366 = vmatprep.subr.mxu0 0.0
        %2367 = vmatpush2.msra.mxu0 0.0
        %2368 = vmatprep.subr.mxu0 0.0
        %2369 = vmatpush2.msra.mxu0 0.0
        %2370 = vmatprep.subr.mxu0 0.0
        %2371 = vmatpush2.msra.mxu0 0.0
        %2372 = vmatprep.mubr.f32.mxu0 0.0
        %2373 = vmatmul.mubr.f32.gmra.mxu0 %v2306
        %v2374 = vpop.f32.mrf.mxu0
        %v2375 = vadd.f32 0.0, %v2374
        %v2376 = vpop.f32.mrf.mxu0
        %2377 = vdwg.mxu0
        %2379 = vrot.lane.b32.xlu0 %v2031, 8
        %v2380 = vpop.permute.xlu0 %2379
        %2383 = vrot.lane.b32.xlu0 %v2203, 16
        %v2384 = vpop.permute.xlu0 %2383
        %2387 = vrot.lane.b32.xlu0 %v2375, 24
        %v2388 = vpop.permute.xlu0 %2387
        %v2390 = vsel %vm626, %v1857, %v2380
        %v2391 = vsel %vm1296, %v2390, %v2384
        %v2392 = vsel %vm1298, %v2391, %v2388
        %v2393 = vlaneseq
        %v2394 = vshrl.u32 %v2393, 7
        %v2395 = vsub.s32 5, %v2394
        %v2396 = vrot.slane %v338, %v2395
        %v2398 = vsel %vm339, %v2392, 0
        %v2401 = vsel %vm339, %v320, 0
        %v2404 = vsel %vm339, %v321, 0
        %v2407 = vsel %vm339, %v322, 0
        %v2410 = vsel %vm339, %v323, 0
        %2412 = vmatprep.subr.mxu0 0.0
        %2413 = vmatpush1.xpose.msra.mxu0 0.0
        %2414 = vmatprep.subr.mxu0 0.0
        %2415 = vmatpush1.xpose.msra.mxu0 0.0
        %2416 = vmatprep.subr.mxu0 0.0
        %2417 = vmatpush1.xpose.msra.mxu0 0.0
        %2418 = vmatprep.subr.mxu0 0.0
        %2419 = vmatpush1.xpose.msra.mxu0 0.0
        %2420 = vmatprep.subr.mxu0 0.0
        %2421 = vmatpush1.xpose.msra.mxu0 0.0
        %2422 = vmatprep.subr.mxu0 0.0
        %2423 = vmatpush1.xpose.msra.mxu0 0.0
        %2424 = vmatprep.subr.mxu0 0.0
        %2425 = vmatpush1.xpose.msra.mxu0 0.0
        %2426 = vmatprep.subr.mxu0 0.0
        %2427 = vmatpush1.xpose.msra.mxu0 0.0
        %2428 = vmatprep.subr.mxu0 0.0
        %2429 = vmatpush1.xpose.msra.mxu0 0.0
        %2430 = vmatprep.subr.mxu0 0.0
        %2431 = vmatpush1.xpose.msra.mxu0 0.0
        %2432 = vmatprep.subr.mxu0 0.0
        %2433 = vmatpush1.xpose.msra.mxu0 0.0
        %2434 = vmatprep.subr.mxu0 0.0
        %2435 = vmatpush1.xpose.msra.mxu0 0.0
        %2436 = vmatprep.subr.mxu0 0.0
        %2437 = vmatpush1.xpose.msra.mxu0 %v2410
        %2438 = vmatprep.subr.mxu0 0.0
        %2439 = vmatpush1.xpose.msra.mxu0 %v2407
        %2440 = vmatprep.subr.mxu0 0.0
        %2441 = vmatpush1.xpose.msra.mxu0 %v2404
        %2442 = vmatprep.subr.mxu0 0.0
        %2443 = vmatpush1.xpose.msra.mxu0 %v2401
        %2444 = vmatprep.subr.mxu0 0.0
        %2445 = vmatpush2.xpose.msra.mxu0 0.0
        %2446 = vmatprep.subr.mxu0 0.0
        %2447 = vmatpush2.xpose.msra.mxu0 0.0
        %2448 = vmatprep.subr.mxu0 0.0
        %2449 = vmatpush2.xpose.msra.mxu0 0.0
        %2450 = vmatprep.subr.mxu0 0.0
        %2451 = vmatpush2.xpose.msra.mxu0 0.0
        %2452 = vmatprep.subr.mxu0 0.0
        %2453 = vmatpush2.xpose.msra.mxu0 0.0
        %2454 = vmatprep.subr.mxu0 0.0
        %2455 = vmatpush2.xpose.msra.mxu0 0.0
        %2456 = vmatprep.subr.mxu0 0.0
        %2457 = vmatpush2.xpose.msra.mxu0 0.0
        %2458 = vmatprep.subr.mxu0 0.0
        %2459 = vmatpush2.xpose.msra.mxu0 0.0
        %2460 = vmatprep.subr.mxu0 0.0
        %2461 = vmatpush2.xpose.msra.mxu0 0.0
        %2462 = vmatprep.subr.mxu0 0.0
        %2463 = vmatpush2.xpose.msra.mxu0 0.0
        %2464 = vmatprep.subr.mxu0 0.0
        %2465 = vmatpush2.xpose.msra.mxu0 0.0
        %2466 = vmatprep.subr.mxu0 0.0
        %2467 = vmatpush2.xpose.msra.mxu0 0.0
        %2468 = vmatprep.subr.mxu0 0.0
        %2469 = vmatpush2.xpose.msra.mxu0 0.0
        %2470 = vmatprep.subr.mxu0 0.0
        %2471 = vmatpush2.xpose.msra.mxu0 0.0
        %2472 = vmatprep.subr.mxu0 0.0
        %2473 = vmatpush2.xpose.msra.mxu0 0.0
        %2474 = vmatprep.subr.mxu0 0.0
        %2475 = vmatpush2.xpose.msra.mxu0 0.0
        %2476 = vmatprep.mubr.f32.mxu0 0.0
        %2477 = vmatmul.mubr.f32.gmra.mxu0 %v2398
        %v2478 = vpop.f32.mrf.mxu0
        %v2479 = vadd.f32 %v2396, %v2478
        %v2480 = vpop.f32.mrf.mxu0
        %2481 = vdwg.mxu0
        %v2482 = vadd.f32 %v1389, %v2479
        %v2483 = vsel %vm339, %v2482, 0.0
        %2484 = vadd.xlane.f32.xlu0 %v2483
        %v2485 = vpop.xlane.xlu0 %2484
        %v2486 = vmul.f32 %v2485, %v343
        %v2487 = vsub.f32 %v2482, %v2486
        %v2488 = vmul.f32 %v2487, %v2487
        %v2489 = vsel %vm339, %v2488, 0.0
        %2490 = vadd.xlane.f32.xlu0 %v2489
        %v2491 = vpop.xlane.xlu0 %2490
        %v2492 = vmul.f32 %v2491, %v343
        %v2493 = vadd.f32 %v2492, 1e-05
        %v2494 = vrsqrt.pop %v2493
        %v2495 = vmul.f32 %v2487, %v2494
        %v2496 = vlaneseq
        %v2497 = vshrl.u32 %v2496, 7
        %v2498 = vsub.s32 4, %v2497
        %v2499 = vrot.slane %v337, %v2498
        %v2500 = vmul.f32 %v2495, %v2499
        %v2501 = vlaneseq
        %v2502 = vshrl.u32 %v2501, 7
        %v2503 = vsub.s32 5, %v2502
        %v2504 = vrot.slane %v337, %v2503
        %v2505 = vadd.f32 %v2500, %v2504
        %v2506 = vlaneseq
        %v2507 = vshrl.u32 %v2506, 7
        %v2508 = vsub.s32 0, %v2507
        %v2509 = vrot.slane %v336, %v2508
        %v2511 = vsel %vm339, %v2505, 0
        %v2514 = vsel %vm339, %v324, 0
        %v2517 = vsel %vm339, %v325, 0
        %v2520 = vsel %vm339, %v326, 0
        %v2523 = vsel %vm339, %v327, 0
        %v2526 = vsel %vm339, %v328, 0
        %v2529 = vsel %vm339, %v329, 0
        %v2532 = vsel %vm339, %v330, 0
        %v2535 = vsel %vm339, %v331, 0
        %2537 = vmatprep.subr.mxu0 0.0
        %2538 = vmatpush1.xpose.msra.mxu0 0.0
        %2539 = vmatprep.subr.mxu0 0.0
        %2540 = vmatpush1.xpose.msra.mxu0 0.0
        %2541 = vmatprep.subr.mxu0 0.0
        %2542 = vmatpush1.xpose.msra.mxu0 0.0
        %2543 = vmatprep.subr.mxu0 0.0
        %2544 = vmatpush1.xpose.msra.mxu0 0.0
        %2545 = vmatprep.subr.mxu0 0.0
        %2546 = vmatpush1.xpose.msra.mxu0 0.0
        %2547 = vmatprep.subr.mxu0 0.0
        %2548 = vmatpush1.xpose.msra.mxu0 0.0
        %2549 = vmatprep.subr.mxu0 0.0
        %2550 = vmatpush1.xpose.msra.mxu0 0.0
        %2551 = vmatprep.subr.mxu0 0.0
        %2552 = vmatpush1.xpose.msra.mxu0 0.0
        %2553 = vmatprep.subr.mxu0 0.0
        %2554 = vmatpush1.xpose.msra.mxu0 %v2535
        %2555 = vmatprep.subr.mxu0 0.0
        %2556 = vmatpush1.xpose.msra.mxu0 %v2532
        %2557 = vmatprep.subr.mxu0 0.0
        %2558 = vmatpush1.xpose.msra.mxu0 %v2529
        %2559 = vmatprep.subr.mxu0 0.0
        %2560 = vmatpush1.xpose.msra.mxu0 %v2526
        %2561 = vmatprep.subr.mxu0 0.0
        %2562 = vmatpush1.xpose.msra.mxu0 %v2523
        %2563 = vmatprep.subr.mxu0 0.0
        %2564 = vmatpush1.xpose.msra.mxu0 %v2520
        %2565 = vmatprep.subr.mxu0 0.0
        %2566 = vmatpush1.xpose.msra.mxu0 %v2517
        %2567 = vmatprep.subr.mxu0 0.0
        %2568 = vmatpush1.xpose.msra.mxu0 %v2514
        %2569 = vmatprep.subr.mxu0 0.0
        %2570 = vmatpush2.xpose.msra.mxu0 0.0
        %2571 = vmatprep.subr.mxu0 0.0
        %2572 = vmatpush2.xpose.msra.mxu0 0.0
        %2573 = vmatprep.subr.mxu0 0.0
        %2574 = vmatpush2.xpose.msra.mxu0 0.0
        %2575 = vmatprep.subr.mxu0 0.0
        %2576 = vmatpush2.xpose.msra.mxu0 0.0
        %2577 = vmatprep.subr.mxu0 0.0
        %2578 = vmatpush2.xpose.msra.mxu0 0.0
        %2579 = vmatprep.subr.mxu0 0.0
        %2580 = vmatpush2.xpose.msra.mxu0 0.0
        %2581 = vmatprep.subr.mxu0 0.0
        %2582 = vmatpush2.xpose.msra.mxu0 0.0
        %2583 = vmatprep.subr.mxu0 0.0
        %2584 = vmatpush2.xpose.msra.mxu0 0.0
        %2585 = vmatprep.subr.mxu0 0.0
        %2586 = vmatpush2.xpose.msra.mxu0 0.0
        %2587 = vmatprep.subr.mxu0 0.0
        %2588 = vmatpush2.xpose.msra.mxu0 0.0
        %2589 = vmatprep.subr.mxu0 0.0
        %2590 = vmatpush2.xpose.msra.mxu0 0.0
        %2591 = vmatprep.subr.mxu0 0.0
        %2592 = vmatpush2.xpose.msra.mxu0 0.0
        %2593 = vmatprep.subr.mxu0 0.0
        %2594 = vmatpush2.xpose.msra.mxu0 0.0
        %2595 = vmatprep.subr.mxu0 0.0
        %2596 = vmatpush2.xpose.msra.mxu0 0.0
        %2597 = vmatprep.subr.mxu0 0.0
        %2598 = vmatpush2.xpose.msra.mxu0 0.0
        %2599 = vmatprep.subr.mxu0 0.0
        %2600 = vmatpush2.xpose.msra.mxu0 0.0
        %2601 = vmatprep.mubr.f32.mxu0 0.0
        %2602 = vmatmul.mubr.f32.gmra.mxu0 %v2511
        %v2603 = vpop.f32.mrf.mxu0
        %v2604 = vadd.f32 %v2509, %v2603
        %v2605 = vpop.f32.mrf.mxu0
        %2606 = vdwg.mxu0
        %v2607 = vmax.f32 %v2604, 0.0
        %vm2608 = vcmask 523264
        %v2610 = vsel %vm2608, %v2607, 0
        %v2613 = vsel %vm2608, %v332, 0
        %v2616 = vsel %vm2608, %v333, 0
        %v2619 = vsel %vm2608, %v334, 0
        %v2622 = vsel %vm2608, %v335, 0
        %2624 = vmatprep.subr.mxu0 0.0
        %2625 = vmatpush1.xpose.msra.mxu0 0.0
        %2626 = vmatprep.subr.mxu0 0.0
        %2627 = vmatpush1.xpose.msra.mxu0 0.0
        %2628 = vmatprep.subr.mxu0 0.0
        %2629 = vmatpush1.xpose.msra.mxu0 0.0
        %2630 = vmatprep.subr.mxu0 0.0
        %2631 = vmatpush1.xpose.msra.mxu0 0.0
        %2632 = vmatprep.subr.mxu0 0.0
        %2633 = vmatpush1.xpose.msra.mxu0 0.0
        %2634 = vmatprep.subr.mxu0 0.0
        %2635 = vmatpush1.xpose.msra.mxu0 0.0
        %2636 = vmatprep.subr.mxu0 0.0
        %2637 = vmatpush1.xpose.msra.mxu0 0.0
        %2638 = vmatprep.subr.mxu0 0.0
        %2639 = vmatpush1.xpose.msra.mxu0 0.0
        %2640 = vmatprep.subr.mxu0 0.0
        %2641 = vmatpush1.xpose.msra.mxu0 0.0
        %2642 = vmatprep.subr.mxu0 0.0
        %2643 = vmatpush1.xpose.msra.mxu0 0.0
        %2644 = vmatprep.subr.mxu0 0.0
        %2645 = vmatpush1.xpose.msra.mxu0 0.0
        %2646 = vmatprep.subr.mxu0 0.0
        %2647 = vmatpush1.xpose.msra.mxu0 0.0
        %2648 = vmatprep.subr.mxu0 0.0
        %2649 = vmatpush1.xpose.msra.mxu0 %v2622
        %2650 = vmatprep.subr.mxu0 0.0
        %2651 = vmatpush1.xpose.msra.mxu0 %v2619
        %2652 = vmatprep.subr.mxu0 0.0
        %2653 = vmatpush1.xpose.msra.mxu0 %v2616
        %2654 = vmatprep.subr.mxu0 0.0
        %2655 = vmatpush1.xpose.msra.mxu0 %v2613
        %2656 = vmatprep.subr.mxu0 0.0
        %2657 = vmatpush2.xpose.msra.mxu0 0.0
        %2658 = vmatprep.subr.mxu0 0.0
        %2659 = vmatpush2.xpose.msra.mxu0 0.0
        %2660 = vmatprep.subr.mxu0 0.0
        %2661 = vmatpush2.xpose.msra.mxu0 0.0
        %2662 = vmatprep.subr.mxu0 0.0
        %2663 = vmatpush2.xpose.msra.mxu0 0.0
        %2664 = vmatprep.subr.mxu0 0.0
        %2665 = vmatpush2.xpose.msra.mxu0 0.0
        %2666 = vmatprep.subr.mxu0 0.0
        %2667 = vmatpush2.xpose.msra.mxu0 0.0
        %2668 = vmatprep.subr.mxu0 0.0
        %2669 = vmatpush2.xpose.msra.mxu0 0.0
        %2670 = vmatprep.subr.mxu0 0.0
        %2671 = vmatpush2.xpose.msra.mxu0 0.0
        %2672 = vmatprep.subr.mxu0 0.0
        %2673 = vmatpush2.xpose.msra.mxu0 0.0
        %2674 = vmatprep.subr.mxu0 0.0
        %2675 = vmatpush2.xpose.msra.mxu0 0.0
        %2676 = vmatprep.subr.mxu0 0.0
        %2677 = vmatpush2.xpose.msra.mxu0 0.0
        %2678 = vmatprep.subr.mxu0 0.0
        %2679 = vmatpush2.xpose.msra.mxu0 0.0
        %2680 = vmatprep.subr.mxu0 0.0
        %2681 = vmatpush2.xpose.msra.mxu0 0.0
        %2682 = vmatprep.subr.mxu0 0.0
        %2683 = vmatpush2.xpose.msra.mxu0 0.0
        %2684 = vmatprep.subr.mxu0 0.0
        %2685 = vmatpush2.xpose.msra.mxu0 0.0
        %2686 = vmatprep.subr.mxu0 0.0
        %2687 = vmatpush2.xpose.msra.mxu0 0.0
        %2688 = vmatprep.mubr.f32.mxu0 0.0
        %2689 = vmatmul.mubr.f32.gmra.mxu0 %v2610
        %v2690 = vpop.f32.mrf.mxu0
        %v2691 = vadd.f32 0.0, %v2690
        %v2692 = vpop.f32.mrf.mxu0
        %2693 = vdwg.mxu0
        %v2694 = vadd.f32 %v2482, %v2691
        %v2695 = vlaneseq
        %v2696 = vshrl.u32 %v2695, 7
        %v2697 = vsub.s32 6, %v2696
        %v2698 = vrot.slane %v338, %v2697
        %v2699 = vadd.f32 %v2694, %v2698
        %2700 = vst.msk [vmem:[%s272] sm:$0xff] %vm339, %v2699
        %s2701 = sand.u32 %s169, 1
        %s2702 = scalar_lea.sflag [#allocation3], %s2701
        %s2703 = sand.u32 %s169, 1
        %s2704 = smul.addr %s2703, 8
        %s2705 = scalar_lea.vmem [#allocation2], %s2704
        // Predicated region
        $region45: #{tpu_custom_call.1} parent=43 // pred_check
          %p2706 = pneg %p179
        $region46: #{tpu_custom_call.1} parent=43 // pred_check_branch
          %2708 = sbr.rel (%p2706) target = $region48
        $region47: #{tpu_custom_call.1} parent=43 // pred_region
          %s2710 = ssub.s32 128, 128
          %2711 = vsyncadd %s2702, %s2710
          %s2712 = smul.addr %s20, 128
          %s2713 = scalar_lea.hbm %s6, %s2712
          %s2715 = sshll.u32 %s2705, 4
          %s2716 = int_to_ptr.vmem [resolvable:$true] %s2715
          %2718 = dma.vmem_to_hbm [thread:$0]  %s2716, 128, %s2713, %s2702
        $region48: #{tpu_custom_call.1} parent=43 // pred_fallthru
          _
      $region44: #{tpu_custom_call.1} parent=5 // pred_fallthru
        _
      %p2719 = scmp.le.s32.totalorder 2, %s15
      // Predicated region
      $region49: #{tpu_custom_call.1} parent=5 // pred_check
        %p2720 = pneg %p2719
      $region50: #{tpu_custom_call.1} parent=5 // pred_check_branch
        %2722 = sbr.rel (%p2720) target = $region52
      $region51: #{tpu_custom_call.1} parent=5 // pred_region
        %s2723 = ssub.s32 %s15, 2
        // Predicated region
        $region53: #{tpu_custom_call.1} parent=51 // pred_check
          %p2724 = pneg %p185
        $region54: #{tpu_custom_call.1} parent=51 // pred_check_branch
          %2726 = sbr.rel (%p2724) target = $region56
        $region55: #{tpu_custom_call.1} parent=51 // pred_region
          %s2727 = sand.u32 %s170, 1
          %s2728 = scalar_lea.sflag [#allocation3], %s2727
          %s2729 = sand.u32 %s170, 1
          %s2730 = smul.addr %s2729, 8
          %s2731 = scalar_lea.vmem [#allocation2], %s2730
          %2732 = dma.done %s2728, 128
        $region56: #{tpu_custom_call.1} parent=51 // pred_fallthru
          _
      $region52: #{tpu_custom_call.1} parent=5 // pred_fallthru
        _
    $region6: #{tpu_custom_call.1} parent=1 // loop_footer
      %s19 = sadd.s32 1, %s15
    $region7: #{tpu_custom_call.1} parent=1 // loop_footer_branch
      %14 = sbr.rel target = $region3
    $region8: #{tpu_custom_call.1} parent=1 // loop_exit
      _
    %2733 = vsyncpa [#allocation3], 1
    %s2734 = scalar_lea.sflag [#allocation3], 1
    %2735 = vsyncpa %s2734, 1

</llo_original>
